<compile_context>
chip_gen: v5e
topology: v5e:2x2
jax: 0.10.0
libtpu: 0.0.40
codegen_flags: <defaults>
</compile_context>

<pallas_src>
import functools

import numpy as np
import jax
import jax.numpy as jnp
from jax import lax
from jax.experimental import pallas as pl
from jax.experimental.pallas import tpu as pltpu


# ---------------------------------------------------------------------------
# Host-side helpers: bilinear (align_corners=True) interpolation matrices with
# F.pad and the conv halo folded in as zero rows.
# ---------------------------------------------------------------------------
def _bilinear_matrix(in_size: int, out_size: int) -> np.ndarray:
    m = np.zeros((out_size, in_size), dtype=np.float32)
    if in_size == 1 or out_size == 1:
        m[:, 0] = 1.0
        return m
    scale = (in_size - 1) / (out_size - 1)
    for i in range(out_size):
        src = i * scale
        lo = int(np.floor(src))
        hi = min(lo + 1, in_size - 1)
        frac = src - lo
        m[i, lo] += 1.0 - frac
        m[i, hi] += frac
    return m


def _padded_interp_matrix(in_size, up_size, out_size, halo=1, extra=0):
    """(out_size + 2*halo + extra, in_size) interpolation matrix.

    The bilinear block sits at row offset halo + (out_size - up_size)//2; all
    other rows are zero, which realizes F.pad (asymmetric) plus the conv zero
    halo (plus an optional guard row) for free in the matmul output."""
    diff = out_size - up_size
    assert diff >= 0, "negative pad (crop) not supported"
    pad_lo = diff // 2
    m = np.zeros((out_size + 2 * halo + extra, in_size), dtype=np.float32)
    m[halo + pad_lo: halo + pad_lo + up_size, :] = _bilinear_matrix(in_size, up_size)
    return m


# ---------------------------------------------------------------------------
# Pallas kernel: one batch element per grid step (batch axis is "parallel").
# ---------------------------------------------------------------------------
def up_kernel(compute_dtype,
              x1_ref, x2p_ref, ih_ref, iwT_ref, mask_ref,
              w1a_ref, w1b_ref, sc1_ref, sh1_ref,
              w2_ref, sc2_ref, sh2_ref,
              out_ref, upf_ref, ypf_ref):
    _, C1, H1, W1 = x1_ref.shape
    Wp = iwT_ref.shape[1]              # padded width  (W2 + 2)
    Lp = upf_ref.shape[1]              # (H2 + 3) * Wp  flat padded length
    Cmid = ypf_ref.shape[0]
    _, Cout, ACC = out_ref.shape       # ACC = H2 * Wp
    f32 = jnp.float32

    # ---- separable bilinear upsample + F.pad of x1, emitted directly in the
    #      zero-padded flat (C1, Lp) layout.  W-interp for all channels in one
    #      matmul, then a small H-interp matmul per channel.
    x1v = x1_ref[0].astype(compute_dtype)                       # (C1, H1, W1)
    iwT = iwT_ref[...].astype(compute_dtype)                    # (W1, Wp)
    ih = ih_ref[...].astype(compute_dtype)                      # (H2+3, H1)
    tw = jnp.dot(x1v.reshape(C1 * H1, W1), iwT,
                 preferred_element_type=f32)                    # (C1*H1, Wp)
    tw = tw.reshape(C1, H1, Wp).astype(compute_dtype)
    # TODO(synk): for large C1 replace this static per-channel loop with a
    # batched / spatially-tiled formulation.
    u3 = jnp.stack(
        [jnp.dot(ih, tw[c], preferred_element_type=f32) for c in range(C1)],
        axis=0)                                                 # (C1, H2+3, Wp)
    # Flatten padded rows into the lane axis via lane-concat (avoids an
    # in-kernel sublane->lane reshape); full-buffer store, no masking needed
    # because the interpolation matrices already produced the zero halo.
    upf_ref[...] = jnp.concatenate(
        [u3[:, h, :] for h in range(u3.shape[1])], axis=1)      # (C1, Lp)

    # Re-zero only the tiny halo strips of the conv2 padded scratch that the
    # masked interior write below does not cover (top halo row + left halo of
    # row 1; tail of the bottom halo row + guard row).
    ypf_ref[:, 0:Wp + 1] = jnp.zeros((Cmid, Wp + 1), ypf_ref.dtype)
    ypf_ref[:, Wp + 1 + ACC:Lp] = jnp.zeros((Cmid, Lp - (Wp + 1 + ACC)),
                                            ypf_ref.dtype)

    # ---- conv1 (3x3, pad 1): 9 flat-shifted taps.  The channel concat is
    #      folded away by splitting the weights into x2- and upsampled-x1 parts
    #      and accumulating both into the same f32 accumulator.
    acc1 = jnp.zeros((Cmid, ACC), f32)
    for ky in range(3):
        for kx in range(3):
            off = ky * Wp + kx
            xs = x2p_ref[0, :, off:off + ACC].astype(compute_dtype)   # (C2, ACC)
            us = upf_ref[:, off:off + ACC].astype(compute_dtype)      # (C1, ACC)
            acc1 += jnp.dot(w1a_ref[ky, kx].astype(compute_dtype), xs,
                            preferred_element_type=f32)
            acc1 += jnp.dot(w1b_ref[ky, kx].astype(compute_dtype), us,
                            preferred_element_type=f32)
    # Fused eval-mode BN + ReLU; the mask zeroes the two garbage halo columns
    # per output row so this write also provides conv2's zero padding.
    y1 = jnp.maximum(acc1 * sc1_ref[...] + sh1_ref[...], 0.0) * mask_ref[...]
    ypf_ref[:, Wp + 1:Wp + 1 + ACC] = y1

    # ---- conv2 (3x3, pad 1) + fused BN + ReLU -----------------------------
    acc2 = jnp.zeros((Cout, ACC), f32)
    for ky in range(3):
        for kx in range(3):
            off = ky * Wp + kx
            ys = ypf_ref[:, off:off + ACC].astype(compute_dtype)      # (Cmid, ACC)
            acc2 += jnp.dot(w2_ref[ky, kx].astype(compute_dtype), ys,
                            preferred_element_type=f32)
    y2 = jnp.maximum(acc2 * sc2_ref[...] + sh2_ref[...], 0.0)
    out_ref[0] = y2.astype(out_ref.dtype)      # lane-dense (Cout, H2*Wp) store


def up_forward(x1, x2, params, *, compute_dtype=jnp.float32):
    """x1: (N, C1, H1, W1) decoder features (upsampled 2x in-kernel),
    x2: (N, C2, H2, W2) skip connection.  Returns (N, Cout, H2, W2)."""
    N, C1, H1, W1 = x1.shape
    N2, C2, H2, W2 = x2.shape
    assert N == N2
    w1, w2 = params["w1"], params["w2"]            # OIHW (PyTorch layout)
    Cmid, Cin = w1.shape[0], w1.shape[1]
    Cout = w2.shape[0]
    assert Cin == C1 + C2 and w2.shape[1] == Cmid

    Hp, Wp = H2 + 2, W2 + 2                        # 1-pixel conv halo
    Lp = (Hp + 1) * Wp                             # +1 guard row keeps taps in-bounds
    ACC = H2 * Wp                                  # flat accumulator length

    # Interpolation matrices (F.pad + conv halo folded in; extra guard row for H).
    ih = jnp.asarray(_padded_interp_matrix(H1, 2 * H1, H2, halo=1, extra=1))
    iwT = jnp.asarray(_padded_interp_matrix(W1, 2 * W1, W2, halo=1, extra=0).T)

    # Mask zeroing the 2 garbage halo columns per output row of the flat acc.
    mask = jnp.asarray(((np.arange(ACC) % Wp) < W2)
                       .astype(np.float32).reshape(1, ACC))

    # Weights to (kh, kw, Cout, Cin); split conv1 into x2 / upsampled-x1 parts
    # (torch concat order is [x2, x1_up]).
    w1t = jnp.transpose(w1, (2, 3, 0, 1))
    w1a = w1t[:, :, :, :C2]
    w1b = w1t[:, :, :, C2:]
    w2t = jnp.transpose(w2, (2, 3, 0, 1))
    sc1 = params["sc1"].reshape(Cmid, 1)
    sh1 = params["sh1"].reshape(Cmid, 1)
    sc2 = params["sc2"].reshape(Cout, 1)
    sh2 = params["sh2"].reshape(Cout, 1)

    # x2 zero-padded to the conv halo (+ guard row) and flattened: pure layout
    # plumbing done once in XLA so the kernel's conv taps are contiguous slices.
    x2p = jnp.pad(x2, ((0, 0), (0, 0), (1, 2), (1, 1))).reshape(N, C2, Lp)

    def nbytes(shape, dtype):
        return int(np.prod(shape)) * jnp.dtype(dtype).itemsize

    est = (2 * (nbytes((1, C1, H1, W1), x1.dtype)
                + nbytes((1, C2, Lp), x2p.dtype)
                + nbytes((1, Cout, ACC), x1.dtype))
           + nbytes(ih.shape, ih.dtype) + nbytes(iwT.shape, iwT.dtype)
           + nbytes(mask.shape, mask.dtype)
           + nbytes(w1a.shape, w1a.dtype) + nbytes(w1b.shape, w1b.dtype)
           + nbytes(w2t.shape, w2t.dtype)
           + 2 * (nbytes(sc1.shape, sc1.dtype) + nbytes(sc2.shape, sc2.dtype))
           + nbytes((C1, Lp), jnp.float32) + nbytes((Cmid, Lp), jnp.float32))
    vmem_limit = int(min(max(4 * est, 16 << 20), 64 << 20))

    grid_spec = pltpu.PrefetchScalarGridSpec(
        num_scalar_prefetch=0,
        grid=(N,),
        in_specs=[
            pl.BlockSpec((1, C1, H1, W1), lambda n: (n, 0, 0, 0)),    # x1
            pl.BlockSpec((1, C2, Lp), lambda n: (n, 0, 0)),           # x2 padded flat
            pl.BlockSpec((Hp + 1, H1), lambda n: (0, 0)),             # Ih
            pl.BlockSpec((W1, Wp), lambda n: (0, 0)),                 # Iw^T
            pl.BlockSpec((1, ACC), lambda n: (0, 0)),                 # halo mask
            pl.BlockSpec((3, 3, Cmid, C2), lambda n: (0, 0, 0, 0)),   # w1 (x2 part)
            pl.BlockSpec((3, 3, Cmid, C1), lambda n: (0, 0, 0, 0)),   # w1 (up part)
            pl.BlockSpec((Cmid, 1), lambda n: (0, 0)),                # sc1
            pl.BlockSpec((Cmid, 1), lambda n: (0, 0)),                # sh1
            pl.BlockSpec((3, 3, Cout, Cmid), lambda n: (0, 0, 0, 0)), # w2
            pl.BlockSpec((Cout, 1), lambda n: (0, 0)),                # sc2
            pl.BlockSpec((Cout, 1), lambda n: (0, 0)),                # sh2
        ],
        out_specs=pl.BlockSpec((1, Cout, ACC), lambda n: (n, 0, 0)),
        scratch_shapes=[
            pltpu.VMEM((C1, Lp), jnp.float32),    # upsampled x1, padded flat
            pltpu.VMEM((Cmid, Lp), jnp.float32),  # conv1 output, padded flat
        ],
    )
    out_flat = pl.pallas_call(
        functools.partial(up_kernel, compute_dtype),
        out_shape=jax.ShapeDtypeStruct((N, Cout, ACC), x1.dtype),
        grid_spec=grid_spec,
        compiler_params=pltpu.CompilerParams(
            dimension_semantics=("parallel",),
            vmem_limit_bytes=vmem_limit),
    )(x1, x2p, ih, iwT, mask, w1a, w1b, sc1, sh1, w2t, sc2, sh2)

    # Drop the width-halo columns (layout plumbing).
    return out_flat.reshape(N, Cout, H2, Wp)[:, :, :, :W2]


# ---------------------------------------------------------------------------
# Pure-JAX reference (same folded parameters) for correctness checking.
# ---------------------------------------------------------------------------
def up_reference(x1, x2, params):
    N, C1, H1, W1 = x1.shape
    _, C2, H2, W2 = x2.shape
    bh = jnp.asarray(_bilinear_matrix(H1, 2 * H1))   # (2H1, H1)
    bw = jnp.asarray(_bilinear_matrix(W1, 2 * W1))   # (2W1, W1)
    up = jnp.einsum("hk,nckw->nchw", bh, x1)
    up = jnp.einsum("wk,nchk->nchw", bw, up)
    dY, dX = H2 - 2 * H1, W2 - 2 * W1
    up = jnp.pad(up, ((0, 0), (0, 0), (dY // 2, dY - dY // 2),
                      (dX // 2, dX - dX // 2)))
    x = jnp.concatenate([x2, up], axis=1)
    dn = ("NCHW", "OIHW", "NCHW")
    y = lax.conv_general_dilated(x, params["w1"], (1, 1), "SAME",
                                 dimension_numbers=dn)
    y = jnp.maximum(y * params["sc1"][None, :, None, None]
                    + params["sh1"][None, :, None, None], 0.0)
    y = lax.conv_general_dilated(y, params["w2"], (1, 1), "SAME",
                                 dimension_numbers=dn)
    y = jnp.maximum(y * params["sc2"][None, :, None, None]
                    + params["sh2"][None, :, None, None], 0.0)
    return y


def init_params(key, in_channels, out_channels):
    """Synthetic params for Up(in_channels, out_channels, bilinear=True)."""
    mid = in_channels // 2            # DoubleConv mid_channels = in_channels // 2
    outc = out_channels // 2          # DoubleConv out_channels = out_channels // 2
    eps = 1e-5
    ks = jax.random.split(key, 12)

    w1 = 0.1 * jax.random.normal(ks[0], (mid, in_channels, 3, 3), jnp.float32)
    b1 = 0.1 * jax.random.normal(ks[1], (mid,), jnp.float32)
    g1 = 1.0 + 0.1 * jax.random.normal(ks[2], (mid,), jnp.float32)
    be1 = 0.1 * jax.random.normal(ks[3], (mid,), jnp.float32)
    m1 = 0.1 * jax.random.normal(ks[4], (mid,), jnp.float32)
    v1 = 1.0 + 0.1 * jnp.abs(jax.random.normal(ks[5], (mid,), jnp.float32))

    w2 = 0.1 * jax.random.normal(ks[6], (outc, mid, 3, 3), jnp.float32)
    b2 = 0.1 * jax.random.normal(ks[7], (outc,), jnp.float32)
    g2 = 1.0 + 0.1 * jax.random.normal(ks[8], (outc,), jnp.float32)
    be2 = 0.1 * jax.random.normal(ks[9], (outc,), jnp.float32)
    m2 = 0.1 * jax.random.normal(ks[10], (outc,), jnp.float32)
    v2 = 1.0 + 0.1 * jnp.abs(jax.random.normal(ks[11], (outc,), jnp.float32))

    # Fold conv bias + eval-mode BN into per-channel scale/shift.
    sc1 = g1 / jnp.sqrt(v1 + eps)
    sh1 = (b1 - m1) * sc1 + be1
    sc2 = g2 / jnp.sqrt(v2 + eps)
    sh2 = (b2 - m2) * sc2 + be2
    return dict(w1=w1, sc1=sc1, sh1=sh1, w2=w2, sc2=sc2, sh2=sh2)


if __name__ == "__main__":
    key = jax.random.PRNGKey(0)
    k1, k2, kp = jax.random.split(key, 3)

    # Small U-Net-style shapes: Up(in_channels=8, out_channels=8, bilinear=True)
    N, in_channels, out_channels = 2, 8, 8
    H1 = W1 = 8                       # decoder feature map (upsampled 2x)
    H2 = W2 = 16                      # skip-connection feature map
    C1 = in_channels // 2             # x1 channels
    C2 = in_channels - C1             # x2 channels (C1 + C2 == in_channels)

    x1 = jax.random.normal(k1, (N, C1, H1, W1), jnp.float32)
    x2 = jax.random.normal(k2, (N, C2, H2, W2), jnp.float32)
    params = init_params(kp, in_channels, out_channels)

    out = jax.block_until_ready(up_forward(x1, x2, params))
    ref = up_reference(x1, x2, params)

    assert out.shape == (N, out_channels // 2, H2, W2), out.shape
    if not np.allclose(np.asarray(out), np.asarray(ref), atol=1e-4, rtol=1e-4):
        raise AssertionError("Pallas kernel mismatch vs JAX reference")
    print("KERNEL_OK")
</pallas_src>

<mosaic_0001>
module attributes {stable_mosaic.version = 11 : i64} {
  func.func @up_kernel(%arg0: i32, %arg1: memref<1x4x8x8xf32, #tpu.memory_space<vmem>>, %arg2: memref<1x4x342xf32, #tpu.memory_space<vmem>>, %arg3: memref<19x8xf32, #tpu.memory_space<vmem>>, %arg4: memref<8x18xf32, #tpu.memory_space<vmem>>, %arg5: memref<1x288xf32, #tpu.memory_space<vmem>>, %arg6: memref<3x3x4x4xf32, #tpu.memory_space<vmem>>, %arg7: memref<3x3x4x4xf32, #tpu.memory_space<vmem>>, %arg8: memref<4x1xf32, #tpu.memory_space<vmem>>, %arg9: memref<4x1xf32, #tpu.memory_space<vmem>>, %arg10: memref<3x3x4x4xf32, #tpu.memory_space<vmem>>, %arg11: memref<4x1xf32, #tpu.memory_space<vmem>>, %arg12: memref<4x1xf32, #tpu.memory_space<vmem>>, %arg13: memref<1x4x288xf32, #tpu.memory_space<vmem>>, %arg14: memref<4x342xf32, #tpu.memory_space<vmem>>, %arg15: memref<4x342xf32, #tpu.memory_space<vmem>>) attributes {dimension_semantics = [#tpu.dimension_semantics<parallel>], iteration_bounds = array<i64: 2>, scalar_prefetch = 0 : i64, scratch_operands = 2 : i64, tpu.core_type = #tpu.core_type<tc>, window_params = [{transform_indices = @transform_0, window_bounds = array<i64: 1, 4, 8, 8>}, {transform_indices = @transform_1, window_bounds = array<i64: 1, 4, 342>}, {pipeline_mode = #tpu.pipeline_mode<synchronous>, transform_indices = @transform_2, window_bounds = array<i64: 19, 8>}, {pipeline_mode = #tpu.pipeline_mode<synchronous>, transform_indices = @transform_3, window_bounds = array<i64: 8, 18>}, {pipeline_mode = #tpu.pipeline_mode<synchronous>, transform_indices = @transform_4, window_bounds = array<i64: 1, 288>}, {pipeline_mode = #tpu.pipeline_mode<synchronous>, transform_indices = @transform_5, window_bounds = array<i64: 3, 3, 4, 4>}, {pipeline_mode = #tpu.pipeline_mode<synchronous>, transform_indices = @transform_6, window_bounds = array<i64: 3, 3, 4, 4>}, {pipeline_mode = #tpu.pipeline_mode<synchronous>, transform_indices = @transform_7, window_bounds = array<i64: 4, 1>}, {pipeline_mode = #tpu.pipeline_mode<synchronous>, transform_indices = @transform_8, window_bounds = array<i64: 4, 1>}, {pipeline_mode = #tpu.pipeline_mode<synchronous>, transform_indices = @transform_9, window_bounds = array<i64: 3, 3, 4, 4>}, {pipeline_mode = #tpu.pipeline_mode<synchronous>, transform_indices = @transform_10, window_bounds = array<i64: 4, 1>}, {pipeline_mode = #tpu.pipeline_mode<synchronous>, transform_indices = @transform_11, window_bounds = array<i64: 4, 1>}, {transform_indices = @transform_12, window_bounds = array<i64: 1, 4, 288>}]} {
    %c0 = arith.constant 0 : index
    %c0_0 = arith.constant 0 : index
    %c0_1 = arith.constant 0 : index
    %c0_2 = arith.constant 0 : index
    %0 = vector.load %arg1[%c0, %c0_0, %c0_1, %c0_2] : memref<1x4x8x8xf32, #tpu.memory_space<vmem>>, vector<1x4x8x8xf32>
    %1 = vector.shape_cast %0 : vector<1x4x8x8xf32> to vector<4x8x8xf32>
    %c0_3 = arith.constant 0 : index
    %c0_4 = arith.constant 0 : index
    %2 = vector.load %arg4[%c0_3, %c0_4] : memref<8x18xf32, #tpu.memory_space<vmem>>, vector<8x18xf32>
    %c0_5 = arith.constant 0 : index
    %c0_6 = arith.constant 0 : index
    %3 = vector.load %arg3[%c0_5, %c0_6] : memref<19x8xf32, #tpu.memory_space<vmem>>, vector<19x8xf32>
    %4 = vector.shape_cast %1 : vector<4x8x8xf32> to vector<32x8xf32>
    %cst = arith.constant dense<0.000000e+00> : vector<32x18xf32>
    %5 = tpu.matmul %4, %2, %cst {dimension_numbers = #tpu.dot_dimension_numbers<[1], [0], [0], [1], [0, 0, 1, 1], [], []>} : vector<32x8xf32>, vector<8x18xf32>, vector<32x18xf32> -> vector<32x18xf32>
    %6 = vector.shape_cast %5 : vector<32x18xf32> to vector<4x8x18xf32>
    %7 = vector.extract_strided_slice %6 {offsets = [0, 0, 0], sizes = [1, 8, 18], strides = [1, 1, 1]} : vector<4x8x18xf32> to vector<1x8x18xf32>
    %8 = vector.shape_cast %7 : vector<1x8x18xf32> to vector<8x18xf32>
    %cst_7 = arith.constant dense<0.000000e+00> : vector<19x18xf32>
    %9 = tpu.matmul %3, %8, %cst_7 {dimension_numbers = #tpu.dot_dimension_numbers<[1], [0], [0], [1], [0, 0, 1, 1], [], []>} : vector<19x8xf32>, vector<8x18xf32>, vector<19x18xf32> -> vector<19x18xf32>
    %10 = vector.extract_strided_slice %6 {offsets = [1, 0, 0], sizes = [1, 8, 18], strides = [1, 1, 1]} : vector<4x8x18xf32> to vector<1x8x18xf32>
    %11 = vector.shape_cast %10 : vector<1x8x18xf32> to vector<8x18xf32>
    %cst_8 = arith.constant dense<0.000000e+00> : vector<19x18xf32>
    %12 = tpu.matmul %3, %11, %cst_8 {dimension_numbers = #tpu.dot_dimension_numbers<[1], [0], [0], [1], [0, 0, 1, 1], [], []>} : vector<19x8xf32>, vector<8x18xf32>, vector<19x18xf32> -> vector<19x18xf32>
    %13 = vector.extract_strided_slice %6 {offsets = [2, 0, 0], sizes = [1, 8, 18], strides = [1, 1, 1]} : vector<4x8x18xf32> to vector<1x8x18xf32>
    %14 = vector.shape_cast %13 : vector<1x8x18xf32> to vector<8x18xf32>
    %cst_9 = arith.constant dense<0.000000e+00> : vector<19x18xf32>
    %15 = tpu.matmul %3, %14, %cst_9 {dimension_numbers = #tpu.dot_dimension_numbers<[1], [0], [0], [1], [0, 0, 1, 1], [], []>} : vector<19x8xf32>, vector<8x18xf32>, vector<19x18xf32> -> vector<19x18xf32>
    %16 = vector.extract_strided_slice %6 {offsets = [3, 0, 0], sizes = [1, 8, 18], strides = [1, 1, 1]} : vector<4x8x18xf32> to vector<1x8x18xf32>
    %17 = vector.shape_cast %16 : vector<1x8x18xf32> to vector<8x18xf32>
    %cst_10 = arith.constant dense<0.000000e+00> : vector<19x18xf32>
    %18 = tpu.matmul %3, %17, %cst_10 {dimension_numbers = #tpu.dot_dimension_numbers<[1], [0], [0], [1], [0, 0, 1, 1], [], []>} : vector<19x8xf32>, vector<8x18xf32>, vector<19x18xf32> -> vector<19x18xf32>
    %19 = vector.shape_cast %9 : vector<19x18xf32> to vector<1x19x18xf32>
    %20 = vector.shape_cast %12 : vector<19x18xf32> to vector<1x19x18xf32>
    %21 = vector.shape_cast %15 : vector<19x18xf32> to vector<1x19x18xf32>
    %22 = vector.shape_cast %18 : vector<19x18xf32> to vector<1x19x18xf32>
    %23 = tpu.concatenate %19, %20, %21, %22 in 0 : vector<1x19x18xf32>, vector<1x19x18xf32>, vector<1x19x18xf32>, vector<1x19x18xf32> -> vector<4x19x18xf32>
    %24 = vector.extract_strided_slice %23 {offsets = [0, 0, 0], sizes = [4, 1, 18], strides = [1, 1, 1]} : vector<4x19x18xf32> to vector<4x1x18xf32>
    %25 = vector.shape_cast %24 : vector<4x1x18xf32> to vector<4x18xf32>
    %26 = vector.extract_strided_slice %23 {offsets = [0, 1, 0], sizes = [4, 1, 18], strides = [1, 1, 1]} : vector<4x19x18xf32> to vector<4x1x18xf32>
    %27 = vector.shape_cast %26 : vector<4x1x18xf32> to vector<4x18xf32>
    %28 = vector.extract_strided_slice %23 {offsets = [0, 2, 0], sizes = [4, 1, 18], strides = [1, 1, 1]} : vector<4x19x18xf32> to vector<4x1x18xf32>
    %29 = vector.shape_cast %28 : vector<4x1x18xf32> to vector<4x18xf32>
    %30 = vector.extract_strided_slice %23 {offsets = [0, 3, 0], sizes = [4, 1, 18], strides = [1, 1, 1]} : vector<4x19x18xf32> to vector<4x1x18xf32>
    %31 = vector.shape_cast %30 : vector<4x1x18xf32> to vector<4x18xf32>
    %32 = vector.extract_strided_slice %23 {offsets = [0, 4, 0], sizes = [4, 1, 18], strides = [1, 1, 1]} : vector<4x19x18xf32> to vector<4x1x18xf32>
    %33 = vector.shape_cast %32 : vector<4x1x18xf32> to vector<4x18xf32>
    %34 = vector.extract_strided_slice %23 {offsets = [0, 5, 0], sizes = [4, 1, 18], strides = [1, 1, 1]} : vector<4x19x18xf32> to vector<4x1x18xf32>
    %35 = vector.shape_cast %34 : vector<4x1x18xf32> to vector<4x18xf32>
    %36 = vector.extract_strided_slice %23 {offsets = [0, 6, 0], sizes = [4, 1, 18], strides = [1, 1, 1]} : vector<4x19x18xf32> to vector<4x1x18xf32>
    %37 = vector.shape_cast %36 : vector<4x1x18xf32> to vector<4x18xf32>
    %38 = vector.extract_strided_slice %23 {offsets = [0, 7, 0], sizes = [4, 1, 18], strides = [1, 1, 1]} : vector<4x19x18xf32> to vector<4x1x18xf32>
    %39 = vector.shape_cast %38 : vector<4x1x18xf32> to vector<4x18xf32>
    %40 = vector.extract_strided_slice %23 {offsets = [0, 8, 0], sizes = [4, 1, 18], strides = [1, 1, 1]} : vector<4x19x18xf32> to vector<4x1x18xf32>
    %41 = vector.shape_cast %40 : vector<4x1x18xf32> to vector<4x18xf32>
    %42 = vector.extract_strided_slice %23 {offsets = [0, 9, 0], sizes = [4, 1, 18], strides = [1, 1, 1]} : vector<4x19x18xf32> to vector<4x1x18xf32>
    %43 = vector.shape_cast %42 : vector<4x1x18xf32> to vector<4x18xf32>
    %44 = vector.extract_strided_slice %23 {offsets = [0, 10, 0], sizes = [4, 1, 18], strides = [1, 1, 1]} : vector<4x19x18xf32> to vector<4x1x18xf32>
    %45 = vector.shape_cast %44 : vector<4x1x18xf32> to vector<4x18xf32>
    %46 = vector.extract_strided_slice %23 {offsets = [0, 11, 0], sizes = [4, 1, 18], strides = [1, 1, 1]} : vector<4x19x18xf32> to vector<4x1x18xf32>
    %47 = vector.shape_cast %46 : vector<4x1x18xf32> to vector<4x18xf32>
    %48 = vector.extract_strided_slice %23 {offsets = [0, 12, 0], sizes = [4, 1, 18], strides = [1, 1, 1]} : vector<4x19x18xf32> to vector<4x1x18xf32>
    %49 = vector.shape_cast %48 : vector<4x1x18xf32> to vector<4x18xf32>
    %50 = vector.extract_strided_slice %23 {offsets = [0, 13, 0], sizes = [4, 1, 18], strides = [1, 1, 1]} : vector<4x19x18xf32> to vector<4x1x18xf32>
    %51 = vector.shape_cast %50 : vector<4x1x18xf32> to vector<4x18xf32>
    %52 = vector.extract_strided_slice %23 {offsets = [0, 14, 0], sizes = [4, 1, 18], strides = [1, 1, 1]} : vector<4x19x18xf32> to vector<4x1x18xf32>
    %53 = vector.shape_cast %52 : vector<4x1x18xf32> to vector<4x18xf32>
    %54 = vector.extract_strided_slice %23 {offsets = [0, 15, 0], sizes = [4, 1, 18], strides = [1, 1, 1]} : vector<4x19x18xf32> to vector<4x1x18xf32>
    %55 = vector.shape_cast %54 : vector<4x1x18xf32> to vector<4x18xf32>
    %56 = vector.extract_strided_slice %23 {offsets = [0, 16, 0], sizes = [4, 1, 18], strides = [1, 1, 1]} : vector<4x19x18xf32> to vector<4x1x18xf32>
    %57 = vector.shape_cast %56 : vector<4x1x18xf32> to vector<4x18xf32>
    %58 = vector.extract_strided_slice %23 {offsets = [0, 17, 0], sizes = [4, 1, 18], strides = [1, 1, 1]} : vector<4x19x18xf32> to vector<4x1x18xf32>
    %59 = vector.shape_cast %58 : vector<4x1x18xf32> to vector<4x18xf32>
    %60 = vector.extract_strided_slice %23 {offsets = [0, 18, 0], sizes = [4, 1, 18], strides = [1, 1, 1]} : vector<4x19x18xf32> to vector<4x1x18xf32>
    %61 = vector.shape_cast %60 : vector<4x1x18xf32> to vector<4x18xf32>
    %62 = tpu.concatenate %25, %27, %29, %31, %33, %35, %37, %39, %41, %43, %45, %47, %49, %51, %53, %55 in 1 : vector<4x18xf32>, vector<4x18xf32>, vector<4x18xf32>, vector<4x18xf32>, vector<4x18xf32>, vector<4x18xf32>, vector<4x18xf32>, vector<4x18xf32>, vector<4x18xf32>, vector<4x18xf32>, vector<4x18xf32>, vector<4x18xf32>, vector<4x18xf32>, vector<4x18xf32>, vector<4x18xf32>, vector<4x18xf32> -> vector<4x288xf32>
    %63 = tpu.concatenate %57, %59, %61 in 1 : vector<4x18xf32>, vector<4x18xf32>, vector<4x18xf32> -> vector<4x54xf32>
    %64 = tpu.concatenate %62, %63 in 1 : vector<4x288xf32>, vector<4x54xf32> -> vector<4x342xf32>
    %c0_11 = arith.constant 0 : index
    %c0_12 = arith.constant 0 : index
    %65 = vector.load %arg14[%c0_11, %c0_12] : memref<4x342xf32, #tpu.memory_space<vmem>>, vector<4x342xf32>
    tpu.vector_store %arg14[%c0_11, %c0_12], %64 {strides = array<i32>} : memref<4x342xf32, #tpu.memory_space<vmem>>, vector<4x342xf32>,
    %cst_13 = arith.constant 0.000000e+00 : f32
    %66 = vector.broadcast %cst_13 : f32 to vector<4x19xf32>
    %c0_14 = arith.constant 0 : index
    %c0_15 = arith.constant 0 : index
    %67 = vector.load %arg15[%c0_14, %c0_15] : memref<4x342xf32, #tpu.memory_space<vmem>>, vector<4x19xf32>
    tpu.vector_store %arg15[%c0_14, %c0_15], %66 {strides = array<i32>} : memref<4x342xf32, #tpu.memory_space<vmem>>, vector<4x19xf32>,
    %cst_16 = arith.constant 0.000000e+00 : f32
    %68 = vector.broadcast %cst_16 : f32 to vector<4x35xf32>
    %c0_17 = arith.constant 0 : index
    %c307 = arith.constant 307 : index
    %69 = vector.load %arg15[%c0_17, %c307] : memref<4x342xf32, #tpu.memory_space<vmem>>, vector<4x35xf32>
    tpu.vector_store %arg15[%c0_17, %c307], %68 {strides = array<i32>} : memref<4x342xf32, #tpu.memory_space<vmem>>, vector<4x35xf32>,
    %cst_18 = arith.constant 0.000000e+00 : f32
    %70 = vector.broadcast %cst_18 : f32 to vector<4x288xf32>
    %c0_19 = arith.constant 0 : index
    %c0_20 = arith.constant 0 : index
    %c0_21 = arith.constant 0 : index
    %71 = vector.load %arg2[%c0_19, %c0_20, %c0_21] : memref<1x4x342xf32, #tpu.memory_space<vmem>>, vector<1x4x288xf32>
    %72 = vector.shape_cast %71 : vector<1x4x288xf32> to vector<4x288xf32>
    %c0_22 = arith.constant 0 : index
    %c0_23 = arith.constant 0 : index
    %73 = vector.load %arg14[%c0_22, %c0_23] : memref<4x342xf32, #tpu.memory_space<vmem>>, vector<4x288xf32>
    %c0_24 = arith.constant 0 : index
    %c0_25 = arith.constant 0 : index
    %c0_26 = arith.constant 0 : index
    %c0_27 = arith.constant 0 : index
    %74 = vector.load %arg6[%c0_24, %c0_25, %c0_26, %c0_27] : memref<3x3x4x4xf32, #tpu.memory_space<vmem>>, vector<1x1x4x4xf32>
    %75 = vector.shape_cast %74 : vector<1x1x4x4xf32> to vector<4x4xf32>
    %cst_28 = arith.constant dense<0.000000e+00> : vector<4x288xf32>
    %76 = tpu.matmul %75, %72, %cst_28 {dimension_numbers = #tpu.dot_dimension_numbers<[1], [0], [0], [1], [0, 0, 1, 1], [], []>} : vector<4x4xf32>, vector<4x288xf32>, vector<4x288xf32> -> vector<4x288xf32>
    %77 = arith.addf %70, %76 : vector<4x288xf32>
    %c0_29 = arith.constant 0 : index
    %c0_30 = arith.constant 0 : index
    %c0_31 = arith.constant 0 : index
    %c0_32 = arith.constant 0 : index
    %78 = vector.load %arg7[%c0_29, %c0_30, %c0_31, %c0_32] : memref<3x3x4x4xf32, #tpu.memory_space<vmem>>, vector<1x1x4x4xf32>
    %79 = vector.shape_cast %78 : vector<1x1x4x4xf32> to vector<4x4xf32>
    %cst_33 = arith.constant dense<0.000000e+00> : vector<4x288xf32>
    %80 = tpu.matmul %79, %73, %cst_33 {dimension_numbers = #tpu.dot_dimension_numbers<[1], [0], [0], [1], [0, 0, 1, 1], [], []>} : vector<4x4xf32>, vector<4x288xf32>, vector<4x288xf32> -> vector<4x288xf32>
    %81 = arith.addf %77, %80 : vector<4x288xf32>
    %c0_34 = arith.constant 0 : index
    %c0_35 = arith.constant 0 : index
    %c1 = arith.constant 1 : index
    %82 = vector.load %arg2[%c0_34, %c0_35, %c1] : memref<1x4x342xf32, #tpu.memory_space<vmem>>, vector<1x4x288xf32>
    %83 = vector.shape_cast %82 : vector<1x4x288xf32> to vector<4x288xf32>
    %c0_36 = arith.constant 0 : index
    %c1_37 = arith.constant 1 : index
    %84 = vector.load %arg14[%c0_36, %c1_37] : memref<4x342xf32, #tpu.memory_space<vmem>>, vector<4x288xf32>
    %c0_38 = arith.constant 0 : index
    %c1_39 = arith.constant 1 : index
    %c0_40 = arith.constant 0 : index
    %c0_41 = arith.constant 0 : index
    %85 = vector.load %arg6[%c0_38, %c1_39, %c0_40, %c0_41] : memref<3x3x4x4xf32, #tpu.memory_space<vmem>>, vector<1x1x4x4xf32>
    %86 = vector.shape_cast %85 : vector<1x1x4x4xf32> to vector<4x4xf32>
    %cst_42 = arith.constant dense<0.000000e+00> : vector<4x288xf32>
    %87 = tpu.matmul %86, %83, %cst_42 {dimension_numbers = #tpu.dot_dimension_numbers<[1], [0], [0], [1], [0, 0, 1, 1], [], []>} : vector<4x4xf32>, vector<4x288xf32>, vector<4x288xf32> -> vector<4x288xf32>
    %88 = arith.addf %81, %87 : vector<4x288xf32>
    %c0_43 = arith.constant 0 : index
    %c1_44 = arith.constant 1 : index
    %c0_45 = arith.constant 0 : index
    %c0_46 = arith.constant 0 : index
    %89 = vector.load %arg7[%c0_43, %c1_44, %c0_45, %c0_46] : memref<3x3x4x4xf32, #tpu.memory_space<vmem>>, vector<1x1x4x4xf32>
    %90 = vector.shape_cast %89 : vector<1x1x4x4xf32> to vector<4x4xf32>
    %cst_47 = arith.constant dense<0.000000e+00> : vector<4x288xf32>
    %91 = tpu.matmul %90, %84, %cst_47 {dimension_numbers = #tpu.dot_dimension_numbers<[1], [0], [0], [1], [0, 0, 1, 1], [], []>} : vector<4x4xf32>, vector<4x288xf32>, vector<4x288xf32> -> vector<4x288xf32>
    %92 = arith.addf %88, %91 : vector<4x288xf32>
    %c0_48 = arith.constant 0 : index
    %c0_49 = arith.constant 0 : index
    %c2 = arith.constant 2 : index
    %93 = vector.load %arg2[%c0_48, %c0_49, %c2] : memref<1x4x342xf32, #tpu.memory_space<vmem>>, vector<1x4x288xf32>
    %94 = vector.shape_cast %93 : vector<1x4x288xf32> to vector<4x288xf32>
    %c0_50 = arith.constant 0 : index
    %c2_51 = arith.constant 2 : index
    %95 = vector.load %arg14[%c0_50, %c2_51] : memref<4x342xf32, #tpu.memory_space<vmem>>, vector<4x288xf32>
    %c0_52 = arith.constant 0 : index
    %c2_53 = arith.constant 2 : index
    %c0_54 = arith.constant 0 : index
    %c0_55 = arith.constant 0 : index
    %96 = vector.load %arg6[%c0_52, %c2_53, %c0_54, %c0_55] : memref<3x3x4x4xf32, #tpu.memory_space<vmem>>, vector<1x1x4x4xf32>
    %97 = vector.shape_cast %96 : vector<1x1x4x4xf32> to vector<4x4xf32>
    %cst_56 = arith.constant dense<0.000000e+00> : vector<4x288xf32>
    %98 = tpu.matmul %97, %94, %cst_56 {dimension_numbers = #tpu.dot_dimension_numbers<[1], [0], [0], [1], [0, 0, 1, 1], [], []>} : vector<4x4xf32>, vector<4x288xf32>, vector<4x288xf32> -> vector<4x288xf32>
    %99 = arith.addf %92, %98 : vector<4x288xf32>
    %c0_57 = arith.constant 0 : index
    %c2_58 = arith.constant 2 : index
    %c0_59 = arith.constant 0 : index
    %c0_60 = arith.constant 0 : index
    %100 = vector.load %arg7[%c0_57, %c2_58, %c0_59, %c0_60] : memref<3x3x4x4xf32, #tpu.memory_space<vmem>>, vector<1x1x4x4xf32>
    %101 = vector.shape_cast %100 : vector<1x1x4x4xf32> to vector<4x4xf32>
    %cst_61 = arith.constant dense<0.000000e+00> : vector<4x288xf32>
    %102 = tpu.matmul %101, %95, %cst_61 {dimension_numbers = #tpu.dot_dimension_numbers<[1], [0], [0], [1], [0, 0, 1, 1], [], []>} : vector<4x4xf32>, vector<4x288xf32>, vector<4x288xf32> -> vector<4x288xf32>
    %103 = arith.addf %99, %102 : vector<4x288xf32>
    %c0_62 = arith.constant 0 : index
    %c0_63 = arith.constant 0 : index
    %c18 = arith.constant 18 : index
    %104 = vector.load %arg2[%c0_62, %c0_63, %c18] : memref<1x4x342xf32, #tpu.memory_space<vmem>>, vector<1x4x288xf32>
    %105 = vector.shape_cast %104 : vector<1x4x288xf32> to vector<4x288xf32>
    %c0_64 = arith.constant 0 : index
    %c18_65 = arith.constant 18 : index
    %106 = vector.load %arg14[%c0_64, %c18_65] : memref<4x342xf32, #tpu.memory_space<vmem>>, vector<4x288xf32>
    %c1_66 = arith.constant 1 : index
    %c0_67 = arith.constant 0 : index
    %c0_68 = arith.constant 0 : index
    %c0_69 = arith.constant 0 : index
    %107 = vector.load %arg6[%c1_66, %c0_67, %c0_68, %c0_69] : memref<3x3x4x4xf32, #tpu.memory_space<vmem>>, vector<1x1x4x4xf32>
    %108 = vector.shape_cast %107 : vector<1x1x4x4xf32> to vector<4x4xf32>
    %cst_70 = arith.constant dense<0.000000e+00> : vector<4x288xf32>
    %109 = tpu.matmul %108, %105, %cst_70 {dimension_numbers = #tpu.dot_dimension_numbers<[1], [0], [0], [1], [0, 0, 1, 1], [], []>} : vector<4x4xf32>, vector<4x288xf32>, vector<4x288xf32> -> vector<4x288xf32>
    %110 = arith.addf %103, %109 : vector<4x288xf32>
    %c1_71 = arith.constant 1 : index
    %c0_72 = arith.constant 0 : index
    %c0_73 = arith.constant 0 : index
    %c0_74 = arith.constant 0 : index
    %111 = vector.load %arg7[%c1_71, %c0_72, %c0_73, %c0_74] : memref<3x3x4x4xf32, #tpu.memory_space<vmem>>, vector<1x1x4x4xf32>
    %112 = vector.shape_cast %111 : vector<1x1x4x4xf32> to vector<4x4xf32>
    %cst_75 = arith.constant dense<0.000000e+00> : vector<4x288xf32>
    %113 = tpu.matmul %112, %106, %cst_75 {dimension_numbers = #tpu.dot_dimension_numbers<[1], [0], [0], [1], [0, 0, 1, 1], [], []>} : vector<4x4xf32>, vector<4x288xf32>, vector<4x288xf32> -> vector<4x288xf32>
    %114 = arith.addf %110, %113 : vector<4x288xf32>
    %c0_76 = arith.constant 0 : index
    %c0_77 = arith.constant 0 : index
    %c19 = arith.constant 19 : index
    %115 = vector.load %arg2[%c0_76, %c0_77, %c19] : memref<1x4x342xf32, #tpu.memory_space<vmem>>, vector<1x4x288xf32>
    %116 = vector.shape_cast %115 : vector<1x4x288xf32> to vector<4x288xf32>
    %c0_78 = arith.constant 0 : index
    %c19_79 = arith.constant 19 : index
    %117 = vector.load %arg14[%c0_78, %c19_79] : memref<4x342xf32, #tpu.memory_space<vmem>>, vector<4x288xf32>
    %c1_80 = arith.constant 1 : index
    %c1_81 = arith.constant 1 : index
    %c0_82 = arith.constant 0 : index
    %c0_83 = arith.constant 0 : index
    %118 = vector.load %arg6[%c1_80, %c1_81, %c0_82, %c0_83] : memref<3x3x4x4xf32, #tpu.memory_space<vmem>>, vector<1x1x4x4xf32>
    %119 = vector.shape_cast %118 : vector<1x1x4x4xf32> to vector<4x4xf32>
    %cst_84 = arith.constant dense<0.000000e+00> : vector<4x288xf32>
    %120 = tpu.matmul %119, %116, %cst_84 {dimension_numbers = #tpu.dot_dimension_numbers<[1], [0], [0], [1], [0, 0, 1, 1], [], []>} : vector<4x4xf32>, vector<4x288xf32>, vector<4x288xf32> -> vector<4x288xf32>
    %121 = arith.addf %114, %120 : vector<4x288xf32>
    %c1_85 = arith.constant 1 : index
    %c1_86 = arith.constant 1 : index
    %c0_87 = arith.constant 0 : index
    %c0_88 = arith.constant 0 : index
    %122 = vector.load %arg7[%c1_85, %c1_86, %c0_87, %c0_88] : memref<3x3x4x4xf32, #tpu.memory_space<vmem>>, vector<1x1x4x4xf32>
    %123 = vector.shape_cast %122 : vector<1x1x4x4xf32> to vector<4x4xf32>
    %cst_89 = arith.constant dense<0.000000e+00> : vector<4x288xf32>
    %124 = tpu.matmul %123, %117, %cst_89 {dimension_numbers = #tpu.dot_dimension_numbers<[1], [0], [0], [1], [0, 0, 1, 1], [], []>} : vector<4x4xf32>, vector<4x288xf32>, vector<4x288xf32> -> vector<4x288xf32>
    %125 = arith.addf %121, %124 : vector<4x288xf32>
    %c0_90 = arith.constant 0 : index
    %c0_91 = arith.constant 0 : index
    %c20 = arith.constant 20 : index
    %126 = vector.load %arg2[%c0_90, %c0_91, %c20] : memref<1x4x342xf32, #tpu.memory_space<vmem>>, vector<1x4x288xf32>
    %127 = vector.shape_cast %126 : vector<1x4x288xf32> to vector<4x288xf32>
    %c0_92 = arith.constant 0 : index
    %c20_93 = arith.constant 20 : index
    %128 = vector.load %arg14[%c0_92, %c20_93] : memref<4x342xf32, #tpu.memory_space<vmem>>, vector<4x288xf32>
    %c1_94 = arith.constant 1 : index
    %c2_95 = arith.constant 2 : index
    %c0_96 = arith.constant 0 : index
    %c0_97 = arith.constant 0 : index
    %129 = vector.load %arg6[%c1_94, %c2_95, %c0_96, %c0_97] : memref<3x3x4x4xf32, #tpu.memory_space<vmem>>, vector<1x1x4x4xf32>
    %130 = vector.shape_cast %129 : vector<1x1x4x4xf32> to vector<4x4xf32>
    %cst_98 = arith.constant dense<0.000000e+00> : vector<4x288xf32>
    %131 = tpu.matmul %130, %127, %cst_98 {dimension_numbers = #tpu.dot_dimension_numbers<[1], [0], [0], [1], [0, 0, 1, 1], [], []>} : vector<4x4xf32>, vector<4x288xf32>, vector<4x288xf32> -> vector<4x288xf32>
    %132 = arith.addf %125, %131 : vector<4x288xf32>
    %c1_99 = arith.constant 1 : index
    %c2_100 = arith.constant 2 : index
    %c0_101 = arith.constant 0 : index
    %c0_102 = arith.constant 0 : index
    %133 = vector.load %arg7[%c1_99, %c2_100, %c0_101, %c0_102] : memref<3x3x4x4xf32, #tpu.memory_space<vmem>>, vector<1x1x4x4xf32>
    %134 = vector.shape_cast %133 : vector<1x1x4x4xf32> to vector<4x4xf32>
    %cst_103 = arith.constant dense<0.000000e+00> : vector<4x288xf32>
    %135 = tpu.matmul %134, %128, %cst_103 {dimension_numbers = #tpu.dot_dimension_numbers<[1], [0], [0], [1], [0, 0, 1, 1], [], []>} : vector<4x4xf32>, vector<4x288xf32>, vector<4x288xf32> -> vector<4x288xf32>
    %136 = arith.addf %132, %135 : vector<4x288xf32>
    %c0_104 = arith.constant 0 : index
    %c0_105 = arith.constant 0 : index
    %c36 = arith.constant 36 : index
    %137 = vector.load %arg2[%c0_104, %c0_105, %c36] : memref<1x4x342xf32, #tpu.memory_space<vmem>>, vector<1x4x288xf32>
    %138 = vector.shape_cast %137 : vector<1x4x288xf32> to vector<4x288xf32>
    %c0_106 = arith.constant 0 : index
    %c36_107 = arith.constant 36 : index
    %139 = vector.load %arg14[%c0_106, %c36_107] : memref<4x342xf32, #tpu.memory_space<vmem>>, vector<4x288xf32>
    %c2_108 = arith.constant 2 : index
    %c0_109 = arith.constant 0 : index
    %c0_110 = arith.constant 0 : index
    %c0_111 = arith.constant 0 : index
    %140 = vector.load %arg6[%c2_108, %c0_109, %c0_110, %c0_111] : memref<3x3x4x4xf32, #tpu.memory_space<vmem>>, vector<1x1x4x4xf32>
    %141 = vector.shape_cast %140 : vector<1x1x4x4xf32> to vector<4x4xf32>
    %cst_112 = arith.constant dense<0.000000e+00> : vector<4x288xf32>
    %142 = tpu.matmul %141, %138, %cst_112 {dimension_numbers = #tpu.dot_dimension_numbers<[1], [0], [0], [1], [0, 0, 1, 1], [], []>} : vector<4x4xf32>, vector<4x288xf32>, vector<4x288xf32> -> vector<4x288xf32>
    %143 = arith.addf %136, %142 : vector<4x288xf32>
    %c2_113 = arith.constant 2 : index
    %c0_114 = arith.constant 0 : index
    %c0_115 = arith.constant 0 : index
    %c0_116 = arith.constant 0 : index
    %144 = vector.load %arg7[%c2_113, %c0_114, %c0_115, %c0_116] : memref<3x3x4x4xf32, #tpu.memory_space<vmem>>, vector<1x1x4x4xf32>
    %145 = vector.shape_cast %144 : vector<1x1x4x4xf32> to vector<4x4xf32>
    %cst_117 = arith.constant dense<0.000000e+00> : vector<4x288xf32>
    %146 = tpu.matmul %145, %139, %cst_117 {dimension_numbers = #tpu.dot_dimension_numbers<[1], [0], [0], [1], [0, 0, 1, 1], [], []>} : vector<4x4xf32>, vector<4x288xf32>, vector<4x288xf32> -> vector<4x288xf32>
    %147 = arith.addf %143, %146 : vector<4x288xf32>
    %c0_118 = arith.constant 0 : index
    %c0_119 = arith.constant 0 : index
    %c37 = arith.constant 37 : index
    %148 = vector.load %arg2[%c0_118, %c0_119, %c37] : memref<1x4x342xf32, #tpu.memory_space<vmem>>, vector<1x4x288xf32>
    %149 = vector.shape_cast %148 : vector<1x4x288xf32> to vector<4x288xf32>
    %c0_120 = arith.constant 0 : index
    %c37_121 = arith.constant 37 : index
    %150 = vector.load %arg14[%c0_120, %c37_121] : memref<4x342xf32, #tpu.memory_space<vmem>>, vector<4x288xf32>
    %c2_122 = arith.constant 2 : index
    %c1_123 = arith.constant 1 : index
    %c0_124 = arith.constant 0 : index
    %c0_125 = arith.constant 0 : index
    %151 = vector.load %arg6[%c2_122, %c1_123, %c0_124, %c0_125] : memref<3x3x4x4xf32, #tpu.memory_space<vmem>>, vector<1x1x4x4xf32>
    %152 = vector.shape_cast %151 : vector<1x1x4x4xf32> to vector<4x4xf32>
    %cst_126 = arith.constant dense<0.000000e+00> : vector<4x288xf32>
    %153 = tpu.matmul %152, %149, %cst_126 {dimension_numbers = #tpu.dot_dimension_numbers<[1], [0], [0], [1], [0, 0, 1, 1], [], []>} : vector<4x4xf32>, vector<4x288xf32>, vector<4x288xf32> -> vector<4x288xf32>
    %154 = arith.addf %147, %153 : vector<4x288xf32>
    %c2_127 = arith.constant 2 : index
    %c1_128 = arith.constant 1 : index
    %c0_129 = arith.constant 0 : index
    %c0_130 = arith.constant 0 : index
    %155 = vector.load %arg7[%c2_127, %c1_128, %c0_129, %c0_130] : memref<3x3x4x4xf32, #tpu.memory_space<vmem>>, vector<1x1x4x4xf32>
    %156 = vector.shape_cast %155 : vector<1x1x4x4xf32> to vector<4x4xf32>
    %cst_131 = arith.constant dense<0.000000e+00> : vector<4x288xf32>
    %157 = tpu.matmul %156, %150, %cst_131 {dimension_numbers = #tpu.dot_dimension_numbers<[1], [0], [0], [1], [0, 0, 1, 1], [], []>} : vector<4x4xf32>, vector<4x288xf32>, vector<4x288xf32> -> vector<4x288xf32>
    %158 = arith.addf %154, %157 : vector<4x288xf32>
    %c0_132 = arith.constant 0 : index
    %c0_133 = arith.constant 0 : index
    %c38 = arith.constant 38 : index
    %159 = vector.load %arg2[%c0_132, %c0_133, %c38] : memref<1x4x342xf32, #tpu.memory_space<vmem>>, vector<1x4x288xf32>
    %160 = vector.shape_cast %159 : vector<1x4x288xf32> to vector<4x288xf32>
    %c0_134 = arith.constant 0 : index
    %c38_135 = arith.constant 38 : index
    %161 = vector.load %arg14[%c0_134, %c38_135] : memref<4x342xf32, #tpu.memory_space<vmem>>, vector<4x288xf32>
    %c2_136 = arith.constant 2 : index
    %c2_137 = arith.constant 2 : index
    %c0_138 = arith.constant 0 : index
    %c0_139 = arith.constant 0 : index
    %162 = vector.load %arg6[%c2_136, %c2_137, %c0_138, %c0_139] : memref<3x3x4x4xf32, #tpu.memory_space<vmem>>, vector<1x1x4x4xf32>
    %163 = vector.shape_cast %162 : vector<1x1x4x4xf32> to vector<4x4xf32>
    %cst_140 = arith.constant dense<0.000000e+00> : vector<4x288xf32>
    %164 = tpu.matmul %163, %160, %cst_140 {dimension_numbers = #tpu.dot_dimension_numbers<[1], [0], [0], [1], [0, 0, 1, 1], [], []>} : vector<4x4xf32>, vector<4x288xf32>, vector<4x288xf32> -> vector<4x288xf32>
    %165 = arith.addf %158, %164 : vector<4x288xf32>
    %c2_141 = arith.constant 2 : index
    %c2_142 = arith.constant 2 : index
    %c0_143 = arith.constant 0 : index
    %c0_144 = arith.constant 0 : index
    %166 = vector.load %arg7[%c2_141, %c2_142, %c0_143, %c0_144] : memref<3x3x4x4xf32, #tpu.memory_space<vmem>>, vector<1x1x4x4xf32>
    %167 = vector.shape_cast %166 : vector<1x1x4x4xf32> to vector<4x4xf32>
    %cst_145 = arith.constant dense<0.000000e+00> : vector<4x288xf32>
    %168 = tpu.matmul %167, %161, %cst_145 {dimension_numbers = #tpu.dot_dimension_numbers<[1], [0], [0], [1], [0, 0, 1, 1], [], []>} : vector<4x4xf32>, vector<4x288xf32>, vector<4x288xf32> -> vector<4x288xf32>
    %169 = arith.addf %165, %168 : vector<4x288xf32>
    %c0_146 = arith.constant 0 : index
    %c0_147 = arith.constant 0 : index
    %170 = vector.load %arg8[%c0_146, %c0_147] : memref<4x1xf32, #tpu.memory_space<vmem>>, vector<4x1xf32>
    %171 = vector.broadcast %170 : vector<4x1xf32> to vector<4x288xf32>
    %172 = arith.mulf %169, %171 : vector<4x288xf32>
    %c0_148 = arith.constant 0 : index
    %c0_149 = arith.constant 0 : index
    %173 = vector.load %arg9[%c0_148, %c0_149] : memref<4x1xf32, #tpu.memory_space<vmem>>, vector<4x1xf32>
    %174 = vector.broadcast %173 : vector<4x1xf32> to vector<4x288xf32>
    %175 = arith.addf %172, %174 : vector<4x288xf32>
    %cst_150 = arith.constant 0.000000e+00 : f32
    %176 = vector.broadcast %cst_150 : f32 to vector<4x288xf32>
    %177 = arith.maximumf %175, %176 : vector<4x288xf32>
    %c0_151 = arith.constant 0 : index
    %c0_152 = arith.constant 0 : index
    %178 = vector.load %arg5[%c0_151, %c0_152] : memref<1x288xf32, #tpu.memory_space<vmem>>, vector<1x288xf32>
    %179 = vector.broadcast %178 : vector<1x288xf32> to vector<4x288xf32>
    %180 = arith.mulf %177, %179 : vector<4x288xf32>
    %c0_153 = arith.constant 0 : index
    %c19_154 = arith.constant 19 : index
    %181 = vector.load %arg15[%c0_153, %c19_154] : memref<4x342xf32, #tpu.memory_space<vmem>>, vector<4x288xf32>
    tpu.vector_store %arg15[%c0_153, %c19_154], %180 {strides = array<i32>} : memref<4x342xf32, #tpu.memory_space<vmem>>, vector<4x288xf32>,
    %cst_155 = arith.constant 0.000000e+00 : f32
    %182 = vector.broadcast %cst_155 : f32 to vector<4x288xf32>
    %c0_156 = arith.constant 0 : index
    %c0_157 = arith.constant 0 : index
    %183 = vector.load %arg15[%c0_156, %c0_157] : memref<4x342xf32, #tpu.memory_space<vmem>>, vector<4x288xf32>
    %c0_158 = arith.constant 0 : index
    %c0_159 = arith.constant 0 : index
    %c0_160 = arith.constant 0 : index
    %c0_161 = arith.constant 0 : index
    %184 = vector.load %arg10[%c0_158, %c0_159, %c0_160, %c0_161] : memref<3x3x4x4xf32, #tpu.memory_space<vmem>>, vector<1x1x4x4xf32>
    %185 = vector.shape_cast %184 : vector<1x1x4x4xf32> to vector<4x4xf32>
    %cst_162 = arith.constant dense<0.000000e+00> : vector<4x288xf32>
    %186 = tpu.matmul %185, %183, %cst_162 {dimension_numbers = #tpu.dot_dimension_numbers<[1], [0], [0], [1], [0, 0, 1, 1], [], []>} : vector<4x4xf32>, vector<4x288xf32>, vector<4x288xf32> -> vector<4x288xf32>
    %187 = arith.addf %182, %186 : vector<4x288xf32>
    %c0_163 = arith.constant 0 : index
    %c1_164 = arith.constant 1 : index
    %188 = vector.load %arg15[%c0_163, %c1_164] : memref<4x342xf32, #tpu.memory_space<vmem>>, vector<4x288xf32>
    %c0_165 = arith.constant 0 : index
    %c1_166 = arith.constant 1 : index
    %c0_167 = arith.constant 0 : index
    %c0_168 = arith.constant 0 : index
    %189 = vector.load %arg10[%c0_165, %c1_166, %c0_167, %c0_168] : memref<3x3x4x4xf32, #tpu.memory_space<vmem>>, vector<1x1x4x4xf32>
    %190 = vector.shape_cast %189 : vector<1x1x4x4xf32> to vector<4x4xf32>
    %cst_169 = arith.constant dense<0.000000e+00> : vector<4x288xf32>
    %191 = tpu.matmul %190, %188, %cst_169 {dimension_numbers = #tpu.dot_dimension_numbers<[1], [0], [0], [1], [0, 0, 1, 1], [], []>} : vector<4x4xf32>, vector<4x288xf32>, vector<4x288xf32> -> vector<4x288xf32>
    %192 = arith.addf %187, %191 : vector<4x288xf32>
    %c0_170 = arith.constant 0 : index
    %c2_171 = arith.constant 2 : index
    %193 = vector.load %arg15[%c0_170, %c2_171] : memref<4x342xf32, #tpu.memory_space<vmem>>, vector<4x288xf32>
    %c0_172 = arith.constant 0 : index
    %c2_173 = arith.constant 2 : index
    %c0_174 = arith.constant 0 : index
    %c0_175 = arith.constant 0 : index
    %194 = vector.load %arg10[%c0_172, %c2_173, %c0_174, %c0_175] : memref<3x3x4x4xf32, #tpu.memory_space<vmem>>, vector<1x1x4x4xf32>
    %195 = vector.shape_cast %194 : vector<1x1x4x4xf32> to vector<4x4xf32>
    %cst_176 = arith.constant dense<0.000000e+00> : vector<4x288xf32>
    %196 = tpu.matmul %195, %193, %cst_176 {dimension_numbers = #tpu.dot_dimension_numbers<[1], [0], [0], [1], [0, 0, 1, 1], [], []>} : vector<4x4xf32>, vector<4x288xf32>, vector<4x288xf32> -> vector<4x288xf32>
    %197 = arith.addf %192, %196 : vector<4x288xf32>
    %c0_177 = arith.constant 0 : index
    %c18_178 = arith.constant 18 : index
    %198 = vector.load %arg15[%c0_177, %c18_178] : memref<4x342xf32, #tpu.memory_space<vmem>>, vector<4x288xf32>
    %c1_179 = arith.constant 1 : index
    %c0_180 = arith.constant 0 : index
    %c0_181 = arith.constant 0 : index
    %c0_182 = arith.constant 0 : index
    %199 = vector.load %arg10[%c1_179, %c0_180, %c0_181, %c0_182] : memref<3x3x4x4xf32, #tpu.memory_space<vmem>>, vector<1x1x4x4xf32>
    %200 = vector.shape_cast %199 : vector<1x1x4x4xf32> to vector<4x4xf32>
    %cst_183 = arith.constant dense<0.000000e+00> : vector<4x288xf32>
    %201 = tpu.matmul %200, %198, %cst_183 {dimension_numbers = #tpu.dot_dimension_numbers<[1], [0], [0], [1], [0, 0, 1, 1], [], []>} : vector<4x4xf32>, vector<4x288xf32>, vector<4x288xf32> -> vector<4x288xf32>
    %202 = arith.addf %197, %201 : vector<4x288xf32>
    %c0_184 = arith.constant 0 : index
    %c19_185 = arith.constant 19 : index
    %203 = vector.load %arg15[%c0_184, %c19_185] : memref<4x342xf32, #tpu.memory_space<vmem>>, vector<4x288xf32>
    %c1_186 = arith.constant 1 : index
    %c1_187 = arith.constant 1 : index
    %c0_188 = arith.constant 0 : index
    %c0_189 = arith.constant 0 : index
    %204 = vector.load %arg10[%c1_186, %c1_187, %c0_188, %c0_189] : memref<3x3x4x4xf32, #tpu.memory_space<vmem>>, vector<1x1x4x4xf32>
    %205 = vector.shape_cast %204 : vector<1x1x4x4xf32> to vector<4x4xf32>
    %cst_190 = arith.constant dense<0.000000e+00> : vector<4x288xf32>
    %206 = tpu.matmul %205, %203, %cst_190 {dimension_numbers = #tpu.dot_dimension_numbers<[1], [0], [0], [1], [0, 0, 1, 1], [], []>} : vector<4x4xf32>, vector<4x288xf32>, vector<4x288xf32> -> vector<4x288xf32>
    %207 = arith.addf %202, %206 : vector<4x288xf32>
    %c0_191 = arith.constant 0 : index
    %c20_192 = arith.constant 20 : index
    %208 = vector.load %arg15[%c0_191, %c20_192] : memref<4x342xf32, #tpu.memory_space<vmem>>, vector<4x288xf32>
    %c1_193 = arith.constant 1 : index
    %c2_194 = arith.constant 2 : index
    %c0_195 = arith.constant 0 : index
    %c0_196 = arith.constant 0 : index
    %209 = vector.load %arg10[%c1_193, %c2_194, %c0_195, %c0_196] : memref<3x3x4x4xf32, #tpu.memory_space<vmem>>, vector<1x1x4x4xf32>
    %210 = vector.shape_cast %209 : vector<1x1x4x4xf32> to vector<4x4xf32>
    %cst_197 = arith.constant dense<0.000000e+00> : vector<4x288xf32>
    %211 = tpu.matmul %210, %208, %cst_197 {dimension_numbers = #tpu.dot_dimension_numbers<[1], [0], [0], [1], [0, 0, 1, 1], [], []>} : vector<4x4xf32>, vector<4x288xf32>, vector<4x288xf32> -> vector<4x288xf32>
    %212 = arith.addf %207, %211 : vector<4x288xf32>
    %c0_198 = arith.constant 0 : index
    %c36_199 = arith.constant 36 : index
    %213 = vector.load %arg15[%c0_198, %c36_199] : memref<4x342xf32, #tpu.memory_space<vmem>>, vector<4x288xf32>
    %c2_200 = arith.constant 2 : index
    %c0_201 = arith.constant 0 : index
    %c0_202 = arith.constant 0 : index
    %c0_203 = arith.constant 0 : index
    %214 = vector.load %arg10[%c2_200, %c0_201, %c0_202, %c0_203] : memref<3x3x4x4xf32, #tpu.memory_space<vmem>>, vector<1x1x4x4xf32>
    %215 = vector.shape_cast %214 : vector<1x1x4x4xf32> to vector<4x4xf32>
    %cst_204 = arith.constant dense<0.000000e+00> : vector<4x288xf32>
    %216 = tpu.matmul %215, %213, %cst_204 {dimension_numbers = #tpu.dot_dimension_numbers<[1], [0], [0], [1], [0, 0, 1, 1], [], []>} : vector<4x4xf32>, vector<4x288xf32>, vector<4x288xf32> -> vector<4x288xf32>
    %217 = arith.addf %212, %216 : vector<4x288xf32>
    %c0_205 = arith.constant 0 : index
    %c37_206 = arith.constant 37 : index
    %218 = vector.load %arg15[%c0_205, %c37_206] : memref<4x342xf32, #tpu.memory_space<vmem>>, vector<4x288xf32>
    %c2_207 = arith.constant 2 : index
    %c1_208 = arith.constant 1 : index
    %c0_209 = arith.constant 0 : index
    %c0_210 = arith.constant 0 : index
    %219 = vector.load %arg10[%c2_207, %c1_208, %c0_209, %c0_210] : memref<3x3x4x4xf32, #tpu.memory_space<vmem>>, vector<1x1x4x4xf32>
    %220 = vector.shape_cast %219 : vector<1x1x4x4xf32> to vector<4x4xf32>
    %cst_211 = arith.constant dense<0.000000e+00> : vector<4x288xf32>
    %221 = tpu.matmul %220, %218, %cst_211 {dimension_numbers = #tpu.dot_dimension_numbers<[1], [0], [0], [1], [0, 0, 1, 1], [], []>} : vector<4x4xf32>, vector<4x288xf32>, vector<4x288xf32> -> vector<4x288xf32>
    %222 = arith.addf %217, %221 : vector<4x288xf32>
    %c0_212 = arith.constant 0 : index
    %c38_213 = arith.constant 38 : index
    %223 = vector.load %arg15[%c0_212, %c38_213] : memref<4x342xf32, #tpu.memory_space<vmem>>, vector<4x288xf32>
    %c2_214 = arith.constant 2 : index
    %c2_215 = arith.constant 2 : index
    %c0_216 = arith.constant 0 : index
    %c0_217 = arith.constant 0 : index
    %224 = vector.load %arg10[%c2_214, %c2_215, %c0_216, %c0_217] : memref<3x3x4x4xf32, #tpu.memory_space<vmem>>, vector<1x1x4x4xf32>
    %225 = vector.shape_cast %224 : vector<1x1x4x4xf32> to vector<4x4xf32>
    %cst_218 = arith.constant dense<0.000000e+00> : vector<4x288xf32>
    %226 = tpu.matmul %225, %223, %cst_218 {dimension_numbers = #tpu.dot_dimension_numbers<[1], [0], [0], [1], [0, 0, 1, 1], [], []>} : vector<4x4xf32>, vector<4x288xf32>, vector<4x288xf32> -> vector<4x288xf32>
    %227 = arith.addf %222, %226 : vector<4x288xf32>
    %c0_219 = arith.constant 0 : index
    %c0_220 = arith.constant 0 : index
    %228 = vector.load %arg11[%c0_219, %c0_220] : memref<4x1xf32, #tpu.memory_space<vmem>>, vector<4x1xf32>
    %229 = vector.broadcast %228 : vector<4x1xf32> to vector<4x288xf32>
    %230 = arith.mulf %227, %229 : vector<4x288xf32>
    %c0_221 = arith.constant 0 : index
    %c0_222 = arith.constant 0 : index
    %231 = vector.load %arg12[%c0_221, %c0_222] : memref<4x1xf32, #tpu.memory_space<vmem>>, vector<4x1xf32>
    %232 = vector.broadcast %231 : vector<4x1xf32> to vector<4x288xf32>
    %233 = arith.addf %230, %232 : vector<4x288xf32>
    %cst_223 = arith.constant 0.000000e+00 : f32
    %234 = vector.broadcast %cst_223 : f32 to vector<4x288xf32>
    %235 = arith.maximumf %233, %234 : vector<4x288xf32>
    %c0_224 = arith.constant 0 : index
    %c0_225 = arith.constant 0 : index
    %c0_226 = arith.constant 0 : index
    %236 = vector.load %arg13[%c0_224, %c0_225, %c0_226] : memref<1x4x288xf32, #tpu.memory_space<vmem>>, vector<1x4x288xf32>
    %237 = vector.shape_cast %236 : vector<1x4x288xf32> to vector<4x288xf32>
    %238 = vector.shape_cast %235 : vector<4x288xf32> to vector<1x4x288xf32>
    tpu.vector_store %arg13[%c0_224, %c0_225, %c0_226], %238 {strides = array<i32>} : memref<1x4x288xf32, #tpu.memory_space<vmem>>, vector<1x4x288xf32>,
    return
  }
  func.func @transform_0(%arg0: i32) -> (i32, i32, i32, i32) {
    %c0_i32 = arith.constant 0 : i32
    %c0_i32_0 = arith.constant 0 : i32
    %c0_i32_1 = arith.constant 0 : i32
    %c0_i32_2 = arith.constant 0 : i32
    return %arg0, %c0_i32, %c0_i32_0, %c0_i32_1 : i32, i32, i32, i32
  }
  func.func @transform_1(%arg0: i32) -> (i32, i32, i32) {
    %c0_i32 = arith.constant 0 : i32
    %c0_i32_0 = arith.constant 0 : i32
    %c0_i32_1 = arith.constant 0 : i32
    return %arg0, %c0_i32, %c0_i32_0 : i32, i32, i32
  }
  func.func @transform_2(%arg0: i32) -> (i32, i32) {
    %c0_i32 = arith.constant 0 : i32
    %c0_i32_0 = arith.constant 0 : i32
    %c0_i32_1 = arith.constant 0 : i32
    return %c0_i32, %c0_i32_0 : i32, i32
  }
  func.func @transform_3(%arg0: i32) -> (i32, i32) {
    %c0_i32 = arith.constant 0 : i32
    %c0_i32_0 = arith.constant 0 : i32
    %c0_i32_1 = arith.constant 0 : i32
    return %c0_i32, %c0_i32_0 : i32, i32
  }
  func.func @transform_4(%arg0: i32) -> (i32, i32) {
    %c0_i32 = arith.constant 0 : i32
    %c0_i32_0 = arith.constant 0 : i32
    %c0_i32_1 = arith.constant 0 : i32
    return %c0_i32, %c0_i32_0 : i32, i32
  }
  func.func @transform_5(%arg0: i32) -> (i32, i32, i32, i32) {
    %c0_i32 = arith.constant 0 : i32
    %c0_i32_0 = arith.constant 0 : i32
    %c0_i32_1 = arith.constant 0 : i32
    %c0_i32_2 = arith.constant 0 : i32
    %c0_i32_3 = arith.constant 0 : i32
    return %c0_i32, %c0_i32_0, %c0_i32_1, %c0_i32_2 : i32, i32, i32, i32
  }
  func.func @transform_6(%arg0: i32) -> (i32, i32, i32, i32) {
    %c0_i32 = arith.constant 0 : i32
    %c0_i32_0 = arith.constant 0 : i32
    %c0_i32_1 = arith.constant 0 : i32
    %c0_i32_2 = arith.constant 0 : i32
    %c0_i32_3 = arith.constant 0 : i32
    return %c0_i32, %c0_i32_0, %c0_i32_1, %c0_i32_2 : i32, i32, i32, i32
  }
  func.func @transform_7(%arg0: i32) -> (i32, i32) {
    %c0_i32 = arith.constant 0 : i32
    %c0_i32_0 = arith.constant 0 : i32
    %c0_i32_1 = arith.constant 0 : i32
    return %c0_i32, %c0_i32_0 : i32, i32
  }
  func.func @transform_8(%arg0: i32) -> (i32, i32) {
    %c0_i32 = arith.constant 0 : i32
    %c0_i32_0 = arith.constant 0 : i32
    %c0_i32_1 = arith.constant 0 : i32
    return %c0_i32, %c0_i32_0 : i32, i32
  }
  func.func @transform_9(%arg0: i32) -> (i32, i32, i32, i32) {
    %c0_i32 = arith.constant 0 : i32
    %c0_i32_0 = arith.constant 0 : i32
    %c0_i32_1 = arith.constant 0 : i32
    %c0_i32_2 = arith.constant 0 : i32
    %c0_i32_3 = arith.constant 0 : i32
    return %c0_i32, %c0_i32_0, %c0_i32_1, %c0_i32_2 : i32, i32, i32, i32
  }
  func.func @transform_10(%arg0: i32) -> (i32, i32) {
    %c0_i32 = arith.constant 0 : i32
    %c0_i32_0 = arith.constant 0 : i32
    %c0_i32_1 = arith.constant 0 : i32
    return %c0_i32, %c0_i32_0 : i32, i32
  }
  func.func @transform_11(%arg0: i32) -> (i32, i32) {
    %c0_i32 = arith.constant 0 : i32
    %c0_i32_0 = arith.constant 0 : i32
    %c0_i32_1 = arith.constant 0 : i32
    return %c0_i32, %c0_i32_0 : i32, i32
  }
  func.func @transform_12(%arg0: i32) -> (i32, i32, i32) {
    %c0_i32 = arith.constant 0 : i32
    %c0_i32_0 = arith.constant 0 : i32
    %c0_i32_1 = arith.constant 0 : i32
    return %arg0, %c0_i32, %c0_i32_0 : i32, i32, i32
  }
}

</mosaic_0001>

<llo_original>
// kernel: tpu_custom_call.1
$region0: #{tpu_custom_call.1}
  #allocation0 [shape = 'u32[]', space=smem, size = 0x4, offset = 0x4, fixed_abs, tag = 'smem constant byte address 0x4 - core index']
  #allocation1 [shape = 'u32[72,128]{1,0:T(1,128)}', space=vmem, size = 0x9000, scoped, tag = 'internal scratch']
  #allocation2 [shape = 'f32[4,342]{1,0:T(4,128)}', space=vmem, size = 0x1800, scoped, tag = 'scratch operand']
  #allocation3 [shape = 'f32[4,342]{1,0:T(4,128)}', space=vmem, size = 0x1800, scoped, tag = 'scratch operand']
  %s0 = inlined_call_operand.hbm [shape: f32[2,4,8,8], index: 0, kind: input, shape index: {}]
  %s1 = inlined_call_operand.hbm [shape: f32[2,4,342], index: 1, kind: input, shape index: {}]
  %s2 = inlined_call_operand.vmem [shape: f32[19,8], index: 2, kind: input, shape index: {}]
  %s3 = inlined_call_operand.hbm [shape: f32[8,18], index: 3, kind: input, shape index: {}]
  %s4 = inlined_call_operand.vmem [shape: f32[1,288], index: 4, kind: input, shape index: {}]
  %s5 = inlined_call_operand.vmem [shape: f32[3,3,4,4], index: 5, kind: input, shape index: {}]
  %s6 = inlined_call_operand.hbm [shape: f32[3,3,4,4], index: 6, kind: input, shape index: {}]
  %s7 = inlined_call_operand.vmem [shape: f32[4,1], index: 7, kind: input, shape index: {}]
  %s8 = inlined_call_operand.vmem [shape: f32[4,1], index: 8, kind: input, shape index: {}]
  %s9 = inlined_call_operand.hbm [shape: f32[3,3,4,4], index: 9, kind: input, shape index: {}]
  %s10 = inlined_call_operand.vmem [shape: f32[4,1], index: 10, kind: input, shape index: {}]
  %s11 = inlined_call_operand.vmem [shape: f32[4,1], index: 11, kind: input, shape index: {}]
  %s12 = inlined_call_operand.hbm [shape: f32[2,4,288], index: 12, kind: output, shape index: {}]
  %s13 = sld [smem:[#allocation0]]
  $region101: #{tpu_custom_call.1} parent=0
    _
  %s15 = ssub.s32 1, %s13
  %s16 = scalar_select 0, %s15, %s13
  $region1: #{tpu_custom_call.1} parent=0
    #allocation4 [shape = 'u8[32768]{0}', space=vmem, size = 0x8000, scoped, tag = 'input window, operand 0']
    #allocation5 [shape = 's32[2]{0}', space=sflag, size = 0x8, scoped, tag = 'scoped memory for tpu_custom_call.1']
    #allocation6 [shape = 's32[2]{0}', space=sflag, size = 0x8, scoped, tag = 'scoped memory for tpu_custom_call.1']
    #allocation7 [shape = 'u8[12288]{0}', space=vmem, size = 0x3000, scoped, tag = 'input window, operand 1']
    #allocation8 [shape = 's32[2]{0}', space=sflag, size = 0x8, scoped, tag = 'scoped memory for tpu_custom_call.1']
    #allocation9 [shape = 'u8[4096]{0}', space=vmem, size = 0x1000, scoped, tag = 'input window, operand 3, single buffered']
    #allocation10 [shape = 'u8[18432]{0}', space=vmem, size = 0x4800, scoped, tag = 'input window, operand 6, single buffered']
    #allocation11 [shape = 's32[1]{0}', space=sflag, size = 0x4, scoped, tag = 'scoped memory for tpu_custom_call.1']
    #allocation12 [shape = 'u8[18432]{0}', space=vmem, size = 0x4800, scoped, tag = 'input window, operand 9, single buffered']
    #allocation13 [shape = 'u8[12288]{0}', space=vmem, size = 0x3000, scoped, tag = 'output window, operand 0']
    %17 = vsyncpa [#allocation5], 0
    %s18 = scalar_lea.sflag [#allocation5], 1
    %19 = vsyncpa %s18, 0
    %20 = vsyncpa [#allocation8], 0
    %s21 = scalar_lea.sflag [#allocation8], 1
    %22 = vsyncpa %s21, 0
    %23 = vsyncpa [#allocation11], 0
    %24 = vsyncpa [#allocation6], 0
    %s25 = scalar_lea.sflag [#allocation6], 1
    %26 = vsyncpa %s25, 0
    loop: start=0, step=1, limit=4
    $region2: #{tpu_custom_call.1} parent=1 // loop_pre_header
      _
    $region3: #{tpu_custom_call.1} parent=1 // loop_header
      %s28 = sphi 0, %s32
      %p29 = scmp.ge.s32.totalorder %s28, 4
      %s38 = sphi 0, %s40
      %s41 = sphi 0, %s38
      %s42 = sphi 0, %s41
      %s58 = sphi 0, %s42
      %s64 = sphi 0, %s66
      %s67 = sphi 0, %s64
      %s68 = sphi 0, %s67
      %s84 = sphi 0, %s68
      %s88 = sphi 0, %s88
      %s90 = sphi 0, %s88
      %s91 = sphi 0, %s90
      %s105 = sphi 0, %s91
      %s109 = sphi 0, %s109
      %s111 = sphi 0, %s109
      %s112 = sphi 0, %s111
      %s126 = sphi 0, %s112
      %s130 = sphi 0, %s130
      %s132 = sphi 0, %s130
      %s133 = sphi 0, %s132
      %s147 = sphi 0, %s133
      %s151 = sphi 0, %s151
      %s153 = sphi 0, %s151
      %s154 = sphi 0, %s153
      %s168 = sphi 0, %s154
      %s172 = sphi 0, %s172
      %s174 = sphi 0, %s172
      %s175 = sphi 0, %s174
      %s189 = sphi 0, %s175
      %s193 = sphi 0, %s193
      %s195 = sphi 0, %s193
      %s196 = sphi 0, %s195
      %s210 = sphi 0, %s196
      %s214 = sphi 0, %s214
      %s216 = sphi 0, %s214
      %s217 = sphi 0, %s216
      %s231 = sphi 0, %s217
      %s235 = sphi 0, %s235
      %s237 = sphi 0, %s235
      %s238 = sphi 0, %s237
      %s252 = sphi 0, %s238
      %s256 = sphi 0, %s256
      %s258 = sphi 0, %s256
      %s259 = sphi 0, %s258
      %s273 = sphi 0, %s259
      %s277 = sphi 0, %s277
      %s279 = sphi 0, %s277
      %s280 = sphi 0, %s279
      %s294 = sphi 0, %s280
      %s300 = sphi 0, %s302
      %s303 = sphi 0, %s300
      %s304 = sphi 0, %s303
      %s320 = sphi 0, %s304
    $region4: #{tpu_custom_call.1} parent=1 // loop_header_branch
      %31 = sbr.rel (%p29) target = $region8
    $region5: #{tpu_custom_call.1} parent=1 // loop_body
      %s33 = ssub.s32 %s28, 1
      %s34 = ssub.s32 %s28, 2
      %s35 = sadd.s32 %s28, 1
      %s36 = ssub.s32 %s28, %s35
      %p37 = scmp.eq.s32.totalorder %s36, 0
      %s39 = sadd.s32 %s38, 1
      %s40 = scalar_select %p37, %s38, %s39
      %p43 = pneg %p37
      %p44 = scmp.eq.s32.totalorder %s28, 1
      %p45 = por %p43, %p44
      %p46 = scmp.ne.s32.totalorder %s38, %s41
      %p47 = scmp.eq.s32.totalorder %s28, 0
      %p48 = por %p46, %p47
      %p49 = scmp.ne.s32.totalorder %s38, %s41
      %p50 = scmp.eq.s32.totalorder %s33, 1
      %p51 = por %p49, %p50
      %p52 = scmp.ne.s32.totalorder %s41, %s42
      %p53 = scmp.eq.s32.totalorder %s33, 0
      %p54 = por %p52, %p53
      %p55 = scmp.ne.s32.totalorder %s41, %s42
      %p56 = scmp.eq.s32.totalorder %s34, 1
      %p57 = por %p55, %p56
      %p59 = scmp.ne.s32.totalorder %s42, %s58
      %p60 = scmp.eq.s32.totalorder %s34, 0
      %p61 = por %p59, %p60
      %s62 = ssub.s32 %s28, %s35
      %p63 = scmp.eq.s32.totalorder %s62, 0
      %s65 = sadd.s32 %s64, 1
      %s66 = scalar_select %p63, %s64, %s65
      %p69 = pneg %p63
      %p70 = scmp.eq.s32.totalorder %s28, 1
      %p71 = por %p69, %p70
      %p72 = scmp.ne.s32.totalorder %s64, %s67
      %p73 = scmp.eq.s32.totalorder %s28, 0
      %p74 = por %p72, %p73
      %p75 = scmp.ne.s32.totalorder %s64, %s67
      %p76 = scmp.eq.s32.totalorder %s33, 1
      %p77 = por %p75, %p76
      %p78 = scmp.ne.s32.totalorder %s67, %s68
      %p79 = scmp.eq.s32.totalorder %s33, 0
      %p80 = por %p78, %p79
      %p81 = scmp.ne.s32.totalorder %s67, %s68
      %p82 = scmp.eq.s32.totalorder %s34, 1
      %p83 = por %p81, %p82
      %p85 = scmp.ne.s32.totalorder %s68, %s84
      %p86 = scmp.eq.s32.totalorder %s34, 0
      %p87 = por %p85, %p86
      %s89 = sadd.s32 %s88, 1
      %p92 = scmp.eq.s32.totalorder %s28, 1
      %p93 = scmp.ne.s32.totalorder %s88, %s90
      %p94 = scmp.eq.s32.totalorder %s28, 0
      %p95 = por %p93, %p94
      %p96 = scmp.ne.s32.totalorder %s88, %s90
      %p97 = scmp.eq.s32.totalorder %s33, 1
      %p98 = por %p96, %p97
      %p99 = scmp.ne.s32.totalorder %s90, %s91
      %p100 = scmp.eq.s32.totalorder %s33, 0
      %p101 = por %p99, %p100
      %p102 = scmp.ne.s32.totalorder %s90, %s91
      %p103 = scmp.eq.s32.totalorder %s34, 1
      %p104 = por %p102, %p103
      %p106 = scmp.ne.s32.totalorder %s91, %s105
      %p107 = scmp.eq.s32.totalorder %s34, 0
      %p108 = por %p106, %p107
      %s110 = sadd.s32 %s109, 1
      %p113 = scmp.eq.s32.totalorder %s28, 1
      %p114 = scmp.ne.s32.totalorder %s109, %s111
      %p115 = scmp.eq.s32.totalorder %s28, 0
      %p116 = por %p114, %p115
      %p117 = scmp.ne.s32.totalorder %s109, %s111
      %p118 = scmp.eq.s32.totalorder %s33, 1
      %p119 = por %p117, %p118
      %p120 = scmp.ne.s32.totalorder %s111, %s112
      %p121 = scmp.eq.s32.totalorder %s33, 0
      %p122 = por %p120, %p121
      %p123 = scmp.ne.s32.totalorder %s111, %s112
      %p124 = scmp.eq.s32.totalorder %s34, 1
      %p125 = por %p123, %p124
      %p127 = scmp.ne.s32.totalorder %s112, %s126
      %p128 = scmp.eq.s32.totalorder %s34, 0
      %p129 = por %p127, %p128
      %s131 = sadd.s32 %s130, 1
      %p134 = scmp.eq.s32.totalorder %s28, 1
      %p135 = scmp.ne.s32.totalorder %s130, %s132
      %p136 = scmp.eq.s32.totalorder %s28, 0
      %p137 = por %p135, %p136
      %p138 = scmp.ne.s32.totalorder %s130, %s132
      %p139 = scmp.eq.s32.totalorder %s33, 1
      %p140 = por %p138, %p139
      %p141 = scmp.ne.s32.totalorder %s132, %s133
      %p142 = scmp.eq.s32.totalorder %s33, 0
      %p143 = por %p141, %p142
      %p144 = scmp.ne.s32.totalorder %s132, %s133
      %p145 = scmp.eq.s32.totalorder %s34, 1
      %p146 = por %p144, %p145
      %p148 = scmp.ne.s32.totalorder %s133, %s147
      %p149 = scmp.eq.s32.totalorder %s34, 0
      %p150 = por %p148, %p149
      %s152 = sadd.s32 %s151, 1
      %p155 = scmp.eq.s32.totalorder %s28, 1
      %p156 = scmp.ne.s32.totalorder %s151, %s153
      %p157 = scmp.eq.s32.totalorder %s28, 0
      %p158 = por %p156, %p157
      %p159 = scmp.ne.s32.totalorder %s151, %s153
      %p160 = scmp.eq.s32.totalorder %s33, 1
      %p161 = por %p159, %p160
      %p162 = scmp.ne.s32.totalorder %s153, %s154
      %p163 = scmp.eq.s32.totalorder %s33, 0
      %p164 = por %p162, %p163
      %p165 = scmp.ne.s32.totalorder %s153, %s154
      %p166 = scmp.eq.s32.totalorder %s34, 1
      %p167 = por %p165, %p166
      %p169 = scmp.ne.s32.totalorder %s154, %s168
      %p170 = scmp.eq.s32.totalorder %s34, 0
      %p171 = por %p169, %p170
      %s173 = sadd.s32 %s172, 1
      %p176 = scmp.eq.s32.totalorder %s28, 1
      %p177 = scmp.ne.s32.totalorder %s172, %s174
      %p178 = scmp.eq.s32.totalorder %s28, 0
      %p179 = por %p177, %p178
      %p180 = scmp.ne.s32.totalorder %s172, %s174
      %p181 = scmp.eq.s32.totalorder %s33, 1
      %p182 = por %p180, %p181
      %p183 = scmp.ne.s32.totalorder %s174, %s175
      %p184 = scmp.eq.s32.totalorder %s33, 0
      %p185 = por %p183, %p184
      %p186 = scmp.ne.s32.totalorder %s174, %s175
      %p187 = scmp.eq.s32.totalorder %s34, 1
      %p188 = por %p186, %p187
      %p190 = scmp.ne.s32.totalorder %s175, %s189
      %p191 = scmp.eq.s32.totalorder %s34, 0
      %p192 = por %p190, %p191
      %s194 = sadd.s32 %s193, 1
      %p197 = scmp.eq.s32.totalorder %s28, 1
      %p198 = scmp.ne.s32.totalorder %s193, %s195
      %p199 = scmp.eq.s32.totalorder %s28, 0
      %p200 = por %p198, %p199
      %p201 = scmp.ne.s32.totalorder %s193, %s195
      %p202 = scmp.eq.s32.totalorder %s33, 1
      %p203 = por %p201, %p202
      %p204 = scmp.ne.s32.totalorder %s195, %s196
      %p205 = scmp.eq.s32.totalorder %s33, 0
      %p206 = por %p204, %p205
      %p207 = scmp.ne.s32.totalorder %s195, %s196
      %p208 = scmp.eq.s32.totalorder %s34, 1
      %p209 = por %p207, %p208
      %p211 = scmp.ne.s32.totalorder %s196, %s210
      %p212 = scmp.eq.s32.totalorder %s34, 0
      %p213 = por %p211, %p212
      %s215 = sadd.s32 %s214, 1
      %p218 = scmp.eq.s32.totalorder %s28, 1
      %p219 = scmp.ne.s32.totalorder %s214, %s216
      %p220 = scmp.eq.s32.totalorder %s28, 0
      %p221 = por %p219, %p220
      %p222 = scmp.ne.s32.totalorder %s214, %s216
      %p223 = scmp.eq.s32.totalorder %s33, 1
      %p224 = por %p222, %p223
      %p225 = scmp.ne.s32.totalorder %s216, %s217
      %p226 = scmp.eq.s32.totalorder %s33, 0
      %p227 = por %p225, %p226
      %p228 = scmp.ne.s32.totalorder %s216, %s217
      %p229 = scmp.eq.s32.totalorder %s34, 1
      %p230 = por %p228, %p229
      %p232 = scmp.ne.s32.totalorder %s217, %s231
      %p233 = scmp.eq.s32.totalorder %s34, 0
      %p234 = por %p232, %p233
      %s236 = sadd.s32 %s235, 1
      %p239 = scmp.eq.s32.totalorder %s28, 1
      %p240 = scmp.ne.s32.totalorder %s235, %s237
      %p241 = scmp.eq.s32.totalorder %s28, 0
      %p242 = por %p240, %p241
      %p243 = scmp.ne.s32.totalorder %s235, %s237
      %p244 = scmp.eq.s32.totalorder %s33, 1
      %p245 = por %p243, %p244
      %p246 = scmp.ne.s32.totalorder %s237, %s238
      %p247 = scmp.eq.s32.totalorder %s33, 0
      %p248 = por %p246, %p247
      %p249 = scmp.ne.s32.totalorder %s237, %s238
      %p250 = scmp.eq.s32.totalorder %s34, 1
      %p251 = por %p249, %p250
      %p253 = scmp.ne.s32.totalorder %s238, %s252
      %p254 = scmp.eq.s32.totalorder %s34, 0
      %p255 = por %p253, %p254
      %s257 = sadd.s32 %s256, 1
      %p260 = scmp.eq.s32.totalorder %s28, 1
      %p261 = scmp.ne.s32.totalorder %s256, %s258
      %p262 = scmp.eq.s32.totalorder %s28, 0
      %p263 = por %p261, %p262
      %p264 = scmp.ne.s32.totalorder %s256, %s258
      %p265 = scmp.eq.s32.totalorder %s33, 1
      %p266 = por %p264, %p265
      %p267 = scmp.ne.s32.totalorder %s258, %s259
      %p268 = scmp.eq.s32.totalorder %s33, 0
      %p269 = por %p267, %p268
      %p270 = scmp.ne.s32.totalorder %s258, %s259
      %p271 = scmp.eq.s32.totalorder %s34, 1
      %p272 = por %p270, %p271
      %p274 = scmp.ne.s32.totalorder %s259, %s273
      %p275 = scmp.eq.s32.totalorder %s34, 0
      %p276 = por %p274, %p275
      %s278 = sadd.s32 %s277, 1
      %p281 = scmp.eq.s32.totalorder %s28, 1
      %p282 = scmp.ne.s32.totalorder %s277, %s279
      %p283 = scmp.eq.s32.totalorder %s28, 0
      %p284 = por %p282, %p283
      %p285 = scmp.ne.s32.totalorder %s277, %s279
      %p286 = scmp.eq.s32.totalorder %s33, 1
      %p287 = por %p285, %p286
      %p288 = scmp.ne.s32.totalorder %s279, %s280
      %p289 = scmp.eq.s32.totalorder %s33, 0
      %p290 = por %p288, %p289
      %p291 = scmp.ne.s32.totalorder %s279, %s280
      %p292 = scmp.eq.s32.totalorder %s34, 1
      %p293 = por %p291, %p292
      %p295 = scmp.ne.s32.totalorder %s280, %s294
      %p296 = scmp.eq.s32.totalorder %s34, 0
      %p297 = por %p295, %p296
      %s298 = ssub.s32 %s28, %s35
      %p299 = scmp.eq.s32.totalorder %s298, 0
      %s301 = sadd.s32 %s300, 1
      %s302 = scalar_select %p299, %s300, %s301
      %p305 = pneg %p299
      %p306 = scmp.eq.s32.totalorder %s28, 1
      %p307 = por %p305, %p306
      %p308 = scmp.ne.s32.totalorder %s300, %s303
      %p309 = scmp.eq.s32.totalorder %s28, 0
      %p310 = por %p308, %p309
      %p311 = scmp.ne.s32.totalorder %s300, %s303
      %p312 = scmp.eq.s32.totalorder %s33, 1
      %p313 = por %p311, %p312
      %p314 = scmp.ne.s32.totalorder %s303, %s304
      %p315 = scmp.eq.s32.totalorder %s33, 0
      %p316 = por %p314, %p315
      %p317 = scmp.ne.s32.totalorder %s303, %s304
      %p318 = scmp.eq.s32.totalorder %s34, 1
      %p319 = por %p317, %p318
      %p321 = scmp.ne.s32.totalorder %s304, %s320
      %p322 = scmp.eq.s32.totalorder %s34, 0
      %p323 = por %p321, %p322
      %p324 = scmp.le.s32.totalorder 1, %s28
      %p325 = scmp.lt.s32.totalorder %s28, 3
      %p326 = pnand %p324, %p325
      %p327 = pneg %p326
      // Predicated region
      $region9: #{tpu_custom_call.1} parent=5 // pred_check
        _
      $region10: #{tpu_custom_call.1} parent=5 // pred_check_branch
        %329 = sbr.rel (%p326) target = $region12
      $region11: #{tpu_custom_call.1} parent=5 // pred_region
        %s330 = ssub.s32 %s28, 1
        // Predicated region
        $region13: #{tpu_custom_call.1} parent=11 // pred_check
          %p331 = pneg %p101
        $region14: #{tpu_custom_call.1} parent=11 // pred_check_branch
          %333 = sbr.rel (%p331) target = $region16
        $region15: #{tpu_custom_call.1} parent=11 // pred_region
          _
        $region16: #{tpu_custom_call.1} parent=11 // pred_fallthru
          _
        // Predicated region
        $region17: #{tpu_custom_call.1} parent=11 // pred_check
          %p334 = pneg %p122
        $region18: #{tpu_custom_call.1} parent=11 // pred_check_branch
          %336 = sbr.rel (%p334) target = $region20
        $region19: #{tpu_custom_call.1} parent=11 // pred_region
          %338 = vsyncadd [#allocation8], 0
          %s340 = sshll.u32 %s3, 4
          %s341 = int_to_ptr.hbm [resolvable:$true] %s340
          %s342 = sshll.u32 [#allocation9], 4
          %s343 = int_to_ptr.vmem [resolvable:$true] %s342
          %345 = dma.hbm_to_vmem [thread:$0]  %s341, 128, %s343, [#allocation8]
        $region20: #{tpu_custom_call.1} parent=11 // pred_fallthru
          _
        // Predicated region
        $region21: #{tpu_custom_call.1} parent=11 // pred_check
          %p346 = pneg %p143
        $region22: #{tpu_custom_call.1} parent=11 // pred_check_branch
          %348 = sbr.rel (%p346) target = $region24
        $region23: #{tpu_custom_call.1} parent=11 // pred_region
          _
        $region24: #{tpu_custom_call.1} parent=11 // pred_fallthru
          _
        // Predicated region
        $region25: #{tpu_custom_call.1} parent=11 // pred_check
          %p349 = pneg %p164
        $region26: #{tpu_custom_call.1} parent=11 // pred_check_branch
          %351 = sbr.rel (%p349) target = $region28
        $region27: #{tpu_custom_call.1} parent=11 // pred_region
          _
        $region28: #{tpu_custom_call.1} parent=11 // pred_fallthru
          _
        // Predicated region
        $region29: #{tpu_custom_call.1} parent=11 // pred_check
          %p352 = pneg %p185
        $region30: #{tpu_custom_call.1} parent=11 // pred_check_branch
          %354 = sbr.rel (%p352) target = $region32
        $region31: #{tpu_custom_call.1} parent=11 // pred_region
          %356 = vsyncadd [#allocation11], 0
          %s357 = sshll.u32 %s6, 4
          %s358 = int_to_ptr.hbm [resolvable:$true] %s357
          %s359 = sshll.u32 [#allocation10], 4
          %s360 = int_to_ptr.vmem [resolvable:$true] %s359
          %365 = dma.hbm_to_vmem [thread:$0]  %s358, 576, %s360, [#allocation11], 64, 64, 4
        $region32: #{tpu_custom_call.1} parent=11 // pred_fallthru
          _
        // Predicated region
        $region33: #{tpu_custom_call.1} parent=11 // pred_check
          %p366 = pneg %p206
        $region34: #{tpu_custom_call.1} parent=11 // pred_check_branch
          %368 = sbr.rel (%p366) target = $region36
        $region35: #{tpu_custom_call.1} parent=11 // pred_region
          _
        $region36: #{tpu_custom_call.1} parent=11 // pred_fallthru
          _
        // Predicated region
        $region37: #{tpu_custom_call.1} parent=11 // pred_check
          %p369 = pneg %p227
        $region38: #{tpu_custom_call.1} parent=11 // pred_check_branch
          %371 = sbr.rel (%p369) target = $region40
        $region39: #{tpu_custom_call.1} parent=11 // pred_region
          _
        $region40: #{tpu_custom_call.1} parent=11 // pred_fallthru
          _
        // Predicated region
        $region41: #{tpu_custom_call.1} parent=11 // pred_check
          %p372 = pneg %p248
        $region42: #{tpu_custom_call.1} parent=11 // pred_check_branch
          %374 = sbr.rel (%p372) target = $region44
        $region43: #{tpu_custom_call.1} parent=11 // pred_region
          %376 = vsyncadd [#allocation11], 0
          %s377 = sshll.u32 %s9, 4
          %s378 = int_to_ptr.hbm [resolvable:$true] %s377
          %s379 = sshll.u32 [#allocation12], 4
          %s380 = int_to_ptr.vmem [resolvable:$true] %s379
          %385 = dma.hbm_to_vmem [thread:$0]  %s378, 576, %s380, [#allocation11], 64, 64, 4
        $region44: #{tpu_custom_call.1} parent=11 // pred_fallthru
          _
        // Predicated region
        $region45: #{tpu_custom_call.1} parent=11 // pred_check
          %p386 = pneg %p269
        $region46: #{tpu_custom_call.1} parent=11 // pred_check_branch
          %388 = sbr.rel (%p386) target = $region48
        $region47: #{tpu_custom_call.1} parent=11 // pred_region
          _
        $region48: #{tpu_custom_call.1} parent=11 // pred_fallthru
          _
        // Predicated region
        $region49: #{tpu_custom_call.1} parent=11 // pred_check
          %p389 = pneg %p290
        $region50: #{tpu_custom_call.1} parent=11 // pred_check_branch
          %391 = sbr.rel (%p389) target = $region52
        $region51: #{tpu_custom_call.1} parent=11 // pred_region
          _
        $region52: #{tpu_custom_call.1} parent=11 // pred_fallthru
          _
      $region12: #{tpu_custom_call.1} parent=5 // pred_fallthru
        _
      %p392 = scmp.lt.s32.totalorder %s28, 2
      // Predicated region
      $region53: #{tpu_custom_call.1} parent=5 // pred_check
        %p393 = pneg %p392
      $region54: #{tpu_custom_call.1} parent=5 // pred_check_branch
        %395 = sbr.rel (%p393) target = $region56
      $region55: #{tpu_custom_call.1} parent=5 // pred_region
        // Predicated region
        $region57: #{tpu_custom_call.1} parent=55 // pred_check
          %p396 = pneg %p48
        $region58: #{tpu_custom_call.1} parent=55 // pred_check_branch
          %398 = sbr.rel (%p396) target = $region60
        $region59: #{tpu_custom_call.1} parent=55 // pred_region
          %s399 = sand.u32 %s38, 1
          %s400 = scalar_lea.sflag [#allocation5], %s399
          %s401 = sand.u32 %s38, 1
          %s402 = smul.addr %s401, 32
          %s403 = scalar_lea.vmem [#allocation4], %s402
          %405 = vsyncadd %s400, 0
          %s406 = smul.addr %s28, 4
          %s407 = smul.addr %s406, 8
          %s408 = scalar_lea.hbm %s0, %s407
          %s409 = sshll.u32 %s408, 4
          %s410 = int_to_ptr.hbm [resolvable:$true] %s409
          %s411 = sshll.u32 %s403, 4
          %s412 = int_to_ptr.vmem [resolvable:$true] %s411
          %417 = dma.hbm_to_vmem [thread:$0]  %s410, 512, %s412, %s400, 128, 128, 8
        $region60: #{tpu_custom_call.1} parent=55 // pred_fallthru
          _
        // Predicated region
        $region61: #{tpu_custom_call.1} parent=55 // pred_check
          %p418 = pneg %p74
        $region62: #{tpu_custom_call.1} parent=55 // pred_check_branch
          %420 = sbr.rel (%p418) target = $region64
        $region63: #{tpu_custom_call.1} parent=55 // pred_region
          %s421 = sand.u32 %s28, 1
          %s422 = scalar_lea.sflag [#allocation8], %s421
          %s423 = sand.u32 %s64, 1
          %s424 = smul.addr %s423, 12
          %s425 = scalar_lea.vmem [#allocation7], %s424
          %427 = vsyncadd %s422, 0
          %s428 = smul.addr %s28, 3
          %s429 = smul.addr %s428, 4
          %s430 = scalar_lea.hbm %s1, %s429
          %s432 = sshll.u32 %s430, 4
          %s433 = int_to_ptr.hbm [resolvable:$true] %s432
          %s434 = sshll.u32 %s425, 4
          %s435 = int_to_ptr.vmem [resolvable:$true] %s434
          %437 = dma.hbm_to_vmem [thread:$0]  %s433, 192, %s435, %s422
        $region64: #{tpu_custom_call.1} parent=55 // pred_fallthru
          _
      $region56: #{tpu_custom_call.1} parent=5 // pred_fallthru
        _
      %p438 = scmp.le.s32.totalorder 1, %s28
      %p439 = scmp.lt.s32.totalorder %s28, 3
      %p440 = pnand %p438, %p439
      %p441 = pneg %p440
      // Predicated region
      $region65: #{tpu_custom_call.1} parent=5 // pred_check
        _
      $region66: #{tpu_custom_call.1} parent=5 // pred_check_branch
        %443 = sbr.rel (%p440) target = $region68
      $region67: #{tpu_custom_call.1} parent=5 // pred_region
        %s444 = ssub.s32 %s28, 1
        %s445 = sand.u32 %s41, 1
        %s446 = scalar_lea.sflag [#allocation5], %s445
        %s447 = sand.u32 %s41, 1
        %s448 = smul.addr %s447, 32
        %s449 = scalar_lea.vmem [#allocation4], %s448
        // Predicated region
        $region69: #{tpu_custom_call.1} parent=67 // pred_check
          %p450 = pneg %p54
        $region70: #{tpu_custom_call.1} parent=67 // pred_check_branch
          %452 = sbr.rel (%p450) target = $region72
        $region71: #{tpu_custom_call.1} parent=67 // pred_region
          %454 = dma.done %s446, 512
        $region72: #{tpu_custom_call.1} parent=67 // pred_fallthru
          _
        %s455 = sand.u32 %s33, 1
        %s456 = scalar_lea.sflag [#allocation8], %s455
        %s457 = sand.u32 %s67, 1
        %s458 = smul.addr %s457, 12
        %s459 = scalar_lea.vmem [#allocation7], %s458
        // Predicated region
        $region73: #{tpu_custom_call.1} parent=67 // pred_check
          %p460 = pneg %p80
        $region74: #{tpu_custom_call.1} parent=67 // pred_check_branch
          %462 = sbr.rel (%p460) target = $region76
        $region75: #{tpu_custom_call.1} parent=67 // pred_region
          %464 = dma.done %s456, 192
        $region76: #{tpu_custom_call.1} parent=67 // pred_fallthru
          _
        // Predicated region
        $region77: #{tpu_custom_call.1} parent=67 // pred_check
          %p465 = pneg %p122
        $region78: #{tpu_custom_call.1} parent=67 // pred_check_branch
          %467 = sbr.rel (%p465) target = $region80
        $region79: #{tpu_custom_call.1} parent=67 // pred_region
          %469 = dma.done [#allocation8], 128
        $region80: #{tpu_custom_call.1} parent=67 // pred_fallthru
          _
        // Predicated region
        $region81: #{tpu_custom_call.1} parent=67 // pred_check
          %p470 = pneg %p185
        $region82: #{tpu_custom_call.1} parent=67 // pred_check_branch
          %472 = sbr.rel (%p470) target = $region84
        $region83: #{tpu_custom_call.1} parent=67 // pred_region
          %474 = dma.done [#allocation11], 576
        $region84: #{tpu_custom_call.1} parent=67 // pred_fallthru
          _
        // Predicated region
        $region85: #{tpu_custom_call.1} parent=67 // pred_check
          %p475 = pneg %p248
        $region86: #{tpu_custom_call.1} parent=67 // pred_check_branch
          %477 = sbr.rel (%p475) target = $region88
        $region87: #{tpu_custom_call.1} parent=67 // pred_region
          %479 = dma.done [#allocation11], 576
        $region88: #{tpu_custom_call.1} parent=67 // pred_fallthru
          _
        %s480 = sand.u32 %s41, 1
        %s481 = scalar_lea.sflag [#allocation5], %s480
        %s482 = sand.u32 %s41, 1
        %s483 = smul.addr %s482, 32
        %s484 = scalar_lea.vmem [#allocation4], %s483
        %p485 = pneg %p54
        %p486 = pneg %p51
        %s487 = sand.u32 %s33, 1
        %s488 = scalar_lea.sflag [#allocation8], %s487
        %s489 = sand.u32 %s67, 1
        %s490 = smul.addr %s489, 12
        %s491 = scalar_lea.vmem [#allocation7], %s490
        %p492 = pneg %p80
        %p493 = pneg %p77
        %p494 = pneg %p101
        %p495 = pneg %p98
        %p496 = pneg %p122
        %p497 = pneg %p119
        %p498 = pneg %p143
        %p499 = pneg %p140
        %p500 = pneg %p164
        %p501 = pneg %p161
        %p502 = pneg %p185
        %p503 = pneg %p182
        %p504 = pneg %p206
        %p505 = pneg %p203
        %p506 = pneg %p227
        %p507 = pneg %p224
        %p508 = pneg %p248
        %p509 = pneg %p245
        %p510 = pneg %p269
        %p511 = pneg %p266
        %p512 = pneg %p290
        %p513 = pneg %p287
        %p514 = pneg %p316
        %p515 = pneg %p313
        %s516 = sand.u32 %s303, 1
        %s517 = scalar_lea.sflag [#allocation6], %s516
        %s518 = sand.u32 %s303, 1
        %s519 = smul.addr %s518, 12
        %s520 = scalar_lea.vmem [#allocation13], %s519
        %v521 = vld [vmem:[%s449] sm:$0xff]
        %v522 = vld [vmem:[%s449 + $0x8] sm:$0xff]
        %v523 = vld [vmem:[%s449 + $0x10] sm:$0xff]
        %v524 = vld [vmem:[%s449 + $0x18] sm:$0xff]
        %v525 = vld [vmem:[#allocation9] sm:$0xff]
        %v526 = vld [vmem:[%s2] sm:$0xff]
        %v527 = vld [vmem:[%s2 + $0x8] sm:$0xff]
        %v528 = vld [vmem:[%s2 + $0x10] sm:$0x7]
        %vm529 = vcmask 64512
        %v531 = vsel %vm529, %v521, 0
        %v534 = vsel %vm529, %v522, 0
        %v537 = vsel %vm529, %v523, 0
        %v540 = vsel %vm529, %v524, 0
        %542 = vmatpush.msra.mxu0 0.0
        %543 = vmatpush.msra.mxu0 0.0
        %544 = vmatpush.msra.mxu0 0.0
        %545 = vmatpush.msra.mxu0 0.0
        %546 = vmatpush.msra.mxu0 0.0
        %547 = vmatpush.msra.mxu0 0.0
        %548 = vmatpush.msra.mxu0 0.0
        %549 = vmatpush.msra.mxu0 0.0
        %550 = vmatpush.msra.mxu0 0.0
        %551 = vmatpush.msra.mxu0 0.0
        %552 = vmatpush.msra.mxu0 0.0
        %553 = vmatpush.msra.mxu0 0.0
        %554 = vmatpush.msra.mxu0 0.0
        %555 = vmatpush.msra.mxu0 0.0
        %556 = vmatpush.msra.mxu0 0.0
        %557 = vmatpush.msra.mxu0 %v525
        %558 = vmatmul.f32.gmra.mxu0 %v531
        %v559 = vpop.f32.mrf.mxu0
        %v560 = vadd.f32 0.0, %v559
        %561 = vmatmul.f32.gmra.mxu0 %v534
        %v562 = vpop.f32.mrf.mxu0
        %v563 = vadd.f32 0.0, %v562
        %564 = vmatmul.f32.gmra.mxu0 %v537
        %v565 = vpop.f32.mrf.mxu0
        %v566 = vadd.f32 0.0, %v565
        %567 = vmatmul.f32.gmra.mxu0 %v540
        %v568 = vpop.f32.mrf.mxu0
        %v569 = vadd.f32 0.0, %v568
        %570 = vdwg.mxu0
        %v572 = vsel %vm529, %v526, 0
        %v575 = vsel %vm529, %v527, 0
        %v578 = vsel %vm529, %v528, 0
        %580 = vmatpush.msra.mxu0 0.0
        %581 = vmatpush.msra.mxu0 0.0
        %582 = vmatpush.msra.mxu0 0.0
        %583 = vmatpush.msra.mxu0 0.0
        %584 = vmatpush.msra.mxu0 0.0
        %585 = vmatpush.msra.mxu0 0.0
        %586 = vmatpush.msra.mxu0 0.0
        %587 = vmatpush.msra.mxu0 0.0
        %588 = vmatpush.msra.mxu0 0.0
        %589 = vmatpush.msra.mxu0 0.0
        %590 = vmatpush.msra.mxu0 0.0
        %591 = vmatpush.msra.mxu0 0.0
        %592 = vmatpush.msra.mxu0 0.0
        %593 = vmatpush.msra.mxu0 0.0
        %594 = vmatpush.msra.mxu0 0.0
        %595 = vmatpush.msra.mxu0 %v560
        %596 = vmatmul.f32.gmra.mxu0 %v572
        %v597 = vpop.f32.mrf.mxu0
        %v598 = vadd.f32 0.0, %v597
        %599 = vmatmul.f32.gmra.mxu0 %v575
        %v600 = vpop.f32.mrf.mxu0
        %v601 = vadd.f32 0.0, %v600
        %602 = vmatmul.f32.gmra.mxu0 %v578
        %v603 = vpop.f32.mrf.mxu0
        %v604 = vadd.f32 0.0, %v603
        %605 = vdwg.mxu0
        %606 = vmatpush.msra.mxu0 0.0
        %607 = vmatpush.msra.mxu0 0.0
        %608 = vmatpush.msra.mxu0 0.0
        %609 = vmatpush.msra.mxu0 0.0
        %610 = vmatpush.msra.mxu0 0.0
        %611 = vmatpush.msra.mxu0 0.0
        %612 = vmatpush.msra.mxu0 0.0
        %613 = vmatpush.msra.mxu0 0.0
        %614 = vmatpush.msra.mxu0 0.0
        %615 = vmatpush.msra.mxu0 0.0
        %616 = vmatpush.msra.mxu0 0.0
        %617 = vmatpush.msra.mxu0 0.0
        %618 = vmatpush.msra.mxu0 0.0
        %619 = vmatpush.msra.mxu0 0.0
        %620 = vmatpush.msra.mxu0 0.0
        %621 = vmatpush.msra.mxu0 %v563
        %622 = vmatmul.f32.gmra.mxu0 %v572
        %v623 = vpop.f32.mrf.mxu0
        %v624 = vadd.f32 0.0, %v623
        %625 = vmatmul.f32.gmra.mxu0 %v575
        %v626 = vpop.f32.mrf.mxu0
        %v627 = vadd.f32 0.0, %v626
        %628 = vmatmul.f32.gmra.mxu0 %v578
        %v629 = vpop.f32.mrf.mxu0
        %v630 = vadd.f32 0.0, %v629
        %631 = vdwg.mxu0
        %632 = vmatpush.msra.mxu0 0.0
        %633 = vmatpush.msra.mxu0 0.0
        %634 = vmatpush.msra.mxu0 0.0
        %635 = vmatpush.msra.mxu0 0.0
        %636 = vmatpush.msra.mxu0 0.0
        %637 = vmatpush.msra.mxu0 0.0
        %638 = vmatpush.msra.mxu0 0.0
        %639 = vmatpush.msra.mxu0 0.0
        %640 = vmatpush.msra.mxu0 0.0
        %641 = vmatpush.msra.mxu0 0.0
        %642 = vmatpush.msra.mxu0 0.0
        %643 = vmatpush.msra.mxu0 0.0
        %644 = vmatpush.msra.mxu0 0.0
        %645 = vmatpush.msra.mxu0 0.0
        %646 = vmatpush.msra.mxu0 0.0
        %647 = vmatpush.msra.mxu0 %v566
        %648 = vmatmul.f32.gmra.mxu0 %v572
        %v649 = vpop.f32.mrf.mxu0
        %v650 = vadd.f32 0.0, %v649
        %651 = vmatmul.f32.gmra.mxu0 %v575
        %v652 = vpop.f32.mrf.mxu0
        %v653 = vadd.f32 0.0, %v652
        %654 = vmatmul.f32.gmra.mxu0 %v578
        %v655 = vpop.f32.mrf.mxu0
        %v656 = vadd.f32 0.0, %v655
        %657 = vdwg.mxu0
        %658 = vmatpush.msra.mxu0 0.0
        %659 = vmatpush.msra.mxu0 0.0
        %660 = vmatpush.msra.mxu0 0.0
        %661 = vmatpush.msra.mxu0 0.0
        %662 = vmatpush.msra.mxu0 0.0
        %663 = vmatpush.msra.mxu0 0.0
        %664 = vmatpush.msra.mxu0 0.0
        %665 = vmatpush.msra.mxu0 0.0
        %666 = vmatpush.msra.mxu0 0.0
        %667 = vmatpush.msra.mxu0 0.0
        %668 = vmatpush.msra.mxu0 0.0
        %669 = vmatpush.msra.mxu0 0.0
        %670 = vmatpush.msra.mxu0 0.0
        %671 = vmatpush.msra.mxu0 0.0
        %672 = vmatpush.msra.mxu0 0.0
        %673 = vmatpush.msra.mxu0 %v569
        %674 = vmatmul.f32.gmra.mxu0 %v572
        %v675 = vpop.f32.mrf.mxu0
        %v676 = vadd.f32 0.0, %v675
        %677 = vmatmul.f32.gmra.mxu0 %v575
        %v678 = vpop.f32.mrf.mxu0
        %v679 = vadd.f32 0.0, %v678
        %680 = vmatmul.f32.gmra.mxu0 %v578
        %v681 = vpop.f32.mrf.mxu0
        %v682 = vadd.f32 0.0, %v681
        %683 = vdwg.mxu0
        %v688 = vrot.slane %v624, 7
        %vm689 = vcmask 1041409
        %v690 = vsel %vm689, %v688, %v598
        %v691 = vrot.slane %v650, 6
        %vm692 = vcmask 1042434
        %v693 = vsel %vm692, %v691, %v690
        %v694 = vrot.slane %v676, 5
        %vm695 = vcmask 1043459
        %v696 = vsel %vm695, %v694, %v693
        %v698 = vrot.slane %v598, 1
        %v699 = vsel %vm689, %v624, %v698
        %v700 = vrot.slane %v650, 7
        %v701 = vsel %vm692, %v700, %v699
        %v702 = vrot.slane %v676, 6
        %v703 = vsel %vm695, %v702, %v701
        %704 = vrot.lane.b32.xlu0 %v703, 18
        %v705 = vpop.permute.xlu0 %704
        %v707 = vrot.slane %v598, 2
        %v708 = vrot.slane %v624, 1
        %v709 = vsel %vm689, %v708, %v707
        %v710 = vsel %vm692, %v650, %v709
        %v711 = vrot.slane %v676, 7
        %v712 = vsel %vm695, %v711, %v710
        %713 = vrot.lane.b32.xlu0 %v712, 36
        %v714 = vpop.permute.xlu0 %713
        %v716 = vrot.slane %v598, 3
        %v717 = vrot.slane %v624, 2
        %v718 = vsel %vm689, %v717, %v716
        %v719 = vrot.slane %v650, 1
        %v720 = vsel %vm692, %v719, %v718
        %v721 = vsel %vm695, %v676, %v720
        %722 = vrot.lane.b32.xlu0 %v721, 54
        %v723 = vpop.permute.xlu0 %722
        %v725 = vrot.slane %v598, 4
        %v726 = vrot.slane %v624, 3
        %v727 = vsel %vm689, %v726, %v725
        %v728 = vrot.slane %v650, 2
        %v729 = vsel %vm692, %v728, %v727
        %v730 = vrot.slane %v676, 1
        %v731 = vsel %vm695, %v730, %v729
        %732 = vrot.lane.b32.xlu0 %v731, 72
        %v733 = vpop.permute.xlu0 %732
        %v735 = vrot.slane %v598, 5
        %v736 = vrot.slane %v624, 4
        %v737 = vsel %vm689, %v736, %v735
        %v738 = vrot.slane %v650, 3
        %v739 = vsel %vm692, %v738, %v737
        %v740 = vrot.slane %v676, 2
        %v741 = vsel %vm695, %v740, %v739
        %742 = vrot.lane.b32.xlu0 %v741, 90
        %v743 = vpop.permute.xlu0 %742
        %v745 = vrot.slane %v598, 6
        %v746 = vrot.slane %v624, 5
        %v747 = vsel %vm689, %v746, %v745
        %v748 = vrot.slane %v650, 4
        %v749 = vsel %vm692, %v748, %v747
        %v750 = vrot.slane %v676, 3
        %v751 = vsel %vm695, %v750, %v749
        %752 = vrot.lane.b32.xlu0 %v751, 108
        %v753 = vpop.permute.xlu0 %752
        %v755 = vrot.slane %v598, 7
        %v756 = vrot.slane %v624, 6
        %v757 = vsel %vm689, %v756, %v755
        %v758 = vrot.slane %v650, 5
        %v759 = vsel %vm692, %v758, %v757
        %v760 = vrot.slane %v676, 4
        %v761 = vsel %vm695, %v760, %v759
        %762 = vrot.lane.b32.xlu0 %v761, 126
        %v763 = vpop.permute.xlu0 %762
        %v769 = vrot.slane %v627, 7
        %v770 = vsel %vm689, %v769, %v601
        %v771 = vrot.slane %v653, 6
        %v772 = vsel %vm692, %v771, %v770
        %v773 = vrot.slane %v679, 5
        %v774 = vsel %vm695, %v773, %v772
        %775 = vrot.lane.b32.xlu0 %v774, 16
        %v776 = vpop.permute.xlu0 %775
        %v778 = vrot.slane %v601, 1
        %v779 = vsel %vm689, %v627, %v778
        %v780 = vrot.slane %v653, 7
        %v781 = vsel %vm692, %v780, %v779
        %v782 = vrot.slane %v679, 6
        %v783 = vsel %vm695, %v782, %v781
        %784 = vrot.lane.b32.xlu0 %v783, 34
        %v785 = vpop.permute.xlu0 %784
        %v787 = vrot.slane %v601, 2
        %v788 = vrot.slane %v627, 1
        %v789 = vsel %vm689, %v788, %v787
        %v790 = vsel %vm692, %v653, %v789
        %v791 = vrot.slane %v679, 7
        %v792 = vsel %vm695, %v791, %v790
        %793 = vrot.lane.b32.xlu0 %v792, 52
        %v794 = vpop.permute.xlu0 %793
        %v796 = vrot.slane %v601, 3
        %v797 = vrot.slane %v627, 2
        %v798 = vsel %vm689, %v797, %v796
        %v799 = vrot.slane %v653, 1
        %v800 = vsel %vm692, %v799, %v798
        %v801 = vsel %vm695, %v679, %v800
        %802 = vrot.lane.b32.xlu0 %v801, 70
        %v803 = vpop.permute.xlu0 %802
        %v805 = vrot.slane %v601, 4
        %v806 = vrot.slane %v627, 3
        %v807 = vsel %vm689, %v806, %v805
        %v808 = vrot.slane %v653, 2
        %v809 = vsel %vm692, %v808, %v807
        %v810 = vrot.slane %v679, 1
        %v811 = vsel %vm695, %v810, %v809
        %812 = vrot.lane.b32.xlu0 %v811, 88
        %v813 = vpop.permute.xlu0 %812
        %v815 = vrot.slane %v601, 5
        %v816 = vrot.slane %v627, 4
        %v817 = vsel %vm689, %v816, %v815
        %v818 = vrot.slane %v653, 3
        %v819 = vsel %vm692, %v818, %v817
        %v820 = vrot.slane %v679, 2
        %v821 = vsel %vm695, %v820, %v819
        %822 = vrot.lane.b32.xlu0 %v821, 106
        %v823 = vpop.permute.xlu0 %822
        %v825 = vrot.slane %v601, 6
        %v826 = vrot.slane %v627, 5
        %v827 = vsel %vm689, %v826, %v825
        %v828 = vrot.slane %v653, 4
        %v829 = vsel %vm692, %v828, %v827
        %v830 = vrot.slane %v679, 3
        %v831 = vsel %vm695, %v830, %v829
        %832 = vrot.lane.b32.xlu0 %v831, 124
        %v833 = vpop.permute.xlu0 %832
        %v835 = vrot.slane %v601, 7
        %v836 = vrot.slane %v627, 6
        %v837 = vsel %vm689, %v836, %v835
        %v838 = vrot.slane %v653, 5
        %v839 = vsel %vm692, %v838, %v837
        %v840 = vrot.slane %v679, 4
        %v841 = vsel %vm695, %v840, %v839
        %842 = vrot.lane.b32.xlu0 %v841, 14
        %v843 = vpop.permute.xlu0 %842
        %vm845 = vcmask 146432
        %v846 = vsel %vm845, %v696, %v705
        %vm847 = vcmask 293888
        %v848 = vsel %vm847, %v846, %v714
        %vm849 = vcmask 441344
        %v850 = vsel %vm849, %v848, %v723
        %vm851 = vcmask 588800
        %v852 = vsel %vm851, %v850, %v733
        %vm853 = vcmask 736256
        %v854 = vsel %vm853, %v852, %v743
        %vm855 = vcmask 883712
        %v856 = vsel %vm855, %v854, %v753
        %vm857 = vcmask 1031168
        %v858 = vsel %vm857, %v856, %v763
        %vm859 = vcmask 130048
        %v860 = vsel %vm859, %v763, %v776
        %vm861 = vcmask 277504
        %v862 = vsel %vm861, %v860, %v785
        %vm863 = vcmask 424960
        %v864 = vsel %vm863, %v862, %v794
        %vm865 = vcmask 572416
        %v866 = vsel %vm865, %v864, %v803
        %vm867 = vcmask 719872
        %v868 = vsel %vm867, %v866, %v813
        %vm869 = vcmask 867328
        %v870 = vsel %vm869, %v868, %v823
        %vm871 = vcmask 1014784
        %v872 = vsel %vm871, %v870, %v833
        %vm873 = vcmask 113664
        %v874 = vsel %vm873, %v833, %v843
        %v879 = vrot.slane %v630, 7
        %v880 = vsel %vm689, %v879, %v604
        %v881 = vrot.slane %v656, 6
        %v882 = vsel %vm692, %v881, %v880
        %v883 = vrot.slane %v682, 5
        %v884 = vsel %vm695, %v883, %v882
        %v886 = vrot.slane %v604, 1
        %v887 = vsel %vm689, %v630, %v886
        %v888 = vrot.slane %v656, 7
        %v889 = vsel %vm692, %v888, %v887
        %v890 = vrot.slane %v682, 6
        %v891 = vsel %vm695, %v890, %v889
        %892 = vrot.lane.b32.xlu0 %v891, 18
        %v893 = vpop.permute.xlu0 %892
        %v895 = vrot.slane %v604, 2
        %v896 = vrot.slane %v630, 1
        %v897 = vsel %vm689, %v896, %v895
        %v898 = vsel %vm692, %v656, %v897
        %v899 = vrot.slane %v682, 7
        %v900 = vsel %vm695, %v899, %v898
        %901 = vrot.lane.b32.xlu0 %v900, 36
        %v902 = vpop.permute.xlu0 %901
        %v904 = vsel %vm845, %v884, %v893
        %v905 = vsel %vm847, %v904, %v902
        %907 = vrot.lane.b32.xlu0 %v905, 32
        %v908 = vpop.permute.xlu0 %907
        %vm910 = vcmask 261120
        %v911 = vsel %vm910, %v874, %v908
        %v914 = vrot.slane %v872, 4
        %vm915 = vcmask 1043456
        %v916 = vsel %vm915, %v858, %v914
        %918 = vst [vmem:[#allocation2] sm:$0xff] %v916
        %vm919 = vcmask 699392
        %920 = vst.msk [vmem:[#allocation2 + $0x8] sm:$0xf] %vm919, %v911
        %vm921 = vcmask 150528
        %922 = vst.msk [vmem:[#allocation3] sm:$0xf] %vm921, 0.0
        %vm923 = vcmask 699800
        %924 = vst.msk [vmem:[#allocation3 + $0x8] sm:$0xf] %vm923, 0.0
        %v925 = vld [vmem:[%s459] sm:$0xff]
        %v926 = vld [vmem:[%s459 + $0x8] sm:$0xf]
        %v927 = vld [vmem:[#allocation2] sm:$0xff]
        %v928 = vld [vmem:[#allocation2 + $0x8] sm:$0xf]
        %v929 = vld [vmem:[%s5] sm:$0xf]
        %v930 = vld [vmem:[#allocation10] sm:$0xf]
        %933 = vst [vmem:[#allocation1] ss:$2 sm:$0xff] %v927
        %s934 = scalar_lea.vmem [#allocation1], 16
        %935 = vst [vmem:[%s934] ss:$2 sm:$0xff] %v928
        %v936 = vld.sshfl [vmem:[#allocation1] sm:$0xff pattern:$0x75316420]
        %v937 = vld.sshfl [vmem:[#allocation1 + $0x8] sm:$0xff pattern:$0x75316420]
        %v938 = vld.sshfl [vmem:[#allocation1 + $0x10] sm:$0xff pattern:$0x75316420]
        %vm939 = vcmask 31744
        %v941 = vsel %vm939, %v930, 0
        %v943 = vsel %vm915, %v936, 0
        %v945 = vsel %vm915, %v937, 0
        %v947 = vsel %vm915, %v938, 0
        %949 = vmatpush.msra.mxu0 0.0
        %950 = vmatpush.msra.mxu0 0.0
        %951 = vmatpush.msra.mxu0 0.0
        %952 = vmatpush.msra.mxu0 0.0
        %953 = vmatpush.msra.mxu0 0.0
        %954 = vmatpush.msra.mxu0 0.0
        %955 = vmatpush.msra.mxu0 0.0
        %956 = vmatpush.msra.mxu0 0.0
        %957 = vmatpush.msra.mxu0 0.0
        %958 = vmatpush.msra.mxu0 0.0
        %959 = vmatpush.msra.mxu0 0.0
        %960 = vmatpush.msra.mxu0 0.0
        %961 = vmatpush.msra.mxu0 0.0
        %962 = vmatpush.msra.mxu0 0.0
        %963 = vmatpush.msra.mxu0 0.0
        %964 = vmatpush.msra.mxu0 %v943
        %965 = vmatmul.f32.gmra.mxu0 %v941
        %v966 = vpop.f32.mrf.mxu0
        %v967 = vadd.f32 0.0, %v966
        %968 = vdwg.mxu0
        %969 = vmatpush.msra.mxu0 0.0
        %970 = vmatpush.msra.mxu0 0.0
        %971 = vmatpush.msra.mxu0 0.0
        %972 = vmatpush.msra.mxu0 0.0
        %973 = vmatpush.msra.mxu0 0.0
        %974 = vmatpush.msra.mxu0 0.0
        %975 = vmatpush.msra.mxu0 0.0
        %976 = vmatpush.msra.mxu0 0.0
        %977 = vmatpush.msra.mxu0 0.0
        %978 = vmatpush.msra.mxu0 0.0
        %979 = vmatpush.msra.mxu0 0.0
        %980 = vmatpush.msra.mxu0 0.0
        %981 = vmatpush.msra.mxu0 0.0
        %982 = vmatpush.msra.mxu0 0.0
        %983 = vmatpush.msra.mxu0 0.0
        %984 = vmatpush.msra.mxu0 %v945
        %985 = vmatmul.f32.gmra.mxu0 %v941
        %v986 = vpop.f32.mrf.mxu0
        %v987 = vadd.f32 0.0, %v986
        %988 = vdwg.mxu0
        %989 = vmatpush.msra.mxu0 0.0
        %990 = vmatpush.msra.mxu0 0.0
        %991 = vmatpush.msra.mxu0 0.0
        %992 = vmatpush.msra.mxu0 0.0
        %993 = vmatpush.msra.mxu0 0.0
        %994 = vmatpush.msra.mxu0 0.0
        %995 = vmatpush.msra.mxu0 0.0
        %996 = vmatpush.msra.mxu0 0.0
        %997 = vmatpush.msra.mxu0 0.0
        %998 = vmatpush.msra.mxu0 0.0
        %999 = vmatpush.msra.mxu0 0.0
        %1000 = vmatpush.msra.mxu0 0.0
        %1001 = vmatpush.msra.mxu0 0.0
        %1002 = vmatpush.msra.mxu0 0.0
        %1003 = vmatpush.msra.mxu0 0.0
        %1004 = vmatpush.msra.mxu0 %v947
        %1005 = vmatmul.f32.gmra.mxu0 %v941
        %v1006 = vpop.f32.mrf.mxu0
        %v1007 = vadd.f32 0.0, %v1006
        %1008 = vdwg.mxu0
        %1011 = vst [vmem:[#allocation1] ss:$2 sm:$0xff] %v925
        %s1012 = scalar_lea.vmem [#allocation1], 16
        %1013 = vst [vmem:[%s1012] ss:$2 sm:$0xff] %v926
        %v1014 = vld.sshfl [vmem:[#allocation1] sm:$0xff pattern:$0x75316420]
        %v1015 = vld.sshfl [vmem:[#allocation1 + $0x8] sm:$0xff pattern:$0x75316420]
        %v1016 = vld.sshfl [vmem:[#allocation1 + $0x10] sm:$0xff pattern:$0x75316420]
        %v1018 = vsel %vm939, %v929, 0
        %v1020 = vsel %vm915, %v1014, 0
        %v1022 = vsel %vm915, %v1015, 0
        %v1024 = vsel %vm915, %v1016, 0
        %1026 = vmatpush.msra.mxu0 0.0
        %1027 = vmatpush.msra.mxu0 0.0
        %1028 = vmatpush.msra.mxu0 0.0
        %1029 = vmatpush.msra.mxu0 0.0
        %1030 = vmatpush.msra.mxu0 0.0
        %1031 = vmatpush.msra.mxu0 0.0
        %1032 = vmatpush.msra.mxu0 0.0
        %1033 = vmatpush.msra.mxu0 0.0
        %1034 = vmatpush.msra.mxu0 0.0
        %1035 = vmatpush.msra.mxu0 0.0
        %1036 = vmatpush.msra.mxu0 0.0
        %1037 = vmatpush.msra.mxu0 0.0
        %1038 = vmatpush.msra.mxu0 0.0
        %1039 = vmatpush.msra.mxu0 0.0
        %1040 = vmatpush.msra.mxu0 0.0
        %1041 = vmatpush.msra.mxu0 %v1020
        %1042 = vmatmul.f32.gmra.mxu0 %v1018
        %v1043 = vpop.f32.mrf.mxu0
        %v1044 = vadd.f32 %v967, %v1043
        %1045 = vdwg.mxu0
        %1046 = vmatpush.msra.mxu0 0.0
        %1047 = vmatpush.msra.mxu0 0.0
        %1048 = vmatpush.msra.mxu0 0.0
        %1049 = vmatpush.msra.mxu0 0.0
        %1050 = vmatpush.msra.mxu0 0.0
        %1051 = vmatpush.msra.mxu0 0.0
        %1052 = vmatpush.msra.mxu0 0.0
        %1053 = vmatpush.msra.mxu0 0.0
        %1054 = vmatpush.msra.mxu0 0.0
        %1055 = vmatpush.msra.mxu0 0.0
        %1056 = vmatpush.msra.mxu0 0.0
        %1057 = vmatpush.msra.mxu0 0.0
        %1058 = vmatpush.msra.mxu0 0.0
        %1059 = vmatpush.msra.mxu0 0.0
        %1060 = vmatpush.msra.mxu0 0.0
        %1061 = vmatpush.msra.mxu0 %v1022
        %1062 = vmatmul.f32.gmra.mxu0 %v1018
        %v1063 = vpop.f32.mrf.mxu0
        %v1064 = vadd.f32 %v987, %v1063
        %1065 = vdwg.mxu0
        %1066 = vmatpush.msra.mxu0 0.0
        %1067 = vmatpush.msra.mxu0 0.0
        %1068 = vmatpush.msra.mxu0 0.0
        %1069 = vmatpush.msra.mxu0 0.0
        %1070 = vmatpush.msra.mxu0 0.0
        %1071 = vmatpush.msra.mxu0 0.0
        %1072 = vmatpush.msra.mxu0 0.0
        %1073 = vmatpush.msra.mxu0 0.0
        %1074 = vmatpush.msra.mxu0 0.0
        %1075 = vmatpush.msra.mxu0 0.0
        %1076 = vmatpush.msra.mxu0 0.0
        %1077 = vmatpush.msra.mxu0 0.0
        %1078 = vmatpush.msra.mxu0 0.0
        %1079 = vmatpush.msra.mxu0 0.0
        %1080 = vmatpush.msra.mxu0 0.0
        %1081 = vmatpush.msra.mxu0 %v1024
        %1082 = vmatmul.f32.gmra.mxu0 %v1018
        %v1083 = vpop.f32.mrf.mxu0
        %v1084 = vadd.f32 %v1007, %v1083
        %1085 = vdwg.mxu0
        %v1086 = vld [vmem:[%s459] sm:$0xff]
        %v1087 = vld [vmem:[%s459 + $0x8] sm:$0xf]
        %v1088 = vld [vmem:[#allocation2] sm:$0xff]
        %v1089 = vld [vmem:[#allocation2 + $0x8] sm:$0xf]
        %s1090 = scalar_lea.vmem %s5, 4
        %v1091 = vld [vmem:[%s1090] sm:$0xf]
        %1094 = vst [vmem:[#allocation1] ss:$2 sm:$0xff] %v1086
        %s1095 = scalar_lea.vmem [#allocation1], 16
        %1096 = vst [vmem:[%s1095] ss:$2 sm:$0xff] %v1087
        %v1097 = vld.sshfl [vmem:[#allocation1] sm:$0xff pattern:$0x75316420]
        %v1098 = vld.sshfl [vmem:[#allocation1 + $0x8] sm:$0xff pattern:$0x75316420]
        %v1099 = vld.sshfl [vmem:[#allocation1 + $0x10] sm:$0xff pattern:$0x75316420]
        %1100 = vrot.lane.b32.xlu0 %v1097, 127
        %v1101 = vpop.permute.xlu0 %1100
        %1102 = vrot.lane.b32.xlu0 %v1098, 127
        %v1103 = vpop.permute.xlu0 %1102
        %1104 = vrot.lane.b32.xlu0 %v1099, 127
        %v1105 = vpop.permute.xlu0 %1104
        %vm1106 = vcmask 1039360
        %v1107 = vsel %vm1106, %v1101, %v1103
        %v1108 = vsel %vm1106, %v1103, %v1105
        %v1110 = vsel %vm939, %v1091, 0
        %v1112 = vsel %vm915, %v1107, 0
        %v1114 = vsel %vm915, %v1108, 0
        %v1116 = vsel %vm915, %v1105, 0
        %1118 = vmatpush.msra.mxu0 0.0
        %1119 = vmatpush.msra.mxu0 0.0
        %1120 = vmatpush.msra.mxu0 0.0
        %1121 = vmatpush.msra.mxu0 0.0
        %1122 = vmatpush.msra.mxu0 0.0
        %1123 = vmatpush.msra.mxu0 0.0
        %1124 = vmatpush.msra.mxu0 0.0
        %1125 = vmatpush.msra.mxu0 0.0
        %1126 = vmatpush.msra.mxu0 0.0
        %1127 = vmatpush.msra.mxu0 0.0
        %1128 = vmatpush.msra.mxu0 0.0
        %1129 = vmatpush.msra.mxu0 0.0
        %1130 = vmatpush.msra.mxu0 0.0
        %1131 = vmatpush.msra.mxu0 0.0
        %1132 = vmatpush.msra.mxu0 0.0
        %1133 = vmatpush.msra.mxu0 %v1112
        %1134 = vmatmul.f32.gmra.mxu0 %v1110
        %v1135 = vpop.f32.mrf.mxu0
        %v1136 = vadd.f32 0.0, %v1135
        %1137 = vdwg.mxu0
        %1138 = vmatpush.msra.mxu0 0.0
        %1139 = vmatpush.msra.mxu0 0.0
        %1140 = vmatpush.msra.mxu0 0.0
        %1141 = vmatpush.msra.mxu0 0.0
        %1142 = vmatpush.msra.mxu0 0.0
        %1143 = vmatpush.msra.mxu0 0.0
        %1144 = vmatpush.msra.mxu0 0.0
        %1145 = vmatpush.msra.mxu0 0.0
        %1146 = vmatpush.msra.mxu0 0.0
        %1147 = vmatpush.msra.mxu0 0.0
        %1148 = vmatpush.msra.mxu0 0.0
        %1149 = vmatpush.msra.mxu0 0.0
        %1150 = vmatpush.msra.mxu0 0.0
        %1151 = vmatpush.msra.mxu0 0.0
        %1152 = vmatpush.msra.mxu0 0.0
        %1153 = vmatpush.msra.mxu0 %v1114
        %1154 = vmatmul.f32.gmra.mxu0 %v1110
        %v1155 = vpop.f32.mrf.mxu0
        %v1156 = vadd.f32 0.0, %v1155
        %1157 = vdwg.mxu0
        %1158 = vmatpush.msra.mxu0 0.0
        %1159 = vmatpush.msra.mxu0 0.0
        %1160 = vmatpush.msra.mxu0 0.0
        %1161 = vmatpush.msra.mxu0 0.0
        %1162 = vmatpush.msra.mxu0 0.0
        %1163 = vmatpush.msra.mxu0 0.0
        %1164 = vmatpush.msra.mxu0 0.0
        %1165 = vmatpush.msra.mxu0 0.0
        %1166 = vmatpush.msra.mxu0 0.0
        %1167 = vmatpush.msra.mxu0 0.0
        %1168 = vmatpush.msra.mxu0 0.0
        %1169 = vmatpush.msra.mxu0 0.0
        %1170 = vmatpush.msra.mxu0 0.0
        %1171 = vmatpush.msra.mxu0 0.0
        %1172 = vmatpush.msra.mxu0 0.0
        %1173 = vmatpush.msra.mxu0 %v1116
        %1174 = vmatmul.f32.gmra.mxu0 %v1110
        %v1175 = vpop.f32.mrf.mxu0
        %v1176 = vadd.f32 0.0, %v1175
        %1177 = vdwg.mxu0
        %v1178 = vadd.f32 %v1044, %v1136
        %v1179 = vadd.f32 %v1064, %v1156
        %v1180 = vadd.f32 %v1084, %v1176
        %s1181 = scalar_lea.vmem [#allocation10], 4
        %v1182 = vld [vmem:[%s1181] sm:$0xf]
        %1185 = vst [vmem:[#allocation1] ss:$2 sm:$0xff] %v1088
        %s1186 = scalar_lea.vmem [#allocation1], 16
        %1187 = vst [vmem:[%s1186] ss:$2 sm:$0xff] %v1089
        %v1188 = vld.sshfl [vmem:[#allocation1] sm:$0xff pattern:$0x75316420]
        %v1189 = vld.sshfl [vmem:[#allocation1 + $0x8] sm:$0xff pattern:$0x75316420]
        %v1190 = vld.sshfl [vmem:[#allocation1 + $0x10] sm:$0xff pattern:$0x75316420]
        %1191 = vrot.lane.b32.xlu0 %v1188, 127
        %v1192 = vpop.permute.xlu0 %1191
        %1193 = vrot.lane.b32.xlu0 %v1189, 127
        %v1194 = vpop.permute.xlu0 %1193
        %1195 = vrot.lane.b32.xlu0 %v1190, 127
        %v1196 = vpop.permute.xlu0 %1195
        %v1197 = vsel %vm1106, %v1192, %v1194
        %v1198 = vsel %vm1106, %v1194, %v1196
        %v1200 = vsel %vm939, %v1182, 0
        %v1202 = vsel %vm915, %v1197, 0
        %v1204 = vsel %vm915, %v1198, 0
        %v1206 = vsel %vm915, %v1196, 0
        %1208 = vmatpush.msra.mxu0 0.0
        %1209 = vmatpush.msra.mxu0 0.0
        %1210 = vmatpush.msra.mxu0 0.0
        %1211 = vmatpush.msra.mxu0 0.0
        %1212 = vmatpush.msra.mxu0 0.0
        %1213 = vmatpush.msra.mxu0 0.0
        %1214 = vmatpush.msra.mxu0 0.0
        %1215 = vmatpush.msra.mxu0 0.0
        %1216 = vmatpush.msra.mxu0 0.0
        %1217 = vmatpush.msra.mxu0 0.0
        %1218 = vmatpush.msra.mxu0 0.0
        %1219 = vmatpush.msra.mxu0 0.0
        %1220 = vmatpush.msra.mxu0 0.0
        %1221 = vmatpush.msra.mxu0 0.0
        %1222 = vmatpush.msra.mxu0 0.0
        %1223 = vmatpush.msra.mxu0 %v1202
        %1224 = vmatmul.f32.gmra.mxu0 %v1200
        %v1225 = vpop.f32.mrf.mxu0
        %v1226 = vadd.f32 0.0, %v1225
        %1227 = vdwg.mxu0
        %1228 = vmatpush.msra.mxu0 0.0
        %1229 = vmatpush.msra.mxu0 0.0
        %1230 = vmatpush.msra.mxu0 0.0
        %1231 = vmatpush.msra.mxu0 0.0
        %1232 = vmatpush.msra.mxu0 0.0
        %1233 = vmatpush.msra.mxu0 0.0
        %1234 = vmatpush.msra.mxu0 0.0
        %1235 = vmatpush.msra.mxu0 0.0
        %1236 = vmatpush.msra.mxu0 0.0
        %1237 = vmatpush.msra.mxu0 0.0
        %1238 = vmatpush.msra.mxu0 0.0
        %1239 = vmatpush.msra.mxu0 0.0
        %1240 = vmatpush.msra.mxu0 0.0
        %1241 = vmatpush.msra.mxu0 0.0
        %1242 = vmatpush.msra.mxu0 0.0
        %1243 = vmatpush.msra.mxu0 %v1204
        %1244 = vmatmul.f32.gmra.mxu0 %v1200
        %v1245 = vpop.f32.mrf.mxu0
        %v1246 = vadd.f32 0.0, %v1245
        %1247 = vdwg.mxu0
        %1248 = vmatpush.msra.mxu0 0.0
        %1249 = vmatpush.msra.mxu0 0.0
        %1250 = vmatpush.msra.mxu0 0.0
        %1251 = vmatpush.msra.mxu0 0.0
        %1252 = vmatpush.msra.mxu0 0.0
        %1253 = vmatpush.msra.mxu0 0.0
        %1254 = vmatpush.msra.mxu0 0.0
        %1255 = vmatpush.msra.mxu0 0.0
        %1256 = vmatpush.msra.mxu0 0.0
        %1257 = vmatpush.msra.mxu0 0.0
        %1258 = vmatpush.msra.mxu0 0.0
        %1259 = vmatpush.msra.mxu0 0.0
        %1260 = vmatpush.msra.mxu0 0.0
        %1261 = vmatpush.msra.mxu0 0.0
        %1262 = vmatpush.msra.mxu0 0.0
        %1263 = vmatpush.msra.mxu0 %v1206
        %1264 = vmatmul.f32.gmra.mxu0 %v1200
        %v1265 = vpop.f32.mrf.mxu0
        %v1266 = vadd.f32 0.0, %v1265
        %1267 = vdwg.mxu0
        %v1268 = vadd.f32 %v1178, %v1226
        %v1269 = vadd.f32 %v1179, %v1246
        %v1270 = vadd.f32 %v1180, %v1266
        %v1271 = vld [vmem:[%s459] sm:$0xff]
        %v1272 = vld [vmem:[%s459 + $0x8] sm:$0xf]
        %v1273 = vld [vmem:[#allocation2] sm:$0xff]
        %v1274 = vld [vmem:[#allocation2 + $0x8] sm:$0xf]
        %s1275 = scalar_lea.vmem %s5, 8
        %v1276 = vld [vmem:[%s1275] sm:$0xf]
        %1279 = vst [vmem:[#allocation1] ss:$2 sm:$0xff] %v1271
        %s1280 = scalar_lea.vmem [#allocation1], 16
        %1281 = vst [vmem:[%s1280] ss:$2 sm:$0xff] %v1272
        %v1282 = vld.sshfl [vmem:[#allocation1] sm:$0xff pattern:$0x75316420]
        %v1283 = vld.sshfl [vmem:[#allocation1 + $0x8] sm:$0xff pattern:$0x75316420]
        %v1284 = vld.sshfl [vmem:[#allocation1 + $0x10] sm:$0xff pattern:$0x75316420]
        %1285 = vrot.lane.b32.xlu0 %v1282, 126
        %v1286 = vpop.permute.xlu0 %1285
        %1287 = vrot.lane.b32.xlu0 %v1283, 126
        %v1288 = vpop.permute.xlu0 %1287
        %1289 = vrot.lane.b32.xlu0 %v1284, 126
        %v1290 = vpop.permute.xlu0 %1289
        %v1291 = vsel %vm857, %v1286, %v1288
        %v1292 = vsel %vm857, %v1288, %v1290
        %v1294 = vsel %vm939, %v1276, 0
        %v1296 = vsel %vm915, %v1291, 0
        %v1298 = vsel %vm915, %v1292, 0
        %v1300 = vsel %vm915, %v1290, 0
        %1302 = vmatpush.msra.mxu0 0.0
        %1303 = vmatpush.msra.mxu0 0.0
        %1304 = vmatpush.msra.mxu0 0.0
        %1305 = vmatpush.msra.mxu0 0.0
        %1306 = vmatpush.msra.mxu0 0.0
        %1307 = vmatpush.msra.mxu0 0.0
        %1308 = vmatpush.msra.mxu0 0.0
        %1309 = vmatpush.msra.mxu0 0.0
        %1310 = vmatpush.msra.mxu0 0.0
        %1311 = vmatpush.msra.mxu0 0.0
        %1312 = vmatpush.msra.mxu0 0.0
        %1313 = vmatpush.msra.mxu0 0.0
        %1314 = vmatpush.msra.mxu0 0.0
        %1315 = vmatpush.msra.mxu0 0.0
        %1316 = vmatpush.msra.mxu0 0.0
        %1317 = vmatpush.msra.mxu0 %v1296
        %1318 = vmatmul.f32.gmra.mxu0 %v1294
        %v1319 = vpop.f32.mrf.mxu0
        %v1320 = vadd.f32 0.0, %v1319
        %1321 = vdwg.mxu0
        %1322 = vmatpush.msra.mxu0 0.0
        %1323 = vmatpush.msra.mxu0 0.0
        %1324 = vmatpush.msra.mxu0 0.0
        %1325 = vmatpush.msra.mxu0 0.0
        %1326 = vmatpush.msra.mxu0 0.0
        %1327 = vmatpush.msra.mxu0 0.0
        %1328 = vmatpush.msra.mxu0 0.0
        %1329 = vmatpush.msra.mxu0 0.0
        %1330 = vmatpush.msra.mxu0 0.0
        %1331 = vmatpush.msra.mxu0 0.0
        %1332 = vmatpush.msra.mxu0 0.0
        %1333 = vmatpush.msra.mxu0 0.0
        %1334 = vmatpush.msra.mxu0 0.0
        %1335 = vmatpush.msra.mxu0 0.0
        %1336 = vmatpush.msra.mxu0 0.0
        %1337 = vmatpush.msra.mxu0 %v1298
        %1338 = vmatmul.f32.gmra.mxu0 %v1294
        %v1339 = vpop.f32.mrf.mxu0
        %v1340 = vadd.f32 0.0, %v1339
        %1341 = vdwg.mxu0
        %1342 = vmatpush.msra.mxu0 0.0
        %1343 = vmatpush.msra.mxu0 0.0
        %1344 = vmatpush.msra.mxu0 0.0
        %1345 = vmatpush.msra.mxu0 0.0
        %1346 = vmatpush.msra.mxu0 0.0
        %1347 = vmatpush.msra.mxu0 0.0
        %1348 = vmatpush.msra.mxu0 0.0
        %1349 = vmatpush.msra.mxu0 0.0
        %1350 = vmatpush.msra.mxu0 0.0
        %1351 = vmatpush.msra.mxu0 0.0
        %1352 = vmatpush.msra.mxu0 0.0
        %1353 = vmatpush.msra.mxu0 0.0
        %1354 = vmatpush.msra.mxu0 0.0
        %1355 = vmatpush.msra.mxu0 0.0
        %1356 = vmatpush.msra.mxu0 0.0
        %1357 = vmatpush.msra.mxu0 %v1300
        %1358 = vmatmul.f32.gmra.mxu0 %v1294
        %v1359 = vpop.f32.mrf.mxu0
        %v1360 = vadd.f32 0.0, %v1359
        %1361 = vdwg.mxu0
        %v1362 = vadd.f32 %v1268, %v1320
        %v1363 = vadd.f32 %v1269, %v1340
        %v1364 = vadd.f32 %v1270, %v1360
        %s1365 = scalar_lea.vmem [#allocation10], 8
        %v1366 = vld [vmem:[%s1365] sm:$0xf]
        %1369 = vst [vmem:[#allocation1] ss:$2 sm:$0xff] %v1273
        %s1370 = scalar_lea.vmem [#allocation1], 16
        %1371 = vst [vmem:[%s1370] ss:$2 sm:$0xff] %v1274
        %v1372 = vld.sshfl [vmem:[#allocation1] sm:$0xff pattern:$0x75316420]
        %v1373 = vld.sshfl [vmem:[#allocation1 + $0x8] sm:$0xff pattern:$0x75316420]
        %v1374 = vld.sshfl [vmem:[#allocation1 + $0x10] sm:$0xff pattern:$0x75316420]
        %1375 = vrot.lane.b32.xlu0 %v1372, 126
        %v1376 = vpop.permute.xlu0 %1375
        %1377 = vrot.lane.b32.xlu0 %v1373, 126
        %v1378 = vpop.permute.xlu0 %1377
        %1379 = vrot.lane.b32.xlu0 %v1374, 126
        %v1380 = vpop.permute.xlu0 %1379
        %v1381 = vsel %vm857, %v1376, %v1378
        %v1382 = vsel %vm857, %v1378, %v1380
        %v1384 = vsel %vm939, %v1366, 0
        %v1386 = vsel %vm915, %v1381, 0
        %v1388 = vsel %vm915, %v1382, 0
        %v1390 = vsel %vm915, %v1380, 0
        %1392 = vmatpush.msra.mxu0 0.0
        %1393 = vmatpush.msra.mxu0 0.0
        %1394 = vmatpush.msra.mxu0 0.0
        %1395 = vmatpush.msra.mxu0 0.0
        %1396 = vmatpush.msra.mxu0 0.0
        %1397 = vmatpush.msra.mxu0 0.0
        %1398 = vmatpush.msra.mxu0 0.0
        %1399 = vmatpush.msra.mxu0 0.0
        %1400 = vmatpush.msra.mxu0 0.0
        %1401 = vmatpush.msra.mxu0 0.0
        %1402 = vmatpush.msra.mxu0 0.0
        %1403 = vmatpush.msra.mxu0 0.0
        %1404 = vmatpush.msra.mxu0 0.0
        %1405 = vmatpush.msra.mxu0 0.0
        %1406 = vmatpush.msra.mxu0 0.0
        %1407 = vmatpush.msra.mxu0 %v1386
        %1408 = vmatmul.f32.gmra.mxu0 %v1384
        %v1409 = vpop.f32.mrf.mxu0
        %v1410 = vadd.f32 0.0, %v1409
        %1411 = vdwg.mxu0
        %1412 = vmatpush.msra.mxu0 0.0
        %1413 = vmatpush.msra.mxu0 0.0
        %1414 = vmatpush.msra.mxu0 0.0
        %1415 = vmatpush.msra.mxu0 0.0
        %1416 = vmatpush.msra.mxu0 0.0
        %1417 = vmatpush.msra.mxu0 0.0
        %1418 = vmatpush.msra.mxu0 0.0
        %1419 = vmatpush.msra.mxu0 0.0
        %1420 = vmatpush.msra.mxu0 0.0
        %1421 = vmatpush.msra.mxu0 0.0
        %1422 = vmatpush.msra.mxu0 0.0
        %1423 = vmatpush.msra.mxu0 0.0
        %1424 = vmatpush.msra.mxu0 0.0
        %1425 = vmatpush.msra.mxu0 0.0
        %1426 = vmatpush.msra.mxu0 0.0
        %1427 = vmatpush.msra.mxu0 %v1388
        %1428 = vmatmul.f32.gmra.mxu0 %v1384
        %v1429 = vpop.f32.mrf.mxu0
        %v1430 = vadd.f32 0.0, %v1429
        %1431 = vdwg.mxu0
        %1432 = vmatpush.msra.mxu0 0.0
        %1433 = vmatpush.msra.mxu0 0.0
        %1434 = vmatpush.msra.mxu0 0.0
        %1435 = vmatpush.msra.mxu0 0.0
        %1436 = vmatpush.msra.mxu0 0.0
        %1437 = vmatpush.msra.mxu0 0.0
        %1438 = vmatpush.msra.mxu0 0.0
        %1439 = vmatpush.msra.mxu0 0.0
        %1440 = vmatpush.msra.mxu0 0.0
        %1441 = vmatpush.msra.mxu0 0.0
        %1442 = vmatpush.msra.mxu0 0.0
        %1443 = vmatpush.msra.mxu0 0.0
        %1444 = vmatpush.msra.mxu0 0.0
        %1445 = vmatpush.msra.mxu0 0.0
        %1446 = vmatpush.msra.mxu0 0.0
        %1447 = vmatpush.msra.mxu0 %v1390
        %1448 = vmatmul.f32.gmra.mxu0 %v1384
        %v1449 = vpop.f32.mrf.mxu0
        %v1450 = vadd.f32 0.0, %v1449
        %1451 = vdwg.mxu0
        %v1452 = vadd.f32 %v1362, %v1410
        %v1453 = vadd.f32 %v1363, %v1430
        %v1454 = vadd.f32 %v1364, %v1450
        %v1455 = vld [vmem:[%s459] sm:$0xff]
        %v1456 = vld [vmem:[%s459 + $0x8] sm:$0xf]
        %v1457 = vld [vmem:[#allocation2] sm:$0xff]
        %v1458 = vld [vmem:[#allocation2 + $0x8] sm:$0xf]
        %s1459 = scalar_lea.vmem %s5, 12
        %v1460 = vld [vmem:[%s1459] sm:$0xf]
        %1463 = vst [vmem:[#allocation1] ss:$2 sm:$0xff] %v1455
        %s1464 = scalar_lea.vmem [#allocation1], 16
        %1465 = vst [vmem:[%s1464] ss:$2 sm:$0xff] %v1456
        %v1466 = vld.sshfl [vmem:[#allocation1] sm:$0xff pattern:$0x75316420]
        %v1467 = vld.sshfl [vmem:[#allocation1 + $0x8] sm:$0xff pattern:$0x75316420]
        %v1468 = vld.sshfl [vmem:[#allocation1 + $0x10] sm:$0xff pattern:$0x75316420]
        %1469 = vrot.lane.b32.xlu0 %v1466, 110
        %v1470 = vpop.permute.xlu0 %1469
        %1471 = vrot.lane.b32.xlu0 %v1467, 110
        %v1472 = vpop.permute.xlu0 %1471
        %1473 = vrot.lane.b32.xlu0 %v1468, 110
        %v1474 = vpop.permute.xlu0 %1473
        %vm1475 = vcmask 900096
        %v1476 = vsel %vm1475, %v1470, %v1472
        %v1477 = vsel %vm1475, %v1472, %v1474
        %v1479 = vsel %vm939, %v1460, 0
        %v1481 = vsel %vm915, %v1476, 0
        %v1483 = vsel %vm915, %v1477, 0
        %v1485 = vsel %vm915, %v1474, 0
        %1487 = vmatpush.msra.mxu0 0.0
        %1488 = vmatpush.msra.mxu0 0.0
        %1489 = vmatpush.msra.mxu0 0.0
        %1490 = vmatpush.msra.mxu0 0.0
        %1491 = vmatpush.msra.mxu0 0.0
        %1492 = vmatpush.msra.mxu0 0.0
        %1493 = vmatpush.msra.mxu0 0.0
        %1494 = vmatpush.msra.mxu0 0.0
        %1495 = vmatpush.msra.mxu0 0.0
        %1496 = vmatpush.msra.mxu0 0.0
        %1497 = vmatpush.msra.mxu0 0.0
        %1498 = vmatpush.msra.mxu0 0.0
        %1499 = vmatpush.msra.mxu0 0.0
        %1500 = vmatpush.msra.mxu0 0.0
        %1501 = vmatpush.msra.mxu0 0.0
        %1502 = vmatpush.msra.mxu0 %v1481
        %1503 = vmatmul.f32.gmra.mxu0 %v1479
        %v1504 = vpop.f32.mrf.mxu0
        %v1505 = vadd.f32 0.0, %v1504
        %1506 = vdwg.mxu0
        %1507 = vmatpush.msra.mxu0 0.0
        %1508 = vmatpush.msra.mxu0 0.0
        %1509 = vmatpush.msra.mxu0 0.0
        %1510 = vmatpush.msra.mxu0 0.0
        %1511 = vmatpush.msra.mxu0 0.0
        %1512 = vmatpush.msra.mxu0 0.0
        %1513 = vmatpush.msra.mxu0 0.0
        %1514 = vmatpush.msra.mxu0 0.0
        %1515 = vmatpush.msra.mxu0 0.0
        %1516 = vmatpush.msra.mxu0 0.0
        %1517 = vmatpush.msra.mxu0 0.0
        %1518 = vmatpush.msra.mxu0 0.0
        %1519 = vmatpush.msra.mxu0 0.0
        %1520 = vmatpush.msra.mxu0 0.0
        %1521 = vmatpush.msra.mxu0 0.0
        %1522 = vmatpush.msra.mxu0 %v1483
        %1523 = vmatmul.f32.gmra.mxu0 %v1479
        %v1524 = vpop.f32.mrf.mxu0
        %v1525 = vadd.f32 0.0, %v1524
        %1526 = vdwg.mxu0
        %1527 = vmatpush.msra.mxu0 0.0
        %1528 = vmatpush.msra.mxu0 0.0
        %1529 = vmatpush.msra.mxu0 0.0
        %1530 = vmatpush.msra.mxu0 0.0
        %1531 = vmatpush.msra.mxu0 0.0
        %1532 = vmatpush.msra.mxu0 0.0
        %1533 = vmatpush.msra.mxu0 0.0
        %1534 = vmatpush.msra.mxu0 0.0
        %1535 = vmatpush.msra.mxu0 0.0
        %1536 = vmatpush.msra.mxu0 0.0
        %1537 = vmatpush.msra.mxu0 0.0
        %1538 = vmatpush.msra.mxu0 0.0
        %1539 = vmatpush.msra.mxu0 0.0
        %1540 = vmatpush.msra.mxu0 0.0
        %1541 = vmatpush.msra.mxu0 0.0
        %1542 = vmatpush.msra.mxu0 %v1485
        %1543 = vmatmul.f32.gmra.mxu0 %v1479
        %v1544 = vpop.f32.mrf.mxu0
        %v1545 = vadd.f32 0.0, %v1544
        %1546 = vdwg.mxu0
        %v1547 = vadd.f32 %v1452, %v1505
        %v1548 = vadd.f32 %v1453, %v1525
        %v1549 = vadd.f32 %v1454, %v1545
        %s1550 = scalar_lea.vmem [#allocation10], 12
        %v1551 = vld [vmem:[%s1550] sm:$0xf]
        %1554 = vst [vmem:[#allocation1] ss:$2 sm:$0xff] %v1457
        %s1555 = scalar_lea.vmem [#allocation1], 16
        %1556 = vst [vmem:[%s1555] ss:$2 sm:$0xff] %v1458
        %v1557 = vld.sshfl [vmem:[#allocation1] sm:$0xff pattern:$0x75316420]
        %v1558 = vld.sshfl [vmem:[#allocation1 + $0x8] sm:$0xff pattern:$0x75316420]
        %v1559 = vld.sshfl [vmem:[#allocation1 + $0x10] sm:$0xff pattern:$0x75316420]
        %1560 = vrot.lane.b32.xlu0 %v1557, 110
        %v1561 = vpop.permute.xlu0 %1560
        %1562 = vrot.lane.b32.xlu0 %v1558, 110
        %v1563 = vpop.permute.xlu0 %1562
        %1564 = vrot.lane.b32.xlu0 %v1559, 110
        %v1565 = vpop.permute.xlu0 %1564
        %v1566 = vsel %vm1475, %v1561, %v1563
        %v1567 = vsel %vm1475, %v1563, %v1565
        %v1569 = vsel %vm939, %v1551, 0
        %v1571 = vsel %vm915, %v1566, 0
        %v1573 = vsel %vm915, %v1567, 0
        %v1575 = vsel %vm915, %v1565, 0
        %1577 = vmatpush.msra.mxu0 0.0
        %1578 = vmatpush.msra.mxu0 0.0
        %1579 = vmatpush.msra.mxu0 0.0
        %1580 = vmatpush.msra.mxu0 0.0
        %1581 = vmatpush.msra.mxu0 0.0
        %1582 = vmatpush.msra.mxu0 0.0
        %1583 = vmatpush.msra.mxu0 0.0
        %1584 = vmatpush.msra.mxu0 0.0
        %1585 = vmatpush.msra.mxu0 0.0
        %1586 = vmatpush.msra.mxu0 0.0
        %1587 = vmatpush.msra.mxu0 0.0
        %1588 = vmatpush.msra.mxu0 0.0
        %1589 = vmatpush.msra.mxu0 0.0
        %1590 = vmatpush.msra.mxu0 0.0
        %1591 = vmatpush.msra.mxu0 0.0
        %1592 = vmatpush.msra.mxu0 %v1571
        %1593 = vmatmul.f32.gmra.mxu0 %v1569
        %v1594 = vpop.f32.mrf.mxu0
        %v1595 = vadd.f32 0.0, %v1594
        %1596 = vdwg.mxu0
        %1597 = vmatpush.msra.mxu0 0.0
        %1598 = vmatpush.msra.mxu0 0.0
        %1599 = vmatpush.msra.mxu0 0.0
        %1600 = vmatpush.msra.mxu0 0.0
        %1601 = vmatpush.msra.mxu0 0.0
        %1602 = vmatpush.msra.mxu0 0.0
        %1603 = vmatpush.msra.mxu0 0.0
        %1604 = vmatpush.msra.mxu0 0.0
        %1605 = vmatpush.msra.mxu0 0.0
        %1606 = vmatpush.msra.mxu0 0.0
        %1607 = vmatpush.msra.mxu0 0.0
        %1608 = vmatpush.msra.mxu0 0.0
        %1609 = vmatpush.msra.mxu0 0.0
        %1610 = vmatpush.msra.mxu0 0.0
        %1611 = vmatpush.msra.mxu0 0.0
        %1612 = vmatpush.msra.mxu0 %v1573
        %1613 = vmatmul.f32.gmra.mxu0 %v1569
        %v1614 = vpop.f32.mrf.mxu0
        %v1615 = vadd.f32 0.0, %v1614
        %1616 = vdwg.mxu0
        %1617 = vmatpush.msra.mxu0 0.0
        %1618 = vmatpush.msra.mxu0 0.0
        %1619 = vmatpush.msra.mxu0 0.0
        %1620 = vmatpush.msra.mxu0 0.0
        %1621 = vmatpush.msra.mxu0 0.0
        %1622 = vmatpush.msra.mxu0 0.0
        %1623 = vmatpush.msra.mxu0 0.0
        %1624 = vmatpush.msra.mxu0 0.0
        %1625 = vmatpush.msra.mxu0 0.0
        %1626 = vmatpush.msra.mxu0 0.0
        %1627 = vmatpush.msra.mxu0 0.0
        %1628 = vmatpush.msra.mxu0 0.0
        %1629 = vmatpush.msra.mxu0 0.0
        %1630 = vmatpush.msra.mxu0 0.0
        %1631 = vmatpush.msra.mxu0 0.0
        %1632 = vmatpush.msra.mxu0 %v1575
        %1633 = vmatmul.f32.gmra.mxu0 %v1569
        %v1634 = vpop.f32.mrf.mxu0
        %v1635 = vadd.f32 0.0, %v1634
        %1636 = vdwg.mxu0
        %v1637 = vadd.f32 %v1547, %v1595
        %v1638 = vadd.f32 %v1548, %v1615
        %v1639 = vadd.f32 %v1549, %v1635
        %v1640 = vld [vmem:[%s459] sm:$0xff]
        %v1641 = vld [vmem:[%s459 + $0x8] sm:$0xf]
        %v1642 = vld [vmem:[#allocation2] sm:$0xff]
        %v1643 = vld [vmem:[#allocation2 + $0x8] sm:$0xf]
        %s1644 = scalar_lea.vmem %s5, 16
        %v1645 = vld [vmem:[%s1644] sm:$0xf]
        %1648 = vst [vmem:[#allocation1] ss:$2 sm:$0xff] %v1640
        %s1649 = scalar_lea.vmem [#allocation1], 16
        %1650 = vst [vmem:[%s1649] ss:$2 sm:$0xff] %v1641
        %v1651 = vld.sshfl [vmem:[#allocation1] sm:$0xff pattern:$0x75316420]
        %v1652 = vld.sshfl [vmem:[#allocation1 + $0x8] sm:$0xff pattern:$0x75316420]
        %v1653 = vld.sshfl [vmem:[#allocation1 + $0x10] sm:$0xff pattern:$0x75316420]
        %1654 = vrot.lane.b32.xlu0 %v1651, 109
        %v1655 = vpop.permute.xlu0 %1654
        %1656 = vrot.lane.b32.xlu0 %v1652, 109
        %v1657 = vpop.permute.xlu0 %1656
        %1658 = vrot.lane.b32.xlu0 %v1653, 109
        %v1659 = vpop.permute.xlu0 %1658
        %vm1660 = vcmask 891904
        %v1661 = vsel %vm1660, %v1655, %v1657
        %v1662 = vsel %vm1660, %v1657, %v1659
        %v1664 = vsel %vm939, %v1645, 0
        %v1666 = vsel %vm915, %v1661, 0
        %v1668 = vsel %vm915, %v1662, 0
        %v1670 = vsel %vm915, %v1659, 0
        %1672 = vmatpush.msra.mxu0 0.0
        %1673 = vmatpush.msra.mxu0 0.0
        %1674 = vmatpush.msra.mxu0 0.0
        %1675 = vmatpush.msra.mxu0 0.0
        %1676 = vmatpush.msra.mxu0 0.0
        %1677 = vmatpush.msra.mxu0 0.0
        %1678 = vmatpush.msra.mxu0 0.0
        %1679 = vmatpush.msra.mxu0 0.0
        %1680 = vmatpush.msra.mxu0 0.0
        %1681 = vmatpush.msra.mxu0 0.0
        %1682 = vmatpush.msra.mxu0 0.0
        %1683 = vmatpush.msra.mxu0 0.0
        %1684 = vmatpush.msra.mxu0 0.0
        %1685 = vmatpush.msra.mxu0 0.0
        %1686 = vmatpush.msra.mxu0 0.0
        %1687 = vmatpush.msra.mxu0 %v1666
        %1688 = vmatmul.f32.gmra.mxu0 %v1664
        %v1689 = vpop.f32.mrf.mxu0
        %v1690 = vadd.f32 0.0, %v1689
        %1691 = vdwg.mxu0
        %1692 = vmatpush.msra.mxu0 0.0
        %1693 = vmatpush.msra.mxu0 0.0
        %1694 = vmatpush.msra.mxu0 0.0
        %1695 = vmatpush.msra.mxu0 0.0
        %1696 = vmatpush.msra.mxu0 0.0
        %1697 = vmatpush.msra.mxu0 0.0
        %1698 = vmatpush.msra.mxu0 0.0
        %1699 = vmatpush.msra.mxu0 0.0
        %1700 = vmatpush.msra.mxu0 0.0
        %1701 = vmatpush.msra.mxu0 0.0
        %1702 = vmatpush.msra.mxu0 0.0
        %1703 = vmatpush.msra.mxu0 0.0
        %1704 = vmatpush.msra.mxu0 0.0
        %1705 = vmatpush.msra.mxu0 0.0
        %1706 = vmatpush.msra.mxu0 0.0
        %1707 = vmatpush.msra.mxu0 %v1668
        %1708 = vmatmul.f32.gmra.mxu0 %v1664
        %v1709 = vpop.f32.mrf.mxu0
        %v1710 = vadd.f32 0.0, %v1709
        %1711 = vdwg.mxu0
        %1712 = vmatpush.msra.mxu0 0.0
        %1713 = vmatpush.msra.mxu0 0.0
        %1714 = vmatpush.msra.mxu0 0.0
        %1715 = vmatpush.msra.mxu0 0.0
        %1716 = vmatpush.msra.mxu0 0.0
        %1717 = vmatpush.msra.mxu0 0.0
        %1718 = vmatpush.msra.mxu0 0.0
        %1719 = vmatpush.msra.mxu0 0.0
        %1720 = vmatpush.msra.mxu0 0.0
        %1721 = vmatpush.msra.mxu0 0.0
        %1722 = vmatpush.msra.mxu0 0.0
        %1723 = vmatpush.msra.mxu0 0.0
        %1724 = vmatpush.msra.mxu0 0.0
        %1725 = vmatpush.msra.mxu0 0.0
        %1726 = vmatpush.msra.mxu0 0.0
        %1727 = vmatpush.msra.mxu0 %v1670
        %1728 = vmatmul.f32.gmra.mxu0 %v1664
        %v1729 = vpop.f32.mrf.mxu0
        %v1730 = vadd.f32 0.0, %v1729
        %1731 = vdwg.mxu0
        %v1732 = vadd.f32 %v1637, %v1690
        %v1733 = vadd.f32 %v1638, %v1710
        %v1734 = vadd.f32 %v1639, %v1730
        %s1735 = scalar_lea.vmem [#allocation10], 16
        %v1736 = vld [vmem:[%s1735] sm:$0xf]
        %1739 = vst [vmem:[#allocation1] ss:$2 sm:$0xff] %v1642
        %s1740 = scalar_lea.vmem [#allocation1], 16
        %1741 = vst [vmem:[%s1740] ss:$2 sm:$0xff] %v1643
        %v1742 = vld.sshfl [vmem:[#allocation1] sm:$0xff pattern:$0x75316420]
        %v1743 = vld.sshfl [vmem:[#allocation1 + $0x8] sm:$0xff pattern:$0x75316420]
        %v1744 = vld.sshfl [vmem:[#allocation1 + $0x10] sm:$0xff pattern:$0x75316420]
        %1745 = vrot.lane.b32.xlu0 %v1742, 109
        %v1746 = vpop.permute.xlu0 %1745
        %1747 = vrot.lane.b32.xlu0 %v1743, 109
        %v1748 = vpop.permute.xlu0 %1747
        %1749 = vrot.lane.b32.xlu0 %v1744, 109
        %v1750 = vpop.permute.xlu0 %1749
        %v1751 = vsel %vm1660, %v1746, %v1748
        %v1752 = vsel %vm1660, %v1748, %v1750
        %v1754 = vsel %vm939, %v1736, 0
        %v1756 = vsel %vm915, %v1751, 0
        %v1758 = vsel %vm915, %v1752, 0
        %v1760 = vsel %vm915, %v1750, 0
        %1762 = vmatpush.msra.mxu0 0.0
        %1763 = vmatpush.msra.mxu0 0.0
        %1764 = vmatpush.msra.mxu0 0.0
        %1765 = vmatpush.msra.mxu0 0.0
        %1766 = vmatpush.msra.mxu0 0.0
        %1767 = vmatpush.msra.mxu0 0.0
        %1768 = vmatpush.msra.mxu0 0.0
        %1769 = vmatpush.msra.mxu0 0.0
        %1770 = vmatpush.msra.mxu0 0.0
        %1771 = vmatpush.msra.mxu0 0.0
        %1772 = vmatpush.msra.mxu0 0.0
        %1773 = vmatpush.msra.mxu0 0.0
        %1774 = vmatpush.msra.mxu0 0.0
        %1775 = vmatpush.msra.mxu0 0.0
        %1776 = vmatpush.msra.mxu0 0.0
        %1777 = vmatpush.msra.mxu0 %v1756
        %1778 = vmatmul.f32.gmra.mxu0 %v1754
        %v1779 = vpop.f32.mrf.mxu0
        %v1780 = vadd.f32 0.0, %v1779
        %1781 = vdwg.mxu0
        %1782 = vmatpush.msra.mxu0 0.0
        %1783 = vmatpush.msra.mxu0 0.0
        %1784 = vmatpush.msra.mxu0 0.0
        %1785 = vmatpush.msra.mxu0 0.0
        %1786 = vmatpush.msra.mxu0 0.0
        %1787 = vmatpush.msra.mxu0 0.0
        %1788 = vmatpush.msra.mxu0 0.0
        %1789 = vmatpush.msra.mxu0 0.0
        %1790 = vmatpush.msra.mxu0 0.0
        %1791 = vmatpush.msra.mxu0 0.0
        %1792 = vmatpush.msra.mxu0 0.0
        %1793 = vmatpush.msra.mxu0 0.0
        %1794 = vmatpush.msra.mxu0 0.0
        %1795 = vmatpush.msra.mxu0 0.0
        %1796 = vmatpush.msra.mxu0 0.0
        %1797 = vmatpush.msra.mxu0 %v1758
        %1798 = vmatmul.f32.gmra.mxu0 %v1754
        %v1799 = vpop.f32.mrf.mxu0
        %v1800 = vadd.f32 0.0, %v1799
        %1801 = vdwg.mxu0
        %1802 = vmatpush.msra.mxu0 0.0
        %1803 = vmatpush.msra.mxu0 0.0
        %1804 = vmatpush.msra.mxu0 0.0
        %1805 = vmatpush.msra.mxu0 0.0
        %1806 = vmatpush.msra.mxu0 0.0
        %1807 = vmatpush.msra.mxu0 0.0
        %1808 = vmatpush.msra.mxu0 0.0
        %1809 = vmatpush.msra.mxu0 0.0
        %1810 = vmatpush.msra.mxu0 0.0
        %1811 = vmatpush.msra.mxu0 0.0
        %1812 = vmatpush.msra.mxu0 0.0
        %1813 = vmatpush.msra.mxu0 0.0
        %1814 = vmatpush.msra.mxu0 0.0
        %1815 = vmatpush.msra.mxu0 0.0
        %1816 = vmatpush.msra.mxu0 0.0
        %1817 = vmatpush.msra.mxu0 %v1760
        %1818 = vmatmul.f32.gmra.mxu0 %v1754
        %v1819 = vpop.f32.mrf.mxu0
        %v1820 = vadd.f32 0.0, %v1819
        %1821 = vdwg.mxu0
        %v1822 = vadd.f32 %v1732, %v1780
        %v1823 = vadd.f32 %v1733, %v1800
        %v1824 = vadd.f32 %v1734, %v1820
        %v1825 = vld [vmem:[%s459] sm:$0xff]
        %v1826 = vld [vmem:[%s459 + $0x8] sm:$0xf]
        %v1827 = vld [vmem:[#allocation2] sm:$0xff]
        %v1828 = vld [vmem:[#allocation2 + $0x8] sm:$0xf]
        %s1829 = scalar_lea.vmem %s5, 20
        %v1830 = vld [vmem:[%s1829] sm:$0xf]
        %1833 = vst [vmem:[#allocation1] ss:$2 sm:$0xff] %v1825
        %s1834 = scalar_lea.vmem [#allocation1], 16
        %1835 = vst [vmem:[%s1834] ss:$2 sm:$0xff] %v1826
        %v1836 = vld.sshfl [vmem:[#allocation1] sm:$0xff pattern:$0x75316420]
        %v1837 = vld.sshfl [vmem:[#allocation1 + $0x8] sm:$0xff pattern:$0x75316420]
        %v1838 = vld.sshfl [vmem:[#allocation1 + $0x10] sm:$0xff pattern:$0x75316420]
        %1839 = vrot.lane.b32.xlu0 %v1836, 108
        %v1840 = vpop.permute.xlu0 %1839
        %1841 = vrot.lane.b32.xlu0 %v1837, 108
        %v1842 = vpop.permute.xlu0 %1841
        %1843 = vrot.lane.b32.xlu0 %v1838, 108
        %v1844 = vpop.permute.xlu0 %1843
        %v1845 = vsel %vm855, %v1840, %v1842
        %v1846 = vsel %vm855, %v1842, %v1844
        %v1848 = vsel %vm939, %v1830, 0
        %v1850 = vsel %vm915, %v1845, 0
        %v1852 = vsel %vm915, %v1846, 0
        %v1854 = vsel %vm915, %v1844, 0
        %1856 = vmatpush.msra.mxu0 0.0
        %1857 = vmatpush.msra.mxu0 0.0
        %1858 = vmatpush.msra.mxu0 0.0
        %1859 = vmatpush.msra.mxu0 0.0
        %1860 = vmatpush.msra.mxu0 0.0
        %1861 = vmatpush.msra.mxu0 0.0
        %1862 = vmatpush.msra.mxu0 0.0
        %1863 = vmatpush.msra.mxu0 0.0
        %1864 = vmatpush.msra.mxu0 0.0
        %1865 = vmatpush.msra.mxu0 0.0
        %1866 = vmatpush.msra.mxu0 0.0
        %1867 = vmatpush.msra.mxu0 0.0
        %1868 = vmatpush.msra.mxu0 0.0
        %1869 = vmatpush.msra.mxu0 0.0
        %1870 = vmatpush.msra.mxu0 0.0
        %1871 = vmatpush.msra.mxu0 %v1850
        %1872 = vmatmul.f32.gmra.mxu0 %v1848
        %v1873 = vpop.f32.mrf.mxu0
        %v1874 = vadd.f32 0.0, %v1873
        %1875 = vdwg.mxu0
        %1876 = vmatpush.msra.mxu0 0.0
        %1877 = vmatpush.msra.mxu0 0.0
        %1878 = vmatpush.msra.mxu0 0.0
        %1879 = vmatpush.msra.mxu0 0.0
        %1880 = vmatpush.msra.mxu0 0.0
        %1881 = vmatpush.msra.mxu0 0.0
        %1882 = vmatpush.msra.mxu0 0.0
        %1883 = vmatpush.msra.mxu0 0.0
        %1884 = vmatpush.msra.mxu0 0.0
        %1885 = vmatpush.msra.mxu0 0.0
        %1886 = vmatpush.msra.mxu0 0.0
        %1887 = vmatpush.msra.mxu0 0.0
        %1888 = vmatpush.msra.mxu0 0.0
        %1889 = vmatpush.msra.mxu0 0.0
        %1890 = vmatpush.msra.mxu0 0.0
        %1891 = vmatpush.msra.mxu0 %v1852
        %1892 = vmatmul.f32.gmra.mxu0 %v1848
        %v1893 = vpop.f32.mrf.mxu0
        %v1894 = vadd.f32 0.0, %v1893
        %1895 = vdwg.mxu0
        %1896 = vmatpush.msra.mxu0 0.0
        %1897 = vmatpush.msra.mxu0 0.0
        %1898 = vmatpush.msra.mxu0 0.0
        %1899 = vmatpush.msra.mxu0 0.0
        %1900 = vmatpush.msra.mxu0 0.0
        %1901 = vmatpush.msra.mxu0 0.0
        %1902 = vmatpush.msra.mxu0 0.0
        %1903 = vmatpush.msra.mxu0 0.0
        %1904 = vmatpush.msra.mxu0 0.0
        %1905 = vmatpush.msra.mxu0 0.0
        %1906 = vmatpush.msra.mxu0 0.0
        %1907 = vmatpush.msra.mxu0 0.0
        %1908 = vmatpush.msra.mxu0 0.0
        %1909 = vmatpush.msra.mxu0 0.0
        %1910 = vmatpush.msra.mxu0 0.0
        %1911 = vmatpush.msra.mxu0 %v1854
        %1912 = vmatmul.f32.gmra.mxu0 %v1848
        %v1913 = vpop.f32.mrf.mxu0
        %v1914 = vadd.f32 0.0, %v1913
        %1915 = vdwg.mxu0
        %v1916 = vadd.f32 %v1822, %v1874
        %v1917 = vadd.f32 %v1823, %v1894
        %v1918 = vadd.f32 %v1824, %v1914
        %s1919 = scalar_lea.vmem [#allocation10], 20
        %v1920 = vld [vmem:[%s1919] sm:$0xf]
        %1923 = vst [vmem:[#allocation1] ss:$2 sm:$0xff] %v1827
        %s1924 = scalar_lea.vmem [#allocation1], 16
        %1925 = vst [vmem:[%s1924] ss:$2 sm:$0xff] %v1828
        %v1926 = vld.sshfl [vmem:[#allocation1] sm:$0xff pattern:$0x75316420]
        %v1927 = vld.sshfl [vmem:[#allocation1 + $0x8] sm:$0xff pattern:$0x75316420]
        %v1928 = vld.sshfl [vmem:[#allocation1 + $0x10] sm:$0xff pattern:$0x75316420]
        %1929 = vrot.lane.b32.xlu0 %v1926, 108
        %v1930 = vpop.permute.xlu0 %1929
        %1931 = vrot.lane.b32.xlu0 %v1927, 108
        %v1932 = vpop.permute.xlu0 %1931
        %1933 = vrot.lane.b32.xlu0 %v1928, 108
        %v1934 = vpop.permute.xlu0 %1933
        %v1935 = vsel %vm855, %v1930, %v1932
        %v1936 = vsel %vm855, %v1932, %v1934
        %v1938 = vsel %vm939, %v1920, 0
        %v1940 = vsel %vm915, %v1935, 0
        %v1942 = vsel %vm915, %v1936, 0
        %v1944 = vsel %vm915, %v1934, 0
        %1946 = vmatpush.msra.mxu0 0.0
        %1947 = vmatpush.msra.mxu0 0.0
        %1948 = vmatpush.msra.mxu0 0.0
        %1949 = vmatpush.msra.mxu0 0.0
        %1950 = vmatpush.msra.mxu0 0.0
        %1951 = vmatpush.msra.mxu0 0.0
        %1952 = vmatpush.msra.mxu0 0.0
        %1953 = vmatpush.msra.mxu0 0.0
        %1954 = vmatpush.msra.mxu0 0.0
        %1955 = vmatpush.msra.mxu0 0.0
        %1956 = vmatpush.msra.mxu0 0.0
        %1957 = vmatpush.msra.mxu0 0.0
        %1958 = vmatpush.msra.mxu0 0.0
        %1959 = vmatpush.msra.mxu0 0.0
        %1960 = vmatpush.msra.mxu0 0.0
        %1961 = vmatpush.msra.mxu0 %v1940
        %1962 = vmatmul.f32.gmra.mxu0 %v1938
        %v1963 = vpop.f32.mrf.mxu0
        %v1964 = vadd.f32 0.0, %v1963
        %1965 = vdwg.mxu0
        %1966 = vmatpush.msra.mxu0 0.0
        %1967 = vmatpush.msra.mxu0 0.0
        %1968 = vmatpush.msra.mxu0 0.0
        %1969 = vmatpush.msra.mxu0 0.0
        %1970 = vmatpush.msra.mxu0 0.0
        %1971 = vmatpush.msra.mxu0 0.0
        %1972 = vmatpush.msra.mxu0 0.0
        %1973 = vmatpush.msra.mxu0 0.0
        %1974 = vmatpush.msra.mxu0 0.0
        %1975 = vmatpush.msra.mxu0 0.0
        %1976 = vmatpush.msra.mxu0 0.0
        %1977 = vmatpush.msra.mxu0 0.0
        %1978 = vmatpush.msra.mxu0 0.0
        %1979 = vmatpush.msra.mxu0 0.0
        %1980 = vmatpush.msra.mxu0 0.0
        %1981 = vmatpush.msra.mxu0 %v1942
        %1982 = vmatmul.f32.gmra.mxu0 %v1938
        %v1983 = vpop.f32.mrf.mxu0
        %v1984 = vadd.f32 0.0, %v1983
        %1985 = vdwg.mxu0
        %1986 = vmatpush.msra.mxu0 0.0
        %1987 = vmatpush.msra.mxu0 0.0
        %1988 = vmatpush.msra.mxu0 0.0
        %1989 = vmatpush.msra.mxu0 0.0
        %1990 = vmatpush.msra.mxu0 0.0
        %1991 = vmatpush.msra.mxu0 0.0
        %1992 = vmatpush.msra.mxu0 0.0
        %1993 = vmatpush.msra.mxu0 0.0
        %1994 = vmatpush.msra.mxu0 0.0
        %1995 = vmatpush.msra.mxu0 0.0
        %1996 = vmatpush.msra.mxu0 0.0
        %1997 = vmatpush.msra.mxu0 0.0
        %1998 = vmatpush.msra.mxu0 0.0
        %1999 = vmatpush.msra.mxu0 0.0
        %2000 = vmatpush.msra.mxu0 0.0
        %2001 = vmatpush.msra.mxu0 %v1944
        %2002 = vmatmul.f32.gmra.mxu0 %v1938
        %v2003 = vpop.f32.mrf.mxu0
        %v2004 = vadd.f32 0.0, %v2003
        %2005 = vdwg.mxu0
        %v2006 = vadd.f32 %v1916, %v1964
        %v2007 = vadd.f32 %v1917, %v1984
        %v2008 = vadd.f32 %v1918, %v2004
        %v2009 = vld [vmem:[%s459] sm:$0xff]
        %v2010 = vld [vmem:[%s459 + $0x8] sm:$0xf]
        %v2011 = vld [vmem:[#allocation2] sm:$0xff]
        %v2012 = vld [vmem:[#allocation2 + $0x8] sm:$0xf]
        %s2013 = scalar_lea.vmem %s5, 24
        %v2014 = vld [vmem:[%s2013] sm:$0xf]
        %2017 = vst [vmem:[#allocation1] ss:$2 sm:$0xff] %v2009
        %s2018 = scalar_lea.vmem [#allocation1], 16
        %2019 = vst [vmem:[%s2018] ss:$2 sm:$0xff] %v2010
        %v2020 = vld.sshfl [vmem:[#allocation1] sm:$0xff pattern:$0x75316420]
        %v2021 = vld.sshfl [vmem:[#allocation1 + $0x8] sm:$0xff pattern:$0x75316420]
        %v2022 = vld.sshfl [vmem:[#allocation1 + $0x10] sm:$0xff pattern:$0x75316420]
        %2023 = vrot.lane.b32.xlu0 %v2020, 92
        %v2024 = vpop.permute.xlu0 %2023
        %2025 = vrot.lane.b32.xlu0 %v2021, 92
        %v2026 = vpop.permute.xlu0 %2025
        %2027 = vrot.lane.b32.xlu0 %v2022, 92
        %v2028 = vpop.permute.xlu0 %2027
        %vm2029 = vcmask 752640
        %v2030 = vsel %vm2029, %v2024, %v2026
        %v2031 = vsel %vm2029, %v2026, %v2028
        %v2033 = vsel %vm939, %v2014, 0
        %v2035 = vsel %vm915, %v2030, 0
        %v2037 = vsel %vm915, %v2031, 0
        %v2039 = vsel %vm915, %v2028, 0
        %2041 = vmatpush.msra.mxu0 0.0
        %2042 = vmatpush.msra.mxu0 0.0
        %2043 = vmatpush.msra.mxu0 0.0
        %2044 = vmatpush.msra.mxu0 0.0
        %2045 = vmatpush.msra.mxu0 0.0
        %2046 = vmatpush.msra.mxu0 0.0
        %2047 = vmatpush.msra.mxu0 0.0
        %2048 = vmatpush.msra.mxu0 0.0
        %2049 = vmatpush.msra.mxu0 0.0
        %2050 = vmatpush.msra.mxu0 0.0
        %2051 = vmatpush.msra.mxu0 0.0
        %2052 = vmatpush.msra.mxu0 0.0
        %2053 = vmatpush.msra.mxu0 0.0
        %2054 = vmatpush.msra.mxu0 0.0
        %2055 = vmatpush.msra.mxu0 0.0
        %2056 = vmatpush.msra.mxu0 %v2035
        %2057 = vmatmul.f32.gmra.mxu0 %v2033
        %v2058 = vpop.f32.mrf.mxu0
        %v2059 = vadd.f32 0.0, %v2058
        %2060 = vdwg.mxu0
        %2061 = vmatpush.msra.mxu0 0.0
        %2062 = vmatpush.msra.mxu0 0.0
        %2063 = vmatpush.msra.mxu0 0.0
        %2064 = vmatpush.msra.mxu0 0.0
        %2065 = vmatpush.msra.mxu0 0.0
        %2066 = vmatpush.msra.mxu0 0.0
        %2067 = vmatpush.msra.mxu0 0.0
        %2068 = vmatpush.msra.mxu0 0.0
        %2069 = vmatpush.msra.mxu0 0.0
        %2070 = vmatpush.msra.mxu0 0.0
        %2071 = vmatpush.msra.mxu0 0.0
        %2072 = vmatpush.msra.mxu0 0.0
        %2073 = vmatpush.msra.mxu0 0.0
        %2074 = vmatpush.msra.mxu0 0.0
        %2075 = vmatpush.msra.mxu0 0.0
        %2076 = vmatpush.msra.mxu0 %v2037
        %2077 = vmatmul.f32.gmra.mxu0 %v2033
        %v2078 = vpop.f32.mrf.mxu0
        %v2079 = vadd.f32 0.0, %v2078
        %2080 = vdwg.mxu0
        %2081 = vmatpush.msra.mxu0 0.0
        %2082 = vmatpush.msra.mxu0 0.0
        %2083 = vmatpush.msra.mxu0 0.0
        %2084 = vmatpush.msra.mxu0 0.0
        %2085 = vmatpush.msra.mxu0 0.0
        %2086 = vmatpush.msra.mxu0 0.0
        %2087 = vmatpush.msra.mxu0 0.0
        %2088 = vmatpush.msra.mxu0 0.0
        %2089 = vmatpush.msra.mxu0 0.0
        %2090 = vmatpush.msra.mxu0 0.0
        %2091 = vmatpush.msra.mxu0 0.0
        %2092 = vmatpush.msra.mxu0 0.0
        %2093 = vmatpush.msra.mxu0 0.0
        %2094 = vmatpush.msra.mxu0 0.0
        %2095 = vmatpush.msra.mxu0 0.0
        %2096 = vmatpush.msra.mxu0 %v2039
        %2097 = vmatmul.f32.gmra.mxu0 %v2033
        %v2098 = vpop.f32.mrf.mxu0
        %v2099 = vadd.f32 0.0, %v2098
        %2100 = vdwg.mxu0
        %v2101 = vadd.f32 %v2006, %v2059
        %v2102 = vadd.f32 %v2007, %v2079
        %v2103 = vadd.f32 %v2008, %v2099
        %s2104 = scalar_lea.vmem [#allocation10], 24
        %v2105 = vld [vmem:[%s2104] sm:$0xf]
        %2108 = vst [vmem:[#allocation1] ss:$2 sm:$0xff] %v2011
        %s2109 = scalar_lea.vmem [#allocation1], 16
        %2110 = vst [vmem:[%s2109] ss:$2 sm:$0xff] %v2012
        %v2111 = vld.sshfl [vmem:[#allocation1] sm:$0xff pattern:$0x75316420]
        %v2112 = vld.sshfl [vmem:[#allocation1 + $0x8] sm:$0xff pattern:$0x75316420]
        %v2113 = vld.sshfl [vmem:[#allocation1 + $0x10] sm:$0xff pattern:$0x75316420]
        %2114 = vrot.lane.b32.xlu0 %v2111, 92
        %v2115 = vpop.permute.xlu0 %2114
        %2116 = vrot.lane.b32.xlu0 %v2112, 92
        %v2117 = vpop.permute.xlu0 %2116
        %2118 = vrot.lane.b32.xlu0 %v2113, 92
        %v2119 = vpop.permute.xlu0 %2118
        %v2120 = vsel %vm2029, %v2115, %v2117
        %v2121 = vsel %vm2029, %v2117, %v2119
        %v2123 = vsel %vm939, %v2105, 0
        %v2125 = vsel %vm915, %v2120, 0
        %v2127 = vsel %vm915, %v2121, 0
        %v2129 = vsel %vm915, %v2119, 0
        %2131 = vmatpush.msra.mxu0 0.0
        %2132 = vmatpush.msra.mxu0 0.0
        %2133 = vmatpush.msra.mxu0 0.0
        %2134 = vmatpush.msra.mxu0 0.0
        %2135 = vmatpush.msra.mxu0 0.0
        %2136 = vmatpush.msra.mxu0 0.0
        %2137 = vmatpush.msra.mxu0 0.0
        %2138 = vmatpush.msra.mxu0 0.0
        %2139 = vmatpush.msra.mxu0 0.0
        %2140 = vmatpush.msra.mxu0 0.0
        %2141 = vmatpush.msra.mxu0 0.0
        %2142 = vmatpush.msra.mxu0 0.0
        %2143 = vmatpush.msra.mxu0 0.0
        %2144 = vmatpush.msra.mxu0 0.0
        %2145 = vmatpush.msra.mxu0 0.0
        %2146 = vmatpush.msra.mxu0 %v2125
        %2147 = vmatmul.f32.gmra.mxu0 %v2123
        %v2148 = vpop.f32.mrf.mxu0
        %v2149 = vadd.f32 0.0, %v2148
        %2150 = vdwg.mxu0
        %2151 = vmatpush.msra.mxu0 0.0
        %2152 = vmatpush.msra.mxu0 0.0
        %2153 = vmatpush.msra.mxu0 0.0
        %2154 = vmatpush.msra.mxu0 0.0
        %2155 = vmatpush.msra.mxu0 0.0
        %2156 = vmatpush.msra.mxu0 0.0
        %2157 = vmatpush.msra.mxu0 0.0
        %2158 = vmatpush.msra.mxu0 0.0
        %2159 = vmatpush.msra.mxu0 0.0
        %2160 = vmatpush.msra.mxu0 0.0
        %2161 = vmatpush.msra.mxu0 0.0
        %2162 = vmatpush.msra.mxu0 0.0
        %2163 = vmatpush.msra.mxu0 0.0
        %2164 = vmatpush.msra.mxu0 0.0
        %2165 = vmatpush.msra.mxu0 0.0
        %2166 = vmatpush.msra.mxu0 %v2127
        %2167 = vmatmul.f32.gmra.mxu0 %v2123
        %v2168 = vpop.f32.mrf.mxu0
        %v2169 = vadd.f32 0.0, %v2168
        %2170 = vdwg.mxu0
        %2171 = vmatpush.msra.mxu0 0.0
        %2172 = vmatpush.msra.mxu0 0.0
        %2173 = vmatpush.msra.mxu0 0.0
        %2174 = vmatpush.msra.mxu0 0.0
        %2175 = vmatpush.msra.mxu0 0.0
        %2176 = vmatpush.msra.mxu0 0.0
        %2177 = vmatpush.msra.mxu0 0.0
        %2178 = vmatpush.msra.mxu0 0.0
        %2179 = vmatpush.msra.mxu0 0.0
        %2180 = vmatpush.msra.mxu0 0.0
        %2181 = vmatpush.msra.mxu0 0.0
        %2182 = vmatpush.msra.mxu0 0.0
        %2183 = vmatpush.msra.mxu0 0.0
        %2184 = vmatpush.msra.mxu0 0.0
        %2185 = vmatpush.msra.mxu0 0.0
        %2186 = vmatpush.msra.mxu0 %v2129
        %2187 = vmatmul.f32.gmra.mxu0 %v2123
        %v2188 = vpop.f32.mrf.mxu0
        %v2189 = vadd.f32 0.0, %v2188
        %2190 = vdwg.mxu0
        %v2191 = vadd.f32 %v2101, %v2149
        %v2192 = vadd.f32 %v2102, %v2169
        %v2193 = vadd.f32 %v2103, %v2189
        %v2194 = vld [vmem:[%s459] sm:$0xff]
        %v2195 = vld [vmem:[%s459 + $0x8] sm:$0xf]
        %v2196 = vld [vmem:[#allocation2] sm:$0xff]
        %v2197 = vld [vmem:[#allocation2 + $0x8] sm:$0xf]
        %s2198 = scalar_lea.vmem %s5, 28
        %v2199 = vld [vmem:[%s2198] sm:$0xf]
        %2202 = vst [vmem:[#allocation1] ss:$2 sm:$0xff] %v2194
        %s2203 = scalar_lea.vmem [#allocation1], 16
        %2204 = vst [vmem:[%s2203] ss:$2 sm:$0xff] %v2195
        %v2205 = vld.sshfl [vmem:[#allocation1] sm:$0xff pattern:$0x75316420]
        %v2206 = vld.sshfl [vmem:[#allocation1 + $0x8] sm:$0xff pattern:$0x75316420]
        %v2207 = vld.sshfl [vmem:[#allocation1 + $0x10] sm:$0xff pattern:$0x75316420]
        %2208 = vrot.lane.b32.xlu0 %v2205, 91
        %v2209 = vpop.permute.xlu0 %2208
        %2210 = vrot.lane.b32.xlu0 %v2206, 91
        %v2211 = vpop.permute.xlu0 %2210
        %2212 = vrot.lane.b32.xlu0 %v2207, 91
        %v2213 = vpop.permute.xlu0 %2212
        %vm2214 = vcmask 744448
        %v2215 = vsel %vm2214, %v2209, %v2211
        %v2216 = vsel %vm2214, %v2211, %v2213
        %v2218 = vsel %vm939, %v2199, 0
        %v2220 = vsel %vm915, %v2215, 0
        %v2222 = vsel %vm915, %v2216, 0
        %v2224 = vsel %vm915, %v2213, 0
        %2226 = vmatpush.msra.mxu0 0.0
        %2227 = vmatpush.msra.mxu0 0.0
        %2228 = vmatpush.msra.mxu0 0.0
        %2229 = vmatpush.msra.mxu0 0.0
        %2230 = vmatpush.msra.mxu0 0.0
        %2231 = vmatpush.msra.mxu0 0.0
        %2232 = vmatpush.msra.mxu0 0.0
        %2233 = vmatpush.msra.mxu0 0.0
        %2234 = vmatpush.msra.mxu0 0.0
        %2235 = vmatpush.msra.mxu0 0.0
        %2236 = vmatpush.msra.mxu0 0.0
        %2237 = vmatpush.msra.mxu0 0.0
        %2238 = vmatpush.msra.mxu0 0.0
        %2239 = vmatpush.msra.mxu0 0.0
        %2240 = vmatpush.msra.mxu0 0.0
        %2241 = vmatpush.msra.mxu0 %v2220
        %2242 = vmatmul.f32.gmra.mxu0 %v2218
        %v2243 = vpop.f32.mrf.mxu0
        %v2244 = vadd.f32 0.0, %v2243
        %2245 = vdwg.mxu0
        %2246 = vmatpush.msra.mxu0 0.0
        %2247 = vmatpush.msra.mxu0 0.0
        %2248 = vmatpush.msra.mxu0 0.0
        %2249 = vmatpush.msra.mxu0 0.0
        %2250 = vmatpush.msra.mxu0 0.0
        %2251 = vmatpush.msra.mxu0 0.0
        %2252 = vmatpush.msra.mxu0 0.0
        %2253 = vmatpush.msra.mxu0 0.0
        %2254 = vmatpush.msra.mxu0 0.0
        %2255 = vmatpush.msra.mxu0 0.0
        %2256 = vmatpush.msra.mxu0 0.0
        %2257 = vmatpush.msra.mxu0 0.0
        %2258 = vmatpush.msra.mxu0 0.0
        %2259 = vmatpush.msra.mxu0 0.0
        %2260 = vmatpush.msra.mxu0 0.0
        %2261 = vmatpush.msra.mxu0 %v2222
        %2262 = vmatmul.f32.gmra.mxu0 %v2218
        %v2263 = vpop.f32.mrf.mxu0
        %v2264 = vadd.f32 0.0, %v2263
        %2265 = vdwg.mxu0
        %2266 = vmatpush.msra.mxu0 0.0
        %2267 = vmatpush.msra.mxu0 0.0
        %2268 = vmatpush.msra.mxu0 0.0
        %2269 = vmatpush.msra.mxu0 0.0
        %2270 = vmatpush.msra.mxu0 0.0
        %2271 = vmatpush.msra.mxu0 0.0
        %2272 = vmatpush.msra.mxu0 0.0
        %2273 = vmatpush.msra.mxu0 0.0
        %2274 = vmatpush.msra.mxu0 0.0
        %2275 = vmatpush.msra.mxu0 0.0
        %2276 = vmatpush.msra.mxu0 0.0
        %2277 = vmatpush.msra.mxu0 0.0
        %2278 = vmatpush.msra.mxu0 0.0
        %2279 = vmatpush.msra.mxu0 0.0
        %2280 = vmatpush.msra.mxu0 0.0
        %2281 = vmatpush.msra.mxu0 %v2224
        %2282 = vmatmul.f32.gmra.mxu0 %v2218
        %v2283 = vpop.f32.mrf.mxu0
        %v2284 = vadd.f32 0.0, %v2283
        %2285 = vdwg.mxu0
        %v2286 = vadd.f32 %v2191, %v2244
        %v2287 = vadd.f32 %v2192, %v2264
        %v2288 = vadd.f32 %v2193, %v2284
        %s2289 = scalar_lea.vmem [#allocation10], 28
        %v2290 = vld [vmem:[%s2289] sm:$0xf]
        %2293 = vst [vmem:[#allocation1] ss:$2 sm:$0xff] %v2196
        %s2294 = scalar_lea.vmem [#allocation1], 16
        %2295 = vst [vmem:[%s2294] ss:$2 sm:$0xff] %v2197
        %v2296 = vld.sshfl [vmem:[#allocation1] sm:$0xff pattern:$0x75316420]
        %v2297 = vld.sshfl [vmem:[#allocation1 + $0x8] sm:$0xff pattern:$0x75316420]
        %v2298 = vld.sshfl [vmem:[#allocation1 + $0x10] sm:$0xff pattern:$0x75316420]
        %2299 = vrot.lane.b32.xlu0 %v2296, 91
        %v2300 = vpop.permute.xlu0 %2299
        %2301 = vrot.lane.b32.xlu0 %v2297, 91
        %v2302 = vpop.permute.xlu0 %2301
        %2303 = vrot.lane.b32.xlu0 %v2298, 91
        %v2304 = vpop.permute.xlu0 %2303
        %v2305 = vsel %vm2214, %v2300, %v2302
        %v2306 = vsel %vm2214, %v2302, %v2304
        %v2308 = vsel %vm939, %v2290, 0
        %v2310 = vsel %vm915, %v2305, 0
        %v2312 = vsel %vm915, %v2306, 0
        %v2314 = vsel %vm915, %v2304, 0
        %2316 = vmatpush.msra.mxu0 0.0
        %2317 = vmatpush.msra.mxu0 0.0
        %2318 = vmatpush.msra.mxu0 0.0
        %2319 = vmatpush.msra.mxu0 0.0
        %2320 = vmatpush.msra.mxu0 0.0
        %2321 = vmatpush.msra.mxu0 0.0
        %2322 = vmatpush.msra.mxu0 0.0
        %2323 = vmatpush.msra.mxu0 0.0
        %2324 = vmatpush.msra.mxu0 0.0
        %2325 = vmatpush.msra.mxu0 0.0
        %2326 = vmatpush.msra.mxu0 0.0
        %2327 = vmatpush.msra.mxu0 0.0
        %2328 = vmatpush.msra.mxu0 0.0
        %2329 = vmatpush.msra.mxu0 0.0
        %2330 = vmatpush.msra.mxu0 0.0
        %2331 = vmatpush.msra.mxu0 %v2310
        %2332 = vmatmul.f32.gmra.mxu0 %v2308
        %v2333 = vpop.f32.mrf.mxu0
        %v2334 = vadd.f32 0.0, %v2333
        %2335 = vdwg.mxu0
        %2336 = vmatpush.msra.mxu0 0.0
        %2337 = vmatpush.msra.mxu0 0.0
        %2338 = vmatpush.msra.mxu0 0.0
        %2339 = vmatpush.msra.mxu0 0.0
        %2340 = vmatpush.msra.mxu0 0.0
        %2341 = vmatpush.msra.mxu0 0.0
        %2342 = vmatpush.msra.mxu0 0.0
        %2343 = vmatpush.msra.mxu0 0.0
        %2344 = vmatpush.msra.mxu0 0.0
        %2345 = vmatpush.msra.mxu0 0.0
        %2346 = vmatpush.msra.mxu0 0.0
        %2347 = vmatpush.msra.mxu0 0.0
        %2348 = vmatpush.msra.mxu0 0.0
        %2349 = vmatpush.msra.mxu0 0.0
        %2350 = vmatpush.msra.mxu0 0.0
        %2351 = vmatpush.msra.mxu0 %v2312
        %2352 = vmatmul.f32.gmra.mxu0 %v2308
        %v2353 = vpop.f32.mrf.mxu0
        %v2354 = vadd.f32 0.0, %v2353
        %2355 = vdwg.mxu0
        %2356 = vmatpush.msra.mxu0 0.0
        %2357 = vmatpush.msra.mxu0 0.0
        %2358 = vmatpush.msra.mxu0 0.0
        %2359 = vmatpush.msra.mxu0 0.0
        %2360 = vmatpush.msra.mxu0 0.0
        %2361 = vmatpush.msra.mxu0 0.0
        %2362 = vmatpush.msra.mxu0 0.0
        %2363 = vmatpush.msra.mxu0 0.0
        %2364 = vmatpush.msra.mxu0 0.0
        %2365 = vmatpush.msra.mxu0 0.0
        %2366 = vmatpush.msra.mxu0 0.0
        %2367 = vmatpush.msra.mxu0 0.0
        %2368 = vmatpush.msra.mxu0 0.0
        %2369 = vmatpush.msra.mxu0 0.0
        %2370 = vmatpush.msra.mxu0 0.0
        %2371 = vmatpush.msra.mxu0 %v2314
        %2372 = vmatmul.f32.gmra.mxu0 %v2308
        %v2373 = vpop.f32.mrf.mxu0
        %v2374 = vadd.f32 0.0, %v2373
        %2375 = vdwg.mxu0
        %v2376 = vadd.f32 %v2286, %v2334
        %v2377 = vadd.f32 %v2287, %v2354
        %v2378 = vadd.f32 %v2288, %v2374
        %v2379 = vld [vmem:[%s459] sm:$0xff]
        %v2380 = vld [vmem:[%s459 + $0x8] sm:$0xf]
        %v2381 = vld [vmem:[#allocation2] sm:$0xff]
        %v2382 = vld [vmem:[#allocation2 + $0x8] sm:$0xf]
        %s2383 = scalar_lea.vmem %s5, 32
        %v2384 = vld [vmem:[%s2383] sm:$0xf]
        %2387 = vst [vmem:[#allocation1] ss:$2 sm:$0xff] %v2379
        %s2388 = scalar_lea.vmem [#allocation1], 16
        %2389 = vst [vmem:[%s2388] ss:$2 sm:$0xff] %v2380
        %v2390 = vld.sshfl [vmem:[#allocation1] sm:$0xff pattern:$0x75316420]
        %v2391 = vld.sshfl [vmem:[#allocation1 + $0x8] sm:$0xff pattern:$0x75316420]
        %v2392 = vld.sshfl [vmem:[#allocation1 + $0x10] sm:$0xff pattern:$0x75316420]
        %2393 = vrot.lane.b32.xlu0 %v2390, 90
        %v2394 = vpop.permute.xlu0 %2393
        %2395 = vrot.lane.b32.xlu0 %v2391, 90
        %v2396 = vpop.permute.xlu0 %2395
        %2397 = vrot.lane.b32.xlu0 %v2392, 90
        %v2398 = vpop.permute.xlu0 %2397
        %v2399 = vsel %vm853, %v2394, %v2396
        %v2400 = vsel %vm853, %v2396, %v2398
        %v2402 = vsel %vm939, %v2384, 0
        %v2404 = vsel %vm915, %v2399, 0
        %v2406 = vsel %vm915, %v2400, 0
        %v2408 = vsel %vm915, %v2398, 0
        %2410 = vmatpush.msra.mxu0 0.0
        %2411 = vmatpush.msra.mxu0 0.0
        %2412 = vmatpush.msra.mxu0 0.0
        %2413 = vmatpush.msra.mxu0 0.0
        %2414 = vmatpush.msra.mxu0 0.0
        %2415 = vmatpush.msra.mxu0 0.0
        %2416 = vmatpush.msra.mxu0 0.0
        %2417 = vmatpush.msra.mxu0 0.0
        %2418 = vmatpush.msra.mxu0 0.0
        %2419 = vmatpush.msra.mxu0 0.0
        %2420 = vmatpush.msra.mxu0 0.0
        %2421 = vmatpush.msra.mxu0 0.0
        %2422 = vmatpush.msra.mxu0 0.0
        %2423 = vmatpush.msra.mxu0 0.0
        %2424 = vmatpush.msra.mxu0 0.0
        %2425 = vmatpush.msra.mxu0 %v2404
        %2426 = vmatmul.f32.gmra.mxu0 %v2402
        %v2427 = vpop.f32.mrf.mxu0
        %v2428 = vadd.f32 0.0, %v2427
        %2429 = vdwg.mxu0
        %2430 = vmatpush.msra.mxu0 0.0
        %2431 = vmatpush.msra.mxu0 0.0
        %2432 = vmatpush.msra.mxu0 0.0
        %2433 = vmatpush.msra.mxu0 0.0
        %2434 = vmatpush.msra.mxu0 0.0
        %2435 = vmatpush.msra.mxu0 0.0
        %2436 = vmatpush.msra.mxu0 0.0
        %2437 = vmatpush.msra.mxu0 0.0
        %2438 = vmatpush.msra.mxu0 0.0
        %2439 = vmatpush.msra.mxu0 0.0
        %2440 = vmatpush.msra.mxu0 0.0
        %2441 = vmatpush.msra.mxu0 0.0
        %2442 = vmatpush.msra.mxu0 0.0
        %2443 = vmatpush.msra.mxu0 0.0
        %2444 = vmatpush.msra.mxu0 0.0
        %2445 = vmatpush.msra.mxu0 %v2406
        %2446 = vmatmul.f32.gmra.mxu0 %v2402
        %v2447 = vpop.f32.mrf.mxu0
        %v2448 = vadd.f32 0.0, %v2447
        %2449 = vdwg.mxu0
        %2450 = vmatpush.msra.mxu0 0.0
        %2451 = vmatpush.msra.mxu0 0.0
        %2452 = vmatpush.msra.mxu0 0.0
        %2453 = vmatpush.msra.mxu0 0.0
        %2454 = vmatpush.msra.mxu0 0.0
        %2455 = vmatpush.msra.mxu0 0.0
        %2456 = vmatpush.msra.mxu0 0.0
        %2457 = vmatpush.msra.mxu0 0.0
        %2458 = vmatpush.msra.mxu0 0.0
        %2459 = vmatpush.msra.mxu0 0.0
        %2460 = vmatpush.msra.mxu0 0.0
        %2461 = vmatpush.msra.mxu0 0.0
        %2462 = vmatpush.msra.mxu0 0.0
        %2463 = vmatpush.msra.mxu0 0.0
        %2464 = vmatpush.msra.mxu0 0.0
        %2465 = vmatpush.msra.mxu0 %v2408
        %2466 = vmatmul.f32.gmra.mxu0 %v2402
        %v2467 = vpop.f32.mrf.mxu0
        %v2468 = vadd.f32 0.0, %v2467
        %2469 = vdwg.mxu0
        %v2470 = vadd.f32 %v2376, %v2428
        %v2471 = vadd.f32 %v2377, %v2448
        %v2472 = vadd.f32 %v2378, %v2468
        %s2473 = scalar_lea.vmem [#allocation10], 32
        %v2474 = vld [vmem:[%s2473] sm:$0xf]
        %2477 = vst [vmem:[#allocation1] ss:$2 sm:$0xff] %v2381
        %s2478 = scalar_lea.vmem [#allocation1], 16
        %2479 = vst [vmem:[%s2478] ss:$2 sm:$0xff] %v2382
        %v2480 = vld.sshfl [vmem:[#allocation1] sm:$0xff pattern:$0x75316420]
        %v2481 = vld.sshfl [vmem:[#allocation1 + $0x8] sm:$0xff pattern:$0x75316420]
        %v2482 = vld.sshfl [vmem:[#allocation1 + $0x10] sm:$0xff pattern:$0x75316420]
        %2483 = vrot.lane.b32.xlu0 %v2480, 90
        %v2484 = vpop.permute.xlu0 %2483
        %2485 = vrot.lane.b32.xlu0 %v2481, 90
        %v2486 = vpop.permute.xlu0 %2485
        %2487 = vrot.lane.b32.xlu0 %v2482, 90
        %v2488 = vpop.permute.xlu0 %2487
        %v2489 = vsel %vm853, %v2484, %v2486
        %v2490 = vsel %vm853, %v2486, %v2488
        %v2492 = vsel %vm939, %v2474, 0
        %v2494 = vsel %vm915, %v2489, 0
        %v2496 = vsel %vm915, %v2490, 0
        %v2498 = vsel %vm915, %v2488, 0
        %2500 = vmatpush.msra.mxu0 0.0
        %2501 = vmatpush.msra.mxu0 0.0
        %2502 = vmatpush.msra.mxu0 0.0
        %2503 = vmatpush.msra.mxu0 0.0
        %2504 = vmatpush.msra.mxu0 0.0
        %2505 = vmatpush.msra.mxu0 0.0
        %2506 = vmatpush.msra.mxu0 0.0
        %2507 = vmatpush.msra.mxu0 0.0
        %2508 = vmatpush.msra.mxu0 0.0
        %2509 = vmatpush.msra.mxu0 0.0
        %2510 = vmatpush.msra.mxu0 0.0
        %2511 = vmatpush.msra.mxu0 0.0
        %2512 = vmatpush.msra.mxu0 0.0
        %2513 = vmatpush.msra.mxu0 0.0
        %2514 = vmatpush.msra.mxu0 0.0
        %2515 = vmatpush.msra.mxu0 %v2494
        %2516 = vmatmul.f32.gmra.mxu0 %v2492
        %v2517 = vpop.f32.mrf.mxu0
        %v2518 = vadd.f32 0.0, %v2517
        %2519 = vdwg.mxu0
        %2520 = vmatpush.msra.mxu0 0.0
        %2521 = vmatpush.msra.mxu0 0.0
        %2522 = vmatpush.msra.mxu0 0.0
        %2523 = vmatpush.msra.mxu0 0.0
        %2524 = vmatpush.msra.mxu0 0.0
        %2525 = vmatpush.msra.mxu0 0.0
        %2526 = vmatpush.msra.mxu0 0.0
        %2527 = vmatpush.msra.mxu0 0.0
        %2528 = vmatpush.msra.mxu0 0.0
        %2529 = vmatpush.msra.mxu0 0.0
        %2530 = vmatpush.msra.mxu0 0.0
        %2531 = vmatpush.msra.mxu0 0.0
        %2532 = vmatpush.msra.mxu0 0.0
        %2533 = vmatpush.msra.mxu0 0.0
        %2534 = vmatpush.msra.mxu0 0.0
        %2535 = vmatpush.msra.mxu0 %v2496
        %2536 = vmatmul.f32.gmra.mxu0 %v2492
        %v2537 = vpop.f32.mrf.mxu0
        %v2538 = vadd.f32 0.0, %v2537
        %2539 = vdwg.mxu0
        %2540 = vmatpush.msra.mxu0 0.0
        %2541 = vmatpush.msra.mxu0 0.0
        %2542 = vmatpush.msra.mxu0 0.0
        %2543 = vmatpush.msra.mxu0 0.0
        %2544 = vmatpush.msra.mxu0 0.0
        %2545 = vmatpush.msra.mxu0 0.0
        %2546 = vmatpush.msra.mxu0 0.0
        %2547 = vmatpush.msra.mxu0 0.0
        %2548 = vmatpush.msra.mxu0 0.0
        %2549 = vmatpush.msra.mxu0 0.0
        %2550 = vmatpush.msra.mxu0 0.0
        %2551 = vmatpush.msra.mxu0 0.0
        %2552 = vmatpush.msra.mxu0 0.0
        %2553 = vmatpush.msra.mxu0 0.0
        %2554 = vmatpush.msra.mxu0 0.0
        %2555 = vmatpush.msra.mxu0 %v2498
        %2556 = vmatmul.f32.gmra.mxu0 %v2492
        %v2557 = vpop.f32.mrf.mxu0
        %v2558 = vadd.f32 0.0, %v2557
        %2559 = vdwg.mxu0
        %v2560 = vadd.f32 %v2470, %v2518
        %v2561 = vadd.f32 %v2471, %v2538
        %v2562 = vadd.f32 %v2472, %v2558
        %v2563 = vld [vmem:[%s7] sm:$0xf]
        %2565 = vset.pattern.permute.xlu0 0
        %2566 = vperm.xlu0 %2565, %v2563
        %v2567 = vpop.permute.xlu0 %2566
        %v2569 = vmul.f32 %v2560, %v2567
        %v2570 = vmul.f32 %v2561, %v2567
        %v2571 = vmul.f32 %v2562, %v2567
        %v2572 = vld [vmem:[%s8] sm:$0xf]
        %2574 = vset.pattern.permute.xlu0 0
        %2575 = vperm.xlu0 %2574, %v2572
        %v2576 = vpop.permute.xlu0 %2575
        %v2578 = vadd.f32 %v2569, %v2576
        %v2579 = vadd.f32 %v2570, %v2576
        %v2580 = vadd.f32 %v2571, %v2576
        %v2581 = vmax.f32 %v2578, 0.0
        %v2582 = vmax.f32 %v2579, 0.0
        %v2583 = vmax.f32 %v2580, 0.0
        %v2584 = vld [vmem:[%s4] sm:$0x7]
        %v2586 = vperm.slane %v2584, 0
        %v2587 = vperm.slane %v2584, 1
        %v2588 = vperm.slane %v2584, 2
        %v2592 = vmul.f32 %v2581, %v2586
        %v2593 = vmul.f32 %v2582, %v2587
        %v2594 = vmul.f32 %v2583, %v2588
        %v2598 = vrot.slane %v2593, 4
        %v2599 = vsel %vm915, %v2592, %v2598
        %2600 = vrot.lane.b32.xlu0 %v2599, 19
        %v2601 = vpop.permute.xlu0 %2600
        %2602 = vrot.lane.b32.xlu0 %v2594, 19
        %v2603 = vpop.permute.xlu0 %2602
        %v2604 = vrot.slane %v2601, 4
        %vm2605 = vcmask 154624
        %v2606 = vsel %vm2605, %v2604, %v2601
        %v2607 = vsel %vm2605, %v2604, %v2603
        %vm2610 = vcmask 1043608
        %vm2611 = vcmask 1047556
        %vm2612 = vmor %vm2611, %vm2610
        %2613 = vst.msk [vmem:[#allocation3] sm:$0xff] %vm2612, %v2606
        %vm2614 = vcmask 412672
        %2615 = vst.msk [vmem:[#allocation3 + $0x8] sm:$0xf] %vm2614, %v2607
        %v2616 = vld [vmem:[#allocation3] sm:$0xff]
        %v2617 = vld [vmem:[#allocation3 + $0x8] sm:$0xf]
        %v2618 = vld [vmem:[#allocation12] sm:$0xf]
        %s2619 = scalar_lea.vmem [#allocation12], 4
        %v2620 = vld [vmem:[%s2619] sm:$0xf]
        %2623 = vst [vmem:[#allocation1] ss:$2 sm:$0xff] %v2616
        %s2624 = scalar_lea.vmem [#allocation1], 16
        %2625 = vst [vmem:[%s2624] ss:$2 sm:$0xff] %v2617
        %v2626 = vld.sshfl [vmem:[#allocation1] sm:$0xff pattern:$0x75316420]
        %v2627 = vld.sshfl [vmem:[#allocation1 + $0x8] sm:$0xff pattern:$0x75316420]
        %v2628 = vld.sshfl [vmem:[#allocation1 + $0x10] sm:$0xff pattern:$0x75316420]
        %2629 = vrot.lane.b32.xlu0 %v2626, 127
        %v2630 = vpop.permute.xlu0 %2629
        %2631 = vrot.lane.b32.xlu0 %v2627, 127
        %v2632 = vpop.permute.xlu0 %2631
        %2633 = vrot.lane.b32.xlu0 %v2628, 127
        %v2634 = vpop.permute.xlu0 %2633
        %v2635 = vsel %vm1106, %v2630, %v2632
        %v2636 = vsel %vm1106, %v2632, %v2634
        %v2638 = vsel %vm939, %v2620, 0
        %v2640 = vsel %vm915, %v2635, 0
        %v2642 = vsel %vm915, %v2636, 0
        %v2644 = vsel %vm915, %v2634, 0
        %2646 = vmatpush.msra.mxu0 0.0
        %2647 = vmatpush.msra.mxu0 0.0
        %2648 = vmatpush.msra.mxu0 0.0
        %2649 = vmatpush.msra.mxu0 0.0
        %2650 = vmatpush.msra.mxu0 0.0
        %2651 = vmatpush.msra.mxu0 0.0
        %2652 = vmatpush.msra.mxu0 0.0
        %2653 = vmatpush.msra.mxu0 0.0
        %2654 = vmatpush.msra.mxu0 0.0
        %2655 = vmatpush.msra.mxu0 0.0
        %2656 = vmatpush.msra.mxu0 0.0
        %2657 = vmatpush.msra.mxu0 0.0
        %2658 = vmatpush.msra.mxu0 0.0
        %2659 = vmatpush.msra.mxu0 0.0
        %2660 = vmatpush.msra.mxu0 0.0
        %2661 = vmatpush.msra.mxu0 %v2640
        %2662 = vmatmul.f32.gmra.mxu0 %v2638
        %v2663 = vpop.f32.mrf.mxu0
        %v2664 = vadd.f32 0.0, %v2663
        %2665 = vdwg.mxu0
        %2666 = vmatpush.msra.mxu0 0.0
        %2667 = vmatpush.msra.mxu0 0.0
        %2668 = vmatpush.msra.mxu0 0.0
        %2669 = vmatpush.msra.mxu0 0.0
        %2670 = vmatpush.msra.mxu0 0.0
        %2671 = vmatpush.msra.mxu0 0.0
        %2672 = vmatpush.msra.mxu0 0.0
        %2673 = vmatpush.msra.mxu0 0.0
        %2674 = vmatpush.msra.mxu0 0.0
        %2675 = vmatpush.msra.mxu0 0.0
        %2676 = vmatpush.msra.mxu0 0.0
        %2677 = vmatpush.msra.mxu0 0.0
        %2678 = vmatpush.msra.mxu0 0.0
        %2679 = vmatpush.msra.mxu0 0.0
        %2680 = vmatpush.msra.mxu0 0.0
        %2681 = vmatpush.msra.mxu0 %v2642
        %2682 = vmatmul.f32.gmra.mxu0 %v2638
        %v2683 = vpop.f32.mrf.mxu0
        %v2684 = vadd.f32 0.0, %v2683
        %2685 = vdwg.mxu0
        %2686 = vmatpush.msra.mxu0 0.0
        %2687 = vmatpush.msra.mxu0 0.0
        %2688 = vmatpush.msra.mxu0 0.0
        %2689 = vmatpush.msra.mxu0 0.0
        %2690 = vmatpush.msra.mxu0 0.0
        %2691 = vmatpush.msra.mxu0 0.0
        %2692 = vmatpush.msra.mxu0 0.0
        %2693 = vmatpush.msra.mxu0 0.0
        %2694 = vmatpush.msra.mxu0 0.0
        %2695 = vmatpush.msra.mxu0 0.0
        %2696 = vmatpush.msra.mxu0 0.0
        %2697 = vmatpush.msra.mxu0 0.0
        %2698 = vmatpush.msra.mxu0 0.0
        %2699 = vmatpush.msra.mxu0 0.0
        %2700 = vmatpush.msra.mxu0 0.0
        %2701 = vmatpush.msra.mxu0 %v2644
        %2702 = vmatmul.f32.gmra.mxu0 %v2638
        %v2703 = vpop.f32.mrf.mxu0
        %v2704 = vadd.f32 0.0, %v2703
        %2705 = vdwg.mxu0
        %2706 = vst [vmem:[#allocation1] ss:$2 sm:$0xff] %v2616
        %s2707 = scalar_lea.vmem [#allocation1], 16
        %2708 = vst [vmem:[%s2707] ss:$2 sm:$0xff] %v2617
        %v2709 = vld.sshfl [vmem:[#allocation1] sm:$0xff pattern:$0x75316420]
        %v2710 = vld.sshfl [vmem:[#allocation1 + $0x8] sm:$0xff pattern:$0x75316420]
        %v2711 = vld.sshfl [vmem:[#allocation1 + $0x10] sm:$0xff pattern:$0x75316420]
        %v2713 = vsel %vm939, %v2618, 0
        %v2715 = vsel %vm915, %v2709, 0
        %v2717 = vsel %vm915, %v2710, 0
        %v2719 = vsel %vm915, %v2711, 0
        %2721 = vmatpush.msra.mxu0 0.0
        %2722 = vmatpush.msra.mxu0 0.0
        %2723 = vmatpush.msra.mxu0 0.0
        %2724 = vmatpush.msra.mxu0 0.0
        %2725 = vmatpush.msra.mxu0 0.0
        %2726 = vmatpush.msra.mxu0 0.0
        %2727 = vmatpush.msra.mxu0 0.0
        %2728 = vmatpush.msra.mxu0 0.0
        %2729 = vmatpush.msra.mxu0 0.0
        %2730 = vmatpush.msra.mxu0 0.0
        %2731 = vmatpush.msra.mxu0 0.0
        %2732 = vmatpush.msra.mxu0 0.0
        %2733 = vmatpush.msra.mxu0 0.0
        %2734 = vmatpush.msra.mxu0 0.0
        %2735 = vmatpush.msra.mxu0 0.0
        %2736 = vmatpush.msra.mxu0 %v2715
        %2737 = vmatmul.f32.gmra.mxu0 %v2713
        %v2738 = vpop.f32.mrf.mxu0
        %v2739 = vadd.f32 %v2664, %v2738
        %2740 = vdwg.mxu0
        %2741 = vmatpush.msra.mxu0 0.0
        %2742 = vmatpush.msra.mxu0 0.0
        %2743 = vmatpush.msra.mxu0 0.0
        %2744 = vmatpush.msra.mxu0 0.0
        %2745 = vmatpush.msra.mxu0 0.0
        %2746 = vmatpush.msra.mxu0 0.0
        %2747 = vmatpush.msra.mxu0 0.0
        %2748 = vmatpush.msra.mxu0 0.0
        %2749 = vmatpush.msra.mxu0 0.0
        %2750 = vmatpush.msra.mxu0 0.0
        %2751 = vmatpush.msra.mxu0 0.0
        %2752 = vmatpush.msra.mxu0 0.0
        %2753 = vmatpush.msra.mxu0 0.0
        %2754 = vmatpush.msra.mxu0 0.0
        %2755 = vmatpush.msra.mxu0 0.0
        %2756 = vmatpush.msra.mxu0 %v2717
        %2757 = vmatmul.f32.gmra.mxu0 %v2713
        %v2758 = vpop.f32.mrf.mxu0
        %v2759 = vadd.f32 %v2684, %v2758
        %2760 = vdwg.mxu0
        %2761 = vmatpush.msra.mxu0 0.0
        %2762 = vmatpush.msra.mxu0 0.0
        %2763 = vmatpush.msra.mxu0 0.0
        %2764 = vmatpush.msra.mxu0 0.0
        %2765 = vmatpush.msra.mxu0 0.0
        %2766 = vmatpush.msra.mxu0 0.0
        %2767 = vmatpush.msra.mxu0 0.0
        %2768 = vmatpush.msra.mxu0 0.0
        %2769 = vmatpush.msra.mxu0 0.0
        %2770 = vmatpush.msra.mxu0 0.0
        %2771 = vmatpush.msra.mxu0 0.0
        %2772 = vmatpush.msra.mxu0 0.0
        %2773 = vmatpush.msra.mxu0 0.0
        %2774 = vmatpush.msra.mxu0 0.0
        %2775 = vmatpush.msra.mxu0 0.0
        %2776 = vmatpush.msra.mxu0 %v2719
        %2777 = vmatmul.f32.gmra.mxu0 %v2713
        %v2778 = vpop.f32.mrf.mxu0
        %v2779 = vadd.f32 %v2704, %v2778
        %2780 = vdwg.mxu0
        %v2781 = vld [vmem:[#allocation3] sm:$0xff]
        %v2782 = vld [vmem:[#allocation3 + $0x8] sm:$0xf]
        %s2783 = scalar_lea.vmem [#allocation12], 8
        %v2784 = vld [vmem:[%s2783] sm:$0xf]
        %2787 = vst [vmem:[#allocation1] ss:$2 sm:$0xff] %v2781
        %s2788 = scalar_lea.vmem [#allocation1], 16
        %2789 = vst [vmem:[%s2788] ss:$2 sm:$0xff] %v2782
        %v2790 = vld.sshfl [vmem:[#allocation1] sm:$0xff pattern:$0x75316420]
        %v2791 = vld.sshfl [vmem:[#allocation1 + $0x8] sm:$0xff pattern:$0x75316420]
        %v2792 = vld.sshfl [vmem:[#allocation1 + $0x10] sm:$0xff pattern:$0x75316420]
        %2793 = vrot.lane.b32.xlu0 %v2790, 126
        %v2794 = vpop.permute.xlu0 %2793
        %2795 = vrot.lane.b32.xlu0 %v2791, 126
        %v2796 = vpop.permute.xlu0 %2795
        %2797 = vrot.lane.b32.xlu0 %v2792, 126
        %v2798 = vpop.permute.xlu0 %2797
        %v2799 = vsel %vm857, %v2794, %v2796
        %v2800 = vsel %vm857, %v2796, %v2798
        %v2802 = vsel %vm939, %v2784, 0
        %v2804 = vsel %vm915, %v2799, 0
        %v2806 = vsel %vm915, %v2800, 0
        %v2808 = vsel %vm915, %v2798, 0
        %2810 = vmatpush.msra.mxu0 0.0
        %2811 = vmatpush.msra.mxu0 0.0
        %2812 = vmatpush.msra.mxu0 0.0
        %2813 = vmatpush.msra.mxu0 0.0
        %2814 = vmatpush.msra.mxu0 0.0
        %2815 = vmatpush.msra.mxu0 0.0
        %2816 = vmatpush.msra.mxu0 0.0
        %2817 = vmatpush.msra.mxu0 0.0
        %2818 = vmatpush.msra.mxu0 0.0
        %2819 = vmatpush.msra.mxu0 0.0
        %2820 = vmatpush.msra.mxu0 0.0
        %2821 = vmatpush.msra.mxu0 0.0
        %2822 = vmatpush.msra.mxu0 0.0
        %2823 = vmatpush.msra.mxu0 0.0
        %2824 = vmatpush.msra.mxu0 0.0
        %2825 = vmatpush.msra.mxu0 %v2804
        %2826 = vmatmul.f32.gmra.mxu0 %v2802
        %v2827 = vpop.f32.mrf.mxu0
        %v2828 = vadd.f32 0.0, %v2827
        %2829 = vdwg.mxu0
        %2830 = vmatpush.msra.mxu0 0.0
        %2831 = vmatpush.msra.mxu0 0.0
        %2832 = vmatpush.msra.mxu0 0.0
        %2833 = vmatpush.msra.mxu0 0.0
        %2834 = vmatpush.msra.mxu0 0.0
        %2835 = vmatpush.msra.mxu0 0.0
        %2836 = vmatpush.msra.mxu0 0.0
        %2837 = vmatpush.msra.mxu0 0.0
        %2838 = vmatpush.msra.mxu0 0.0
        %2839 = vmatpush.msra.mxu0 0.0
        %2840 = vmatpush.msra.mxu0 0.0
        %2841 = vmatpush.msra.mxu0 0.0
        %2842 = vmatpush.msra.mxu0 0.0
        %2843 = vmatpush.msra.mxu0 0.0
        %2844 = vmatpush.msra.mxu0 0.0
        %2845 = vmatpush.msra.mxu0 %v2806
        %2846 = vmatmul.f32.gmra.mxu0 %v2802
        %v2847 = vpop.f32.mrf.mxu0
        %v2848 = vadd.f32 0.0, %v2847
        %2849 = vdwg.mxu0
        %2850 = vmatpush.msra.mxu0 0.0
        %2851 = vmatpush.msra.mxu0 0.0
        %2852 = vmatpush.msra.mxu0 0.0
        %2853 = vmatpush.msra.mxu0 0.0
        %2854 = vmatpush.msra.mxu0 0.0
        %2855 = vmatpush.msra.mxu0 0.0
        %2856 = vmatpush.msra.mxu0 0.0
        %2857 = vmatpush.msra.mxu0 0.0
        %2858 = vmatpush.msra.mxu0 0.0
        %2859 = vmatpush.msra.mxu0 0.0
        %2860 = vmatpush.msra.mxu0 0.0
        %2861 = vmatpush.msra.mxu0 0.0
        %2862 = vmatpush.msra.mxu0 0.0
        %2863 = vmatpush.msra.mxu0 0.0
        %2864 = vmatpush.msra.mxu0 0.0
        %2865 = vmatpush.msra.mxu0 %v2808
        %2866 = vmatmul.f32.gmra.mxu0 %v2802
        %v2867 = vpop.f32.mrf.mxu0
        %v2868 = vadd.f32 0.0, %v2867
        %2869 = vdwg.mxu0
        %v2870 = vadd.f32 %v2739, %v2828
        %v2871 = vadd.f32 %v2759, %v2848
        %v2872 = vadd.f32 %v2779, %v2868
        %v2873 = vld [vmem:[#allocation3] sm:$0xff]
        %v2874 = vld [vmem:[#allocation3 + $0x8] sm:$0xf]
        %s2875 = scalar_lea.vmem [#allocation12], 12
        %v2876 = vld [vmem:[%s2875] sm:$0xf]
        %2879 = vst [vmem:[#allocation1] ss:$2 sm:$0xff] %v2873
        %s2880 = scalar_lea.vmem [#allocation1], 16
        %2881 = vst [vmem:[%s2880] ss:$2 sm:$0xff] %v2874
        %v2882 = vld.sshfl [vmem:[#allocation1] sm:$0xff pattern:$0x75316420]
        %v2883 = vld.sshfl [vmem:[#allocation1 + $0x8] sm:$0xff pattern:$0x75316420]
        %v2884 = vld.sshfl [vmem:[#allocation1 + $0x10] sm:$0xff pattern:$0x75316420]
        %2885 = vrot.lane.b32.xlu0 %v2882, 110
        %v2886 = vpop.permute.xlu0 %2885
        %2887 = vrot.lane.b32.xlu0 %v2883, 110
        %v2888 = vpop.permute.xlu0 %2887
        %2889 = vrot.lane.b32.xlu0 %v2884, 110
        %v2890 = vpop.permute.xlu0 %2889
        %v2891 = vsel %vm1475, %v2886, %v2888
        %v2892 = vsel %vm1475, %v2888, %v2890
        %v2894 = vsel %vm939, %v2876, 0
        %v2896 = vsel %vm915, %v2891, 0
        %v2898 = vsel %vm915, %v2892, 0
        %v2900 = vsel %vm915, %v2890, 0
        %2902 = vmatpush.msra.mxu0 0.0
        %2903 = vmatpush.msra.mxu0 0.0
        %2904 = vmatpush.msra.mxu0 0.0
        %2905 = vmatpush.msra.mxu0 0.0
        %2906 = vmatpush.msra.mxu0 0.0
        %2907 = vmatpush.msra.mxu0 0.0
        %2908 = vmatpush.msra.mxu0 0.0
        %2909 = vmatpush.msra.mxu0 0.0
        %2910 = vmatpush.msra.mxu0 0.0
        %2911 = vmatpush.msra.mxu0 0.0
        %2912 = vmatpush.msra.mxu0 0.0
        %2913 = vmatpush.msra.mxu0 0.0
        %2914 = vmatpush.msra.mxu0 0.0
        %2915 = vmatpush.msra.mxu0 0.0
        %2916 = vmatpush.msra.mxu0 0.0
        %2917 = vmatpush.msra.mxu0 %v2896
        %2918 = vmatmul.f32.gmra.mxu0 %v2894
        %v2919 = vpop.f32.mrf.mxu0
        %v2920 = vadd.f32 0.0, %v2919
        %2921 = vdwg.mxu0
        %2922 = vmatpush.msra.mxu0 0.0
        %2923 = vmatpush.msra.mxu0 0.0
        %2924 = vmatpush.msra.mxu0 0.0
        %2925 = vmatpush.msra.mxu0 0.0
        %2926 = vmatpush.msra.mxu0 0.0
        %2927 = vmatpush.msra.mxu0 0.0
        %2928 = vmatpush.msra.mxu0 0.0
        %2929 = vmatpush.msra.mxu0 0.0
        %2930 = vmatpush.msra.mxu0 0.0
        %2931 = vmatpush.msra.mxu0 0.0
        %2932 = vmatpush.msra.mxu0 0.0
        %2933 = vmatpush.msra.mxu0 0.0
        %2934 = vmatpush.msra.mxu0 0.0
        %2935 = vmatpush.msra.mxu0 0.0
        %2936 = vmatpush.msra.mxu0 0.0
        %2937 = vmatpush.msra.mxu0 %v2898
        %2938 = vmatmul.f32.gmra.mxu0 %v2894
        %v2939 = vpop.f32.mrf.mxu0
        %v2940 = vadd.f32 0.0, %v2939
        %2941 = vdwg.mxu0
        %2942 = vmatpush.msra.mxu0 0.0
        %2943 = vmatpush.msra.mxu0 0.0
        %2944 = vmatpush.msra.mxu0 0.0
        %2945 = vmatpush.msra.mxu0 0.0
        %2946 = vmatpush.msra.mxu0 0.0
        %2947 = vmatpush.msra.mxu0 0.0
        %2948 = vmatpush.msra.mxu0 0.0
        %2949 = vmatpush.msra.mxu0 0.0
        %2950 = vmatpush.msra.mxu0 0.0
        %2951 = vmatpush.msra.mxu0 0.0
        %2952 = vmatpush.msra.mxu0 0.0
        %2953 = vmatpush.msra.mxu0 0.0
        %2954 = vmatpush.msra.mxu0 0.0
        %2955 = vmatpush.msra.mxu0 0.0
        %2956 = vmatpush.msra.mxu0 0.0
        %2957 = vmatpush.msra.mxu0 %v2900
        %2958 = vmatmul.f32.gmra.mxu0 %v2894
        %v2959 = vpop.f32.mrf.mxu0
        %v2960 = vadd.f32 0.0, %v2959
        %2961 = vdwg.mxu0
        %v2962 = vadd.f32 %v2870, %v2920
        %v2963 = vadd.f32 %v2871, %v2940
        %v2964 = vadd.f32 %v2872, %v2960
        %v2965 = vld [vmem:[#allocation3] sm:$0xff]
        %v2966 = vld [vmem:[#allocation3 + $0x8] sm:$0xf]
        %s2967 = scalar_lea.vmem [#allocation12], 16
        %v2968 = vld [vmem:[%s2967] sm:$0xf]
        %2971 = vst [vmem:[#allocation1] ss:$2 sm:$0xff] %v2965
        %s2972 = scalar_lea.vmem [#allocation1], 16
        %2973 = vst [vmem:[%s2972] ss:$2 sm:$0xff] %v2966
        %v2974 = vld.sshfl [vmem:[#allocation1] sm:$0xff pattern:$0x75316420]
        %v2975 = vld.sshfl [vmem:[#allocation1 + $0x8] sm:$0xff pattern:$0x75316420]
        %v2976 = vld.sshfl [vmem:[#allocation1 + $0x10] sm:$0xff pattern:$0x75316420]
        %2977 = vrot.lane.b32.xlu0 %v2974, 109
        %v2978 = vpop.permute.xlu0 %2977
        %2979 = vrot.lane.b32.xlu0 %v2975, 109
        %v2980 = vpop.permute.xlu0 %2979
        %2981 = vrot.lane.b32.xlu0 %v2976, 109
        %v2982 = vpop.permute.xlu0 %2981
        %v2983 = vsel %vm1660, %v2978, %v2980
        %v2984 = vsel %vm1660, %v2980, %v2982
        %v2986 = vsel %vm939, %v2968, 0
        %v2988 = vsel %vm915, %v2983, 0
        %v2990 = vsel %vm915, %v2984, 0
        %v2992 = vsel %vm915, %v2982, 0
        %2994 = vmatpush.msra.mxu0 0.0
        %2995 = vmatpush.msra.mxu0 0.0
        %2996 = vmatpush.msra.mxu0 0.0
        %2997 = vmatpush.msra.mxu0 0.0
        %2998 = vmatpush.msra.mxu0 0.0
        %2999 = vmatpush.msra.mxu0 0.0
        %3000 = vmatpush.msra.mxu0 0.0
        %3001 = vmatpush.msra.mxu0 0.0
        %3002 = vmatpush.msra.mxu0 0.0
        %3003 = vmatpush.msra.mxu0 0.0
        %3004 = vmatpush.msra.mxu0 0.0
        %3005 = vmatpush.msra.mxu0 0.0
        %3006 = vmatpush.msra.mxu0 0.0
        %3007 = vmatpush.msra.mxu0 0.0
        %3008 = vmatpush.msra.mxu0 0.0
        %3009 = vmatpush.msra.mxu0 %v2988
        %3010 = vmatmul.f32.gmra.mxu0 %v2986
        %v3011 = vpop.f32.mrf.mxu0
        %v3012 = vadd.f32 0.0, %v3011
        %3013 = vdwg.mxu0
        %3014 = vmatpush.msra.mxu0 0.0
        %3015 = vmatpush.msra.mxu0 0.0
        %3016 = vmatpush.msra.mxu0 0.0
        %3017 = vmatpush.msra.mxu0 0.0
        %3018 = vmatpush.msra.mxu0 0.0
        %3019 = vmatpush.msra.mxu0 0.0
        %3020 = vmatpush.msra.mxu0 0.0
        %3021 = vmatpush.msra.mxu0 0.0
        %3022 = vmatpush.msra.mxu0 0.0
        %3023 = vmatpush.msra.mxu0 0.0
        %3024 = vmatpush.msra.mxu0 0.0
        %3025 = vmatpush.msra.mxu0 0.0
        %3026 = vmatpush.msra.mxu0 0.0
        %3027 = vmatpush.msra.mxu0 0.0
        %3028 = vmatpush.msra.mxu0 0.0
        %3029 = vmatpush.msra.mxu0 %v2990
        %3030 = vmatmul.f32.gmra.mxu0 %v2986
        %v3031 = vpop.f32.mrf.mxu0
        %v3032 = vadd.f32 0.0, %v3031
        %3033 = vdwg.mxu0
        %3034 = vmatpush.msra.mxu0 0.0
        %3035 = vmatpush.msra.mxu0 0.0
        %3036 = vmatpush.msra.mxu0 0.0
        %3037 = vmatpush.msra.mxu0 0.0
        %3038 = vmatpush.msra.mxu0 0.0
        %3039 = vmatpush.msra.mxu0 0.0
        %3040 = vmatpush.msra.mxu0 0.0
        %3041 = vmatpush.msra.mxu0 0.0
        %3042 = vmatpush.msra.mxu0 0.0
        %3043 = vmatpush.msra.mxu0 0.0
        %3044 = vmatpush.msra.mxu0 0.0
        %3045 = vmatpush.msra.mxu0 0.0
        %3046 = vmatpush.msra.mxu0 0.0
        %3047 = vmatpush.msra.mxu0 0.0
        %3048 = vmatpush.msra.mxu0 0.0
        %3049 = vmatpush.msra.mxu0 %v2992
        %3050 = vmatmul.f32.gmra.mxu0 %v2986
        %v3051 = vpop.f32.mrf.mxu0
        %v3052 = vadd.f32 0.0, %v3051
        %3053 = vdwg.mxu0
        %v3054 = vadd.f32 %v2962, %v3012
        %v3055 = vadd.f32 %v2963, %v3032
        %v3056 = vadd.f32 %v2964, %v3052
        %v3057 = vld [vmem:[#allocation3] sm:$0xff]
        %v3058 = vld [vmem:[#allocation3 + $0x8] sm:$0xf]
        %s3059 = scalar_lea.vmem [#allocation12], 20
        %v3060 = vld [vmem:[%s3059] sm:$0xf]
        %3063 = vst [vmem:[#allocation1] ss:$2 sm:$0xff] %v3057
        %s3064 = scalar_lea.vmem [#allocation1], 16
        %3065 = vst [vmem:[%s3064] ss:$2 sm:$0xff] %v3058
        %v3066 = vld.sshfl [vmem:[#allocation1] sm:$0xff pattern:$0x75316420]
        %v3067 = vld.sshfl [vmem:[#allocation1 + $0x8] sm:$0xff pattern:$0x75316420]
        %v3068 = vld.sshfl [vmem:[#allocation1 + $0x10] sm:$0xff pattern:$0x75316420]
        %3069 = vrot.lane.b32.xlu0 %v3066, 108
        %v3070 = vpop.permute.xlu0 %3069
        %3071 = vrot.lane.b32.xlu0 %v3067, 108
        %v3072 = vpop.permute.xlu0 %3071
        %3073 = vrot.lane.b32.xlu0 %v3068, 108
        %v3074 = vpop.permute.xlu0 %3073
        %v3075 = vsel %vm855, %v3070, %v3072
        %v3076 = vsel %vm855, %v3072, %v3074
        %v3078 = vsel %vm939, %v3060, 0
        %v3080 = vsel %vm915, %v3075, 0
        %v3082 = vsel %vm915, %v3076, 0
        %v3084 = vsel %vm915, %v3074, 0
        %3086 = vmatpush.msra.mxu0 0.0
        %3087 = vmatpush.msra.mxu0 0.0
        %3088 = vmatpush.msra.mxu0 0.0
        %3089 = vmatpush.msra.mxu0 0.0
        %3090 = vmatpush.msra.mxu0 0.0
        %3091 = vmatpush.msra.mxu0 0.0
        %3092 = vmatpush.msra.mxu0 0.0
        %3093 = vmatpush.msra.mxu0 0.0
        %3094 = vmatpush.msra.mxu0 0.0
        %3095 = vmatpush.msra.mxu0 0.0
        %3096 = vmatpush.msra.mxu0 0.0
        %3097 = vmatpush.msra.mxu0 0.0
        %3098 = vmatpush.msra.mxu0 0.0
        %3099 = vmatpush.msra.mxu0 0.0
        %3100 = vmatpush.msra.mxu0 0.0
        %3101 = vmatpush.msra.mxu0 %v3080
        %3102 = vmatmul.f32.gmra.mxu0 %v3078
        %v3103 = vpop.f32.mrf.mxu0
        %v3104 = vadd.f32 0.0, %v3103
        %3105 = vdwg.mxu0
        %3106 = vmatpush.msra.mxu0 0.0
        %3107 = vmatpush.msra.mxu0 0.0
        %3108 = vmatpush.msra.mxu0 0.0
        %3109 = vmatpush.msra.mxu0 0.0
        %3110 = vmatpush.msra.mxu0 0.0
        %3111 = vmatpush.msra.mxu0 0.0
        %3112 = vmatpush.msra.mxu0 0.0
        %3113 = vmatpush.msra.mxu0 0.0
        %3114 = vmatpush.msra.mxu0 0.0
        %3115 = vmatpush.msra.mxu0 0.0
        %3116 = vmatpush.msra.mxu0 0.0
        %3117 = vmatpush.msra.mxu0 0.0
        %3118 = vmatpush.msra.mxu0 0.0
        %3119 = vmatpush.msra.mxu0 0.0
        %3120 = vmatpush.msra.mxu0 0.0
        %3121 = vmatpush.msra.mxu0 %v3082
        %3122 = vmatmul.f32.gmra.mxu0 %v3078
        %v3123 = vpop.f32.mrf.mxu0
        %v3124 = vadd.f32 0.0, %v3123
        %3125 = vdwg.mxu0
        %3126 = vmatpush.msra.mxu0 0.0
        %3127 = vmatpush.msra.mxu0 0.0
        %3128 = vmatpush.msra.mxu0 0.0
        %3129 = vmatpush.msra.mxu0 0.0
        %3130 = vmatpush.msra.mxu0 0.0
        %3131 = vmatpush.msra.mxu0 0.0
        %3132 = vmatpush.msra.mxu0 0.0
        %3133 = vmatpush.msra.mxu0 0.0
        %3134 = vmatpush.msra.mxu0 0.0
        %3135 = vmatpush.msra.mxu0 0.0
        %3136 = vmatpush.msra.mxu0 0.0
        %3137 = vmatpush.msra.mxu0 0.0
        %3138 = vmatpush.msra.mxu0 0.0
        %3139 = vmatpush.msra.mxu0 0.0
        %3140 = vmatpush.msra.mxu0 0.0
        %3141 = vmatpush.msra.mxu0 %v3084
        %3142 = vmatmul.f32.gmra.mxu0 %v3078
        %v3143 = vpop.f32.mrf.mxu0
        %v3144 = vadd.f32 0.0, %v3143
        %3145 = vdwg.mxu0
        %v3146 = vadd.f32 %v3054, %v3104
        %v3147 = vadd.f32 %v3055, %v3124
        %v3148 = vadd.f32 %v3056, %v3144
        %v3149 = vld [vmem:[#allocation3] sm:$0xff]
        %v3150 = vld [vmem:[#allocation3 + $0x8] sm:$0xf]
        %s3151 = scalar_lea.vmem [#allocation12], 24
        %v3152 = vld [vmem:[%s3151] sm:$0xf]
        %3155 = vst [vmem:[#allocation1] ss:$2 sm:$0xff] %v3149
        %s3156 = scalar_lea.vmem [#allocation1], 16
        %3157 = vst [vmem:[%s3156] ss:$2 sm:$0xff] %v3150
        %v3158 = vld.sshfl [vmem:[#allocation1] sm:$0xff pattern:$0x75316420]
        %v3159 = vld.sshfl [vmem:[#allocation1 + $0x8] sm:$0xff pattern:$0x75316420]
        %v3160 = vld.sshfl [vmem:[#allocation1 + $0x10] sm:$0xff pattern:$0x75316420]
        %3161 = vrot.lane.b32.xlu0 %v3158, 92
        %v3162 = vpop.permute.xlu0 %3161
        %3163 = vrot.lane.b32.xlu0 %v3159, 92
        %v3164 = vpop.permute.xlu0 %3163
        %3165 = vrot.lane.b32.xlu0 %v3160, 92
        %v3166 = vpop.permute.xlu0 %3165
        %v3167 = vsel %vm2029, %v3162, %v3164
        %v3168 = vsel %vm2029, %v3164, %v3166
        %v3170 = vsel %vm939, %v3152, 0
        %v3172 = vsel %vm915, %v3167, 0
        %v3174 = vsel %vm915, %v3168, 0
        %v3176 = vsel %vm915, %v3166, 0
        %3178 = vmatpush.msra.mxu0 0.0
        %3179 = vmatpush.msra.mxu0 0.0
        %3180 = vmatpush.msra.mxu0 0.0
        %3181 = vmatpush.msra.mxu0 0.0
        %3182 = vmatpush.msra.mxu0 0.0
        %3183 = vmatpush.msra.mxu0 0.0
        %3184 = vmatpush.msra.mxu0 0.0
        %3185 = vmatpush.msra.mxu0 0.0
        %3186 = vmatpush.msra.mxu0 0.0
        %3187 = vmatpush.msra.mxu0 0.0
        %3188 = vmatpush.msra.mxu0 0.0
        %3189 = vmatpush.msra.mxu0 0.0
        %3190 = vmatpush.msra.mxu0 0.0
        %3191 = vmatpush.msra.mxu0 0.0
        %3192 = vmatpush.msra.mxu0 0.0
        %3193 = vmatpush.msra.mxu0 %v3172
        %3194 = vmatmul.f32.gmra.mxu0 %v3170
        %v3195 = vpop.f32.mrf.mxu0
        %v3196 = vadd.f32 0.0, %v3195
        %3197 = vdwg.mxu0
        %3198 = vmatpush.msra.mxu0 0.0
        %3199 = vmatpush.msra.mxu0 0.0
        %3200 = vmatpush.msra.mxu0 0.0
        %3201 = vmatpush.msra.mxu0 0.0
        %3202 = vmatpush.msra.mxu0 0.0
        %3203 = vmatpush.msra.mxu0 0.0
        %3204 = vmatpush.msra.mxu0 0.0
        %3205 = vmatpush.msra.mxu0 0.0
        %3206 = vmatpush.msra.mxu0 0.0
        %3207 = vmatpush.msra.mxu0 0.0
        %3208 = vmatpush.msra.mxu0 0.0
        %3209 = vmatpush.msra.mxu0 0.0
        %3210 = vmatpush.msra.mxu0 0.0
        %3211 = vmatpush.msra.mxu0 0.0
        %3212 = vmatpush.msra.mxu0 0.0
        %3213 = vmatpush.msra.mxu0 %v3174
        %3214 = vmatmul.f32.gmra.mxu0 %v3170
        %v3215 = vpop.f32.mrf.mxu0
        %v3216 = vadd.f32 0.0, %v3215
        %3217 = vdwg.mxu0
        %3218 = vmatpush.msra.mxu0 0.0
        %3219 = vmatpush.msra.mxu0 0.0
        %3220 = vmatpush.msra.mxu0 0.0
        %3221 = vmatpush.msra.mxu0 0.0
        %3222 = vmatpush.msra.mxu0 0.0
        %3223 = vmatpush.msra.mxu0 0.0
        %3224 = vmatpush.msra.mxu0 0.0
        %3225 = vmatpush.msra.mxu0 0.0
        %3226 = vmatpush.msra.mxu0 0.0
        %3227 = vmatpush.msra.mxu0 0.0
        %3228 = vmatpush.msra.mxu0 0.0
        %3229 = vmatpush.msra.mxu0 0.0
        %3230 = vmatpush.msra.mxu0 0.0
        %3231 = vmatpush.msra.mxu0 0.0
        %3232 = vmatpush.msra.mxu0 0.0
        %3233 = vmatpush.msra.mxu0 %v3176
        %3234 = vmatmul.f32.gmra.mxu0 %v3170
        %v3235 = vpop.f32.mrf.mxu0
        %v3236 = vadd.f32 0.0, %v3235
        %3237 = vdwg.mxu0
        %v3238 = vadd.f32 %v3146, %v3196
        %v3239 = vadd.f32 %v3147, %v3216
        %v3240 = vadd.f32 %v3148, %v3236
        %v3241 = vld [vmem:[#allocation3] sm:$0xff]
        %v3242 = vld [vmem:[#allocation3 + $0x8] sm:$0xf]
        %s3243 = scalar_lea.vmem [#allocation12], 28
        %v3244 = vld [vmem:[%s3243] sm:$0xf]
        %3247 = vst [vmem:[#allocation1] ss:$2 sm:$0xff] %v3241
        %s3248 = scalar_lea.vmem [#allocation1], 16
        %3249 = vst [vmem:[%s3248] ss:$2 sm:$0xff] %v3242
        %v3250 = vld.sshfl [vmem:[#allocation1] sm:$0xff pattern:$0x75316420]
        %v3251 = vld.sshfl [vmem:[#allocation1 + $0x8] sm:$0xff pattern:$0x75316420]
        %v3252 = vld.sshfl [vmem:[#allocation1 + $0x10] sm:$0xff pattern:$0x75316420]
        %3253 = vrot.lane.b32.xlu0 %v3250, 91
        %v3254 = vpop.permute.xlu0 %3253
        %3255 = vrot.lane.b32.xlu0 %v3251, 91
        %v3256 = vpop.permute.xlu0 %3255
        %3257 = vrot.lane.b32.xlu0 %v3252, 91
        %v3258 = vpop.permute.xlu0 %3257
        %v3259 = vsel %vm2214, %v3254, %v3256
        %v3260 = vsel %vm2214, %v3256, %v3258
        %v3262 = vsel %vm939, %v3244, 0
        %v3264 = vsel %vm915, %v3259, 0
        %v3266 = vsel %vm915, %v3260, 0
        %v3268 = vsel %vm915, %v3258, 0
        %3270 = vmatpush.msra.mxu0 0.0
        %3271 = vmatpush.msra.mxu0 0.0
        %3272 = vmatpush.msra.mxu0 0.0
        %3273 = vmatpush.msra.mxu0 0.0
        %3274 = vmatpush.msra.mxu0 0.0
        %3275 = vmatpush.msra.mxu0 0.0
        %3276 = vmatpush.msra.mxu0 0.0
        %3277 = vmatpush.msra.mxu0 0.0
        %3278 = vmatpush.msra.mxu0 0.0
        %3279 = vmatpush.msra.mxu0 0.0
        %3280 = vmatpush.msra.mxu0 0.0
        %3281 = vmatpush.msra.mxu0 0.0
        %3282 = vmatpush.msra.mxu0 0.0
        %3283 = vmatpush.msra.mxu0 0.0
        %3284 = vmatpush.msra.mxu0 0.0
        %3285 = vmatpush.msra.mxu0 %v3264
        %3286 = vmatmul.f32.gmra.mxu0 %v3262
        %v3287 = vpop.f32.mrf.mxu0
        %v3288 = vadd.f32 0.0, %v3287
        %3289 = vdwg.mxu0
        %3290 = vmatpush.msra.mxu0 0.0
        %3291 = vmatpush.msra.mxu0 0.0
        %3292 = vmatpush.msra.mxu0 0.0
        %3293 = vmatpush.msra.mxu0 0.0
        %3294 = vmatpush.msra.mxu0 0.0
        %3295 = vmatpush.msra.mxu0 0.0
        %3296 = vmatpush.msra.mxu0 0.0
        %3297 = vmatpush.msra.mxu0 0.0
        %3298 = vmatpush.msra.mxu0 0.0
        %3299 = vmatpush.msra.mxu0 0.0
        %3300 = vmatpush.msra.mxu0 0.0
        %3301 = vmatpush.msra.mxu0 0.0
        %3302 = vmatpush.msra.mxu0 0.0
        %3303 = vmatpush.msra.mxu0 0.0
        %3304 = vmatpush.msra.mxu0 0.0
        %3305 = vmatpush.msra.mxu0 %v3266
        %3306 = vmatmul.f32.gmra.mxu0 %v3262
        %v3307 = vpop.f32.mrf.mxu0
        %v3308 = vadd.f32 0.0, %v3307
        %3309 = vdwg.mxu0
        %3310 = vmatpush.msra.mxu0 0.0
        %3311 = vmatpush.msra.mxu0 0.0
        %3312 = vmatpush.msra.mxu0 0.0
        %3313 = vmatpush.msra.mxu0 0.0
        %3314 = vmatpush.msra.mxu0 0.0
        %3315 = vmatpush.msra.mxu0 0.0
        %3316 = vmatpush.msra.mxu0 0.0
        %3317 = vmatpush.msra.mxu0 0.0
        %3318 = vmatpush.msra.mxu0 0.0
        %3319 = vmatpush.msra.mxu0 0.0
        %3320 = vmatpush.msra.mxu0 0.0
        %3321 = vmatpush.msra.mxu0 0.0
        %3322 = vmatpush.msra.mxu0 0.0
        %3323 = vmatpush.msra.mxu0 0.0
        %3324 = vmatpush.msra.mxu0 0.0
        %3325 = vmatpush.msra.mxu0 %v3268
        %3326 = vmatmul.f32.gmra.mxu0 %v3262
        %v3327 = vpop.f32.mrf.mxu0
        %v3328 = vadd.f32 0.0, %v3327
        %3329 = vdwg.mxu0
        %v3330 = vadd.f32 %v3238, %v3288
        %v3331 = vadd.f32 %v3239, %v3308
        %v3332 = vadd.f32 %v3240, %v3328
        %v3333 = vld [vmem:[#allocation3] sm:$0xff]
        %v3334 = vld [vmem:[#allocation3 + $0x8] sm:$0xf]
        %s3335 = scalar_lea.vmem [#allocation12], 32
        %v3336 = vld [vmem:[%s3335] sm:$0xf]
        %3339 = vst [vmem:[#allocation1] ss:$2 sm:$0xff] %v3333
        %s3340 = scalar_lea.vmem [#allocation1], 16
        %3341 = vst [vmem:[%s3340] ss:$2 sm:$0xff] %v3334
        %v3342 = vld.sshfl [vmem:[#allocation1] sm:$0xff pattern:$0x75316420]
        %v3343 = vld.sshfl [vmem:[#allocation1 + $0x8] sm:$0xff pattern:$0x75316420]
        %v3344 = vld.sshfl [vmem:[#allocation1 + $0x10] sm:$0xff pattern:$0x75316420]
        %3345 = vrot.lane.b32.xlu0 %v3342, 90
        %v3346 = vpop.permute.xlu0 %3345
        %3347 = vrot.lane.b32.xlu0 %v3343, 90
        %v3348 = vpop.permute.xlu0 %3347
        %3349 = vrot.lane.b32.xlu0 %v3344, 90
        %v3350 = vpop.permute.xlu0 %3349
        %v3351 = vsel %vm853, %v3346, %v3348
        %v3352 = vsel %vm853, %v3348, %v3350
        %v3354 = vsel %vm939, %v3336, 0
        %v3356 = vsel %vm915, %v3351, 0
        %v3358 = vsel %vm915, %v3352, 0
        %v3360 = vsel %vm915, %v3350, 0
        %3362 = vmatpush.msra.mxu0 0.0
        %3363 = vmatpush.msra.mxu0 0.0
        %3364 = vmatpush.msra.mxu0 0.0
        %3365 = vmatpush.msra.mxu0 0.0
        %3366 = vmatpush.msra.mxu0 0.0
        %3367 = vmatpush.msra.mxu0 0.0
        %3368 = vmatpush.msra.mxu0 0.0
        %3369 = vmatpush.msra.mxu0 0.0
        %3370 = vmatpush.msra.mxu0 0.0
        %3371 = vmatpush.msra.mxu0 0.0
        %3372 = vmatpush.msra.mxu0 0.0
        %3373 = vmatpush.msra.mxu0 0.0
        %3374 = vmatpush.msra.mxu0 0.0
        %3375 = vmatpush.msra.mxu0 0.0
        %3376 = vmatpush.msra.mxu0 0.0
        %3377 = vmatpush.msra.mxu0 %v3356
        %3378 = vmatmul.f32.gmra.mxu0 %v3354
        %v3379 = vpop.f32.mrf.mxu0
        %v3380 = vadd.f32 0.0, %v3379
        %3381 = vdwg.mxu0
        %3382 = vmatpush.msra.mxu0 0.0
        %3383 = vmatpush.msra.mxu0 0.0
        %3384 = vmatpush.msra.mxu0 0.0
        %3385 = vmatpush.msra.mxu0 0.0
        %3386 = vmatpush.msra.mxu0 0.0
        %3387 = vmatpush.msra.mxu0 0.0
        %3388 = vmatpush.msra.mxu0 0.0
        %3389 = vmatpush.msra.mxu0 0.0
        %3390 = vmatpush.msra.mxu0 0.0
        %3391 = vmatpush.msra.mxu0 0.0
        %3392 = vmatpush.msra.mxu0 0.0
        %3393 = vmatpush.msra.mxu0 0.0
        %3394 = vmatpush.msra.mxu0 0.0
        %3395 = vmatpush.msra.mxu0 0.0
        %3396 = vmatpush.msra.mxu0 0.0
        %3397 = vmatpush.msra.mxu0 %v3358
        %3398 = vmatmul.f32.gmra.mxu0 %v3354
        %v3399 = vpop.f32.mrf.mxu0
        %v3400 = vadd.f32 0.0, %v3399
        %3401 = vdwg.mxu0
        %3402 = vmatpush.msra.mxu0 0.0
        %3403 = vmatpush.msra.mxu0 0.0
        %3404 = vmatpush.msra.mxu0 0.0
        %3405 = vmatpush.msra.mxu0 0.0
        %3406 = vmatpush.msra.mxu0 0.0
        %3407 = vmatpush.msra.mxu0 0.0
        %3408 = vmatpush.msra.mxu0 0.0
        %3409 = vmatpush.msra.mxu0 0.0
        %3410 = vmatpush.msra.mxu0 0.0
        %3411 = vmatpush.msra.mxu0 0.0
        %3412 = vmatpush.msra.mxu0 0.0
        %3413 = vmatpush.msra.mxu0 0.0
        %3414 = vmatpush.msra.mxu0 0.0
        %3415 = vmatpush.msra.mxu0 0.0
        %3416 = vmatpush.msra.mxu0 0.0
        %3417 = vmatpush.msra.mxu0 %v3360
        %3418 = vmatmul.f32.gmra.mxu0 %v3354
        %v3419 = vpop.f32.mrf.mxu0
        %v3420 = vadd.f32 0.0, %v3419
        %3421 = vdwg.mxu0
        %v3422 = vadd.f32 %v3330, %v3380
        %v3423 = vadd.f32 %v3331, %v3400
        %v3424 = vadd.f32 %v3332, %v3420
        %v3425 = vld [vmem:[%s10] sm:$0xf]
        %3427 = vset.pattern.permute.xlu0 0
        %3428 = vperm.xlu0 %3427, %v3425
        %v3429 = vpop.permute.xlu0 %3428
        %v3431 = vmul.f32 %v3422, %v3429
        %v3432 = vmul.f32 %v3423, %v3429
        %v3433 = vmul.f32 %v3424, %v3429
        %v3434 = vld [vmem:[%s11] sm:$0xf]
        %3436 = vset.pattern.permute.xlu0 0
        %3437 = vperm.xlu0 %3436, %v3434
        %v3438 = vpop.permute.xlu0 %3437
        %v3440 = vadd.f32 %v3431, %v3438
        %v3441 = vadd.f32 %v3432, %v3438
        %v3442 = vadd.f32 %v3433, %v3438
        %v3443 = vmax.f32 %v3440, 0.0
        %v3444 = vmax.f32 %v3441, 0.0
        %v3445 = vmax.f32 %v3442, 0.0
        %v3448 = vrot.slane %v3444, 4
        %v3449 = vsel %vm915, %v3443, %v3448
        %3451 = vst [vmem:[%s520] sm:$0xff] %v3449
        %vm3452 = vcmask 257024
        %3453 = vst.msk [vmem:[%s520 + $0x8] sm:$0xf] %vm3452, %v3445
        %s3454 = sand.u32 %s303, 1
        %s3455 = scalar_lea.sflag [#allocation6], %s3454
        %s3456 = sand.u32 %s303, 1
        %s3457 = smul.addr %s3456, 12
        %s3458 = scalar_lea.vmem [#allocation13], %s3457
        // Predicated region
        $region89: #{tpu_custom_call.1} parent=67 // pred_check
          %p3459 = pneg %p313
        $region90: #{tpu_custom_call.1} parent=67 // pred_check_branch
          %3461 = sbr.rel (%p3459) target = $region92
        $region91: #{tpu_custom_call.1} parent=67 // pred_region
          %3463 = vsyncadd %s3455, 0
          %s3464 = smul.addr %s33, 3
          %s3465 = smul.addr %s3464, 4
          %s3466 = scalar_lea.hbm %s12, %s3465
          %s3468 = sshll.u32 %s3458, 4
          %s3469 = int_to_ptr.vmem [resolvable:$true] %s3468
          %s3470 = sshll.u32 %s3466, 4
          %s3471 = int_to_ptr.hbm [resolvable:$true] %s3470
          %3473 = dma.vmem_to_hbm [thread:$0]  %s3469, 192, %s3471, %s3455
        $region92: #{tpu_custom_call.1} parent=67 // pred_fallthru
          _
      $region68: #{tpu_custom_call.1} parent=5 // pred_fallthru
        _
      %p3474 = scmp.le.s32.totalorder 2, %s28
      // Predicated region
      $region93: #{tpu_custom_call.1} parent=5 // pred_check
        %p3475 = pneg %p3474
      $region94: #{tpu_custom_call.1} parent=5 // pred_check_branch
        %3477 = sbr.rel (%p3475) target = $region96
      $region95: #{tpu_custom_call.1} parent=5 // pred_region
        %s3478 = ssub.s32 %s28, 2
        // Predicated region
        $region97: #{tpu_custom_call.1} parent=95 // pred_check
          %p3479 = pneg %p319
        $region98: #{tpu_custom_call.1} parent=95 // pred_check_branch
          %3481 = sbr.rel (%p3479) target = $region100
        $region99: #{tpu_custom_call.1} parent=95 // pred_region
          %s3482 = sand.u32 %s304, 1
          %s3483 = scalar_lea.sflag [#allocation6], %s3482
          %s3484 = sand.u32 %s304, 1
          %s3485 = smul.addr %s3484, 12
          %s3486 = scalar_lea.vmem [#allocation13], %s3485
          %3488 = dma.done %s3483, 192
        $region100: #{tpu_custom_call.1} parent=95 // pred_fallthru
          _
      $region96: #{tpu_custom_call.1} parent=5 // pred_fallthru
        _
    $region6: #{tpu_custom_call.1} parent=1 // loop_footer
      %s32 = sadd.s32 1, %s28
    $region7: #{tpu_custom_call.1} parent=1 // loop_footer_branch
      %27 = sbr.rel target = $region3
    $region8: #{tpu_custom_call.1} parent=1 // loop_exit
      _
    %3489 = vsyncpa [#allocation5], 1
    %s3490 = scalar_lea.sflag [#allocation5], 1
    %3491 = vsyncpa %s3490, 1
    %3492 = vsyncpa [#allocation8], 1
    %s3493 = scalar_lea.sflag [#allocation8], 1
    %3494 = vsyncpa %s3493, 1
    %3495 = vsyncpa [#allocation11], 1
    %3496 = vsyncpa [#allocation6], 1
    %s3497 = scalar_lea.sflag [#allocation6], 1
    %3498 = vsyncpa %s3497, 1

</llo_original>
